<compile_context>
chip_gen: v7x
topology: tpu7x:2x2x1
jax: 0.10.0
libtpu: 0.0.40
codegen_flags: <defaults>
</compile_context>

<pallas_src>
import functools

import jax
import jax.numpy as jnp
from jax import lax
from jax.experimental import pallas as pl
from jax.experimental.pallas import tpu as pltpu

NSAMPLE = 8
EPS = 1e-5


# ----------------------------------------------------------------------------
# Fused H0Net kernel (per group of G batch elements)
# ----------------------------------------------------------------------------
def _h0_kernel(nsample,
               xyz_ref, xyzt_ref, feat_ref,
               w1x_ref, w1f_ref, g1_ref, b1_ref,
               w2_ref, g2_ref, b2_ref,
               w3_ref, g3_ref, b3_ref,
               w4x_ref, w4f_ref, g4_ref, b4_ref,
               out_ref):
    f32 = jnp.float32
    bf16 = jnp.bfloat16
    G, N, _ = xyz_ref.shape
    lane_bits = max(1, (N - 1).bit_length())        # bits needed for a lane index

    xyz3 = xyz_ref[...].astype(f32)                 # (G, N, 3)   points on sublanes

    # ---------------- kNN(nsample) per batch element -------------------------
    # Packed f32 key: high mantissa bits ~ squared distance (+1.0 to keep every key a
    # normal float), low `lane_bits` bits = lane index.  Nonnegative-float ordering ==
    # int-bit ordering, so a single row-min gives both the nearest distance and the
    # first-index tie-break; keys are unique per row so `key == rowmin` is exactly one-hot.
    lane = lax.broadcasted_iota(jnp.int32, (N, N), 1)
    big = jnp.float32(3.0e38)
    sgathers = []
    for g in range(G):
        xyz_g = xyz3[g]                              # (N, 3)
        xyzt_g = xyzt_ref[g].astype(f32)             # (3, N)   points on lanes
        dist = jnp.zeros((N, N), f32)
        for c in range(3):                           # pure VPU broadcasting, no MXU/transpose
            d = xyz_g[:, c:c + 1] - xyzt_g[c:c + 1, :]
            dist = dist + d * d
        bits = pltpu.bitcast(dist + 1.0, jnp.int32)
        key = pltpu.bitcast(((bits >> lane_bits) << lane_bits) | lane, f32)
        sels = []
        for _ in range(nsample):
            kmin = jnp.min(key, axis=-1, keepdims=True)      # ONE reduction per step
            sel = key == kmin                                # exactly one-hot per row
            sels.append(sel.astype(bf16))                    # 0/1 exact in bf16
            key = jnp.where(sel, big, key)
        sgathers.append(jnp.concatenate(sels, axis=0))       # (nsample*N, N) bf16, neighbor-major

    def inst_norm(y3, gamma, beta, relu, out_dtype):
        # InstanceNorm2d over all (neighbor, point) positions per (batch element, channel),
        # folded to one scale/shift.  Stats in f32; normalize + activation + narrow cast is
        # one fused elementwise expression (no extra full-slab temporary).
        mean = jnp.mean(y3, axis=1, keepdims=True)
        var = jnp.maximum(jnp.mean(y3 * y3, axis=1, keepdims=True) - mean * mean, 0.0)
        scale = gamma * lax.rsqrt(var + EPS)
        shift = beta - mean * scale
        y = y3 * scale + shift
        if relu:
            y = jnp.maximum(y, 0.0)
        return y.astype(out_dtype)

    def xyz_matvec(wx):
        # (G,N,3) @ (3,C) as three VPU broadcast-FMAs (avoid a K=3 MXU contraction).
        acc = xyz3[:, :, 0:1] * wx[0:1, :]
        acc = acc + xyz3[:, :, 1:2] * wx[1:2, :]
        acc = acc + xyz3[:, :, 2:3] * wx[2:3, :]
        return acc                                            # (G, N, C)

    def bf16_dot3(x3, w_ref):
        # Batched rows flattened into one lane-dense MXU matmul; reshapes are layout-free
        # (row counts are multiples of the sublane tile, channels multiples of 128).
        gg, m, cin = x3.shape
        y = jnp.dot(x3.reshape(gg * m, cin).astype(bf16), w_ref[...],
                    preferred_element_type=f32)
        return y.reshape(gg, m, w_ref.shape[1])

    def set_abstraction(feat3, wx_ref, wf_ref, gamma_ref, beta_ref,
                        extra_layers, use_act, act_dtype):
        c_out = wf_ref.shape[1]
        # Layer 1 (split 131-channel contraction):
        #   gather(concat(rel_xyz, feat)) @ W1  ==  S @ (feat@Wf + xyz@Wx) - xyz@Wx
        xyzw = xyz_matvec(wx_ref[...].astype(f32))                        # (G, N, C) f32
        base = bf16_dot3(feat3, wf_ref) + xyzw                            # (G, N, C) f32
        base_bf = base.astype(bf16)
        # bf16 one-hot gather: single MXU pass, f32 accumulation.
        gathered = jnp.stack(
            [jnp.dot(sgathers[g], base_bf[g], preferred_element_type=f32)
             for g in range(G)], axis=0)                                  # (G, ns*N, C) f32
        y = (gathered.reshape(G, nsample, N, c_out) - xyzw[:, None, :, :]
             ).reshape(G, nsample * N, c_out)
        y = inst_norm(y, gamma_ref[...], beta_ref[...], use_act, act_dtype)
        for (w_ref, g_ref, b_ref) in extra_layers:
            y = bf16_dot3(y, w_ref)
            y = inst_norm(y, g_ref[...], b_ref[...], use_act, act_dtype)
        # max-pool over the nsample neighbors
        return jnp.max(y.reshape(G, nsample, N, c_out), axis=1)           # (G, N, C)

    feat_l1 = set_abstraction(
        feat_ref[...], w1x_ref, w1f_ref, g1_ref, b1_ref,
        extra_layers=[(w2_ref, g2_ref, b2_ref), (w3_ref, g3_ref, b3_ref)],
        use_act=True, act_dtype=bf16)                   # bf16 feeds the next bf16 matmul
    feat_l2 = set_abstraction(
        feat_l1, w4x_ref, w4f_ref, g4_ref, b4_ref,
        extra_layers=[], use_act=False, act_dtype=f32)  # final output stays f32
    out_ref[...] = feat_l2.astype(out_ref.dtype)


# ----------------------------------------------------------------------------
# Wrapper: layout plumbing + weight packing, single pallas_call
# ----------------------------------------------------------------------------
def _pick_batch_group(b):
    # Largest divisor of B that still leaves >= 2 grid steps (v7x has 2 TCs), capped at 8
    # to bound the unrolled per-group loops.
    if b < 2:
        return 1
    target = min(8, b // 2)
    for g in range(target, 0, -1):
        if b % g == 0:
            return g
    return 1


def h0_net_forward(pc, feature, params, batch_group=None):
    # pc: (B, 3, N), feature: (B, 128, N)  -- PyTorch channels-first convention.
    B, _, N = pc.shape
    C = feature.shape[1]
    assert N % 8 == 0 and N >= NSAMPLE, "N must be a multiple of 8 and >= nsample"
    G = _pick_batch_group(B) if batch_group is None else batch_group
    assert B % G == 0

    xyzt = pc.astype(jnp.float32)                                   # (B, 3, N)  N on lanes
    xyz = jnp.transpose(pc, (0, 2, 1)).astype(jnp.float32)          # (B, N, 3)
    feat = jnp.transpose(feature, (0, 2, 1)).astype(jnp.float32)    # (B, N, C)

    (w1, g1, b1), (w2, g2, b2), (w3, g3, b3) = params["sa1"]
    ((w4, g4, b4),) = params["sa2"]
    bf16 = jnp.bfloat16
    # Split the 131-channel layer-1 weights: rows 0..2 = rel_xyz, rows 3.. = features.
    weight_args = [
        w1[:3].astype(jnp.float32), w1[3:].astype(bf16), g1, b1,
        w2.astype(bf16), g2, b2,
        w3.astype(bf16), g3, b3,
        w4[:3].astype(jnp.float32), w4[3:].astype(bf16), g4, b4,
    ]
    c1 = w1.shape[1]
    c_out = w4.shape[1]

    def batch_spec(shape):
        return pl.BlockSpec(shape, lambda b: (b, 0, 0))

    def rep_spec(shape):
        return pl.BlockSpec(shape, lambda b: (0, 0))

    in_specs = [batch_spec((G, N, 3)), batch_spec((G, 3, N)), batch_spec((G, N, C))]
    in_specs += [rep_spec(w.shape) for w in weight_args]

    # Advisory cost estimate for XLA scheduling around the custom call.
    ns = NSAMPLE
    flops_per_elem = (
        9 * N * N                                          # pairwise squared distances
        + 2 * N * C * c1 + 2 * ns * N * N * c1             # sa1: base matmul + one-hot gather
        + 2 * (2 * ns * N * c1 * c1)                       # sa1: layers 2 and 3
        + 2 * N * c1 * c_out + 2 * ns * N * N * c_out)     # sa2: base matmul + gather
    cost = pl.CostEstimate(
        flops=int(B * flops_per_elem),
        transcendentals=int(B * (3 * c1 + c_out)),         # rsqrt per InstanceNorm channel
        bytes_accessed=int((xyz.size + xyzt.size + feat.size + B * N * c_out) * 4
                           + sum(int(w.size) * w.dtype.itemsize for w in weight_args)))

    # Rough per-step working set -> explicit VMEM budget (headroom, capped below v7x's 64 MiB).
    ws = G * (ns * N * N * 2                # bf16 one-hot gather matrices
              + 2 * N * N * 4               # dist / key slabs
              + 6 * ns * N * c1 * 4         # activation / stats slabs
              + 3 * N * C * 4)              # base / xyzw / pooled
    ws += 2 * sum(int(w.size) * w.dtype.itemsize for w in weight_args)
    ws += 2 * G * (N * 3 + 3 * N + N * C + N * c_out) * 4   # double-buffered I/O blocks
    vmem_limit = int(min(60 * 1024 * 1024, max(24 * 1024 * 1024, 2 * ws)))

    out = pl.pallas_call(
        functools.partial(_h0_kernel, NSAMPLE),
        out_shape=jax.ShapeDtypeStruct((B, N, c_out), jnp.float32),
        grid=(B // G,),
        in_specs=in_specs,
        out_specs=batch_spec((G, N, c_out)),
        compiler_params=pltpu.CompilerParams(
            dimension_semantics=("parallel",),
            vmem_limit_bytes=vmem_limit),
        cost_estimate=cost,
    )(xyz, xyzt, feat, *weight_args)
    return jnp.transpose(out, (0, 2, 1))                            # (B, C_out, N)


# ----------------------------------------------------------------------------
# Deterministic parameter init (shapes from H0Net.__init__)
# ----------------------------------------------------------------------------
def init_params(key):
    def conv_w(k, c_in, c_out):
        bound = 1.0 / (c_in ** 0.5)
        # stored as (C_in, C_out); equals torch Conv2d weight [C_out, C_in, 1, 1].T
        return jax.random.uniform(k, (c_in, c_out), jnp.float32, -bound, bound)

    def norm_params(c_out):
        return (jnp.ones((1, c_out), jnp.float32), jnp.zeros((1, c_out), jnp.float32))

    keys = jax.random.split(key, 4)
    sa1 = []
    c_in = 128 + 3
    for i, c_out in enumerate([128, 128, 128]):
        g, b = norm_params(c_out)
        sa1.append((conv_w(keys[i], c_in, c_out), g, b))
        c_in = c_out
    g2, b2 = norm_params(128)
    sa2 = [(conv_w(keys[3], 128 + 3, 128), g2, b2)]
    return {"sa1": sa1, "sa2": sa2}


if __name__ == "__main__":
    B, N, C = 4, 32, 128       # npoint=256 -> SA resolution N = npoint/8 = 32
    root = jax.random.PRNGKey(0)
    k_pc, k_feat, k_param = jax.random.split(root, 3)

    pc = jax.random.normal(k_pc, (B, 3, N), jnp.float32)
    feature = jax.random.normal(k_feat, (B, C, N), jnp.float32)
    params = init_params(k_param)

    out = jax.jit(h0_net_forward)(pc, feature, params)
    out = jax.block_until_ready(out)
    assert out.shape == (B, C, N) and out.dtype == jnp.float32
    assert bool(jnp.all(jnp.isfinite(out)))
    print("KERNEL_OK")
</pallas_src>

<mosaic_0001>
module attributes {stable_mosaic.version = 11 : i64} {
  func.func @_h0_kernel(%arg0: i32, %arg1: memref<2x32x3xf32, #tpu.memory_space<vmem>>, %arg2: memref<2x3x32xf32, #tpu.memory_space<vmem>>, %arg3: memref<2x32x128xf32, #tpu.memory_space<vmem>>, %arg4: memref<3x128xf32, #tpu.memory_space<vmem>>, %arg5: memref<128x128xbf16, #tpu.memory_space<vmem>>, %arg6: memref<1x128xf32, #tpu.memory_space<vmem>>, %arg7: memref<1x128xf32, #tpu.memory_space<vmem>>, %arg8: memref<128x128xbf16, #tpu.memory_space<vmem>>, %arg9: memref<1x128xf32, #tpu.memory_space<vmem>>, %arg10: memref<1x128xf32, #tpu.memory_space<vmem>>, %arg11: memref<128x128xbf16, #tpu.memory_space<vmem>>, %arg12: memref<1x128xf32, #tpu.memory_space<vmem>>, %arg13: memref<1x128xf32, #tpu.memory_space<vmem>>, %arg14: memref<3x128xf32, #tpu.memory_space<vmem>>, %arg15: memref<128x128xbf16, #tpu.memory_space<vmem>>, %arg16: memref<1x128xf32, #tpu.memory_space<vmem>>, %arg17: memref<1x128xf32, #tpu.memory_space<vmem>>, %arg18: memref<2x32x128xf32, #tpu.memory_space<vmem>>) attributes {dimension_semantics = [#tpu.dimension_semantics<parallel>], iteration_bounds = array<i64: 2>, scalar_prefetch = 0 : i64, scratch_operands = 0 : i64, tpu.core_type = #tpu.core_type<tc>, window_params = [{transform_indices = @transform_0, window_bounds = array<i64: 2, 32, 3>}, {transform_indices = @transform_1, window_bounds = array<i64: 2, 3, 32>}, {transform_indices = @transform_2, window_bounds = array<i64: 2, 32, 128>}, {pipeline_mode = #tpu.pipeline_mode<synchronous>, transform_indices = @transform_3, window_bounds = array<i64: 3, 128>}, {pipeline_mode = #tpu.pipeline_mode<synchronous>, transform_indices = @transform_4, window_bounds = array<i64: 128, 128>}, {pipeline_mode = #tpu.pipeline_mode<synchronous>, transform_indices = @transform_5, window_bounds = array<i64: 1, 128>}, {pipeline_mode = #tpu.pipeline_mode<synchronous>, transform_indices = @transform_6, window_bounds = array<i64: 1, 128>}, {pipeline_mode = #tpu.pipeline_mode<synchronous>, transform_indices = @transform_7, window_bounds = array<i64: 128, 128>}, {pipeline_mode = #tpu.pipeline_mode<synchronous>, transform_indices = @transform_8, window_bounds = array<i64: 1, 128>}, {pipeline_mode = #tpu.pipeline_mode<synchronous>, transform_indices = @transform_9, window_bounds = array<i64: 1, 128>}, {pipeline_mode = #tpu.pipeline_mode<synchronous>, transform_indices = @transform_10, window_bounds = array<i64: 128, 128>}, {pipeline_mode = #tpu.pipeline_mode<synchronous>, transform_indices = @transform_11, window_bounds = array<i64: 1, 128>}, {pipeline_mode = #tpu.pipeline_mode<synchronous>, transform_indices = @transform_12, window_bounds = array<i64: 1, 128>}, {pipeline_mode = #tpu.pipeline_mode<synchronous>, transform_indices = @transform_13, window_bounds = array<i64: 3, 128>}, {pipeline_mode = #tpu.pipeline_mode<synchronous>, transform_indices = @transform_14, window_bounds = array<i64: 128, 128>}, {pipeline_mode = #tpu.pipeline_mode<synchronous>, transform_indices = @transform_15, window_bounds = array<i64: 1, 128>}, {pipeline_mode = #tpu.pipeline_mode<synchronous>, transform_indices = @transform_16, window_bounds = array<i64: 1, 128>}, {transform_indices = @transform_17, window_bounds = array<i64: 2, 32, 128>}]} {
    %c0 = arith.constant 0 : index
    %c0_0 = arith.constant 0 : index
    %c0_1 = arith.constant 0 : index
    %0 = vector.load %arg1[%c0, %c0_0, %c0_1] : memref<2x32x3xf32, #tpu.memory_space<vmem>>, vector<2x32x3xf32>
    %1 = tpu.iota {dimensions = array<i32: 1>} : vector<32x32xi32>
    %2 = vector.extract_strided_slice %0 {offsets = [0, 0, 0], sizes = [1, 32, 3], strides = [1, 1, 1]} : vector<2x32x3xf32> to vector<1x32x3xf32>
    %3 = vector.shape_cast %2 : vector<1x32x3xf32> to vector<32x3xf32>
    %c0_2 = arith.constant 0 : index
    %c0_3 = arith.constant 0 : index
    %c0_4 = arith.constant 0 : index
    %4 = vector.load %arg2[%c0_2, %c0_3, %c0_4] : memref<2x3x32xf32, #tpu.memory_space<vmem>>, vector<1x3x32xf32>
    %5 = vector.shape_cast %4 : vector<1x3x32xf32> to vector<3x32xf32>
    %cst = arith.constant 0.000000e+00 : f32
    %6 = vector.broadcast %cst : f32 to vector<32x32xf32>
    %7 = vector.extract_strided_slice %3 {offsets = [0, 0], sizes = [32, 1], strides = [1, 1]} : vector<32x3xf32> to vector<32x1xf32>
    %8 = vector.extract_strided_slice %5 {offsets = [0, 0], sizes = [1, 32], strides = [1, 1]} : vector<3x32xf32> to vector<1x32xf32>
    %9 = vector.broadcast %7 : vector<32x1xf32> to vector<32x32xf32>
    %10 = vector.broadcast %8 : vector<1x32xf32> to vector<32x32xf32>
    %11 = arith.subf %9, %10 : vector<32x32xf32>
    %12 = arith.mulf %11, %11 : vector<32x32xf32>
    %13 = arith.addf %6, %12 : vector<32x32xf32>
    %14 = vector.extract_strided_slice %3 {offsets = [0, 1], sizes = [32, 1], strides = [1, 1]} : vector<32x3xf32> to vector<32x1xf32>
    %15 = vector.extract_strided_slice %5 {offsets = [1, 0], sizes = [1, 32], strides = [1, 1]} : vector<3x32xf32> to vector<1x32xf32>
    %16 = vector.broadcast %14 : vector<32x1xf32> to vector<32x32xf32>
    %17 = vector.broadcast %15 : vector<1x32xf32> to vector<32x32xf32>
    %18 = arith.subf %16, %17 : vector<32x32xf32>
    %19 = arith.mulf %18, %18 : vector<32x32xf32>
    %20 = arith.addf %13, %19 : vector<32x32xf32>
    %21 = vector.extract_strided_slice %3 {offsets = [0, 2], sizes = [32, 1], strides = [1, 1]} : vector<32x3xf32> to vector<32x1xf32>
    %22 = vector.extract_strided_slice %5 {offsets = [2, 0], sizes = [1, 32], strides = [1, 1]} : vector<3x32xf32> to vector<1x32xf32>
    %23 = vector.broadcast %21 : vector<32x1xf32> to vector<32x32xf32>
    %24 = vector.broadcast %22 : vector<1x32xf32> to vector<32x32xf32>
    %25 = arith.subf %23, %24 : vector<32x32xf32>
    %26 = arith.mulf %25, %25 : vector<32x32xf32>
    %27 = arith.addf %20, %26 : vector<32x32xf32>
    %cst_5 = arith.constant 1.000000e+00 : f32
    %28 = vector.broadcast %cst_5 : f32 to vector<32x32xf32>
    %29 = arith.addf %27, %28 : vector<32x32xf32>
    %30 = tpu.bitcast %29 : vector<32x32xf32> -> vector<32x32xi32>
    %c5_i32 = arith.constant 5 : i32
    %31 = vector.broadcast %c5_i32 : i32 to vector<32x32xi32>
    %32 = arith.shrsi %30, %31 : vector<32x32xi32>
    %c5_i32_6 = arith.constant 5 : i32
    %33 = vector.broadcast %c5_i32_6 : i32 to vector<32x32xi32>
    %34 = arith.shli %32, %33 : vector<32x32xi32>
    %35 = arith.ori %34, %1 : vector<32x32xi32>
    %36 = tpu.bitcast %35 : vector<32x32xi32> -> vector<32x32xf32>
    %cst_7 = arith.constant dense<0x7F800000> : vector<32xf32>
    %37 = vector.multi_reduction <minimumf>, %36, %cst_7 [1] : vector<32x32xf32> to vector<32xf32>
    %38 = vector.shape_cast %37 : vector<32xf32> to vector<32x1xf32>
    %39 = vector.broadcast %38 : vector<32x1xf32> to vector<32x32xf32>
    %40 = arith.cmpf oeq, %36, %39 : vector<32x32xf32>
    %41 = arith.extui %40 : vector<32x32xi1> to vector<32x32xi32>
    %42 = arith.sitofp %41 : vector<32x32xi32> to vector<32x32xf32>
    %43 = arith.truncf %42 : vector<32x32xf32> to vector<32x32xbf16>
    %cst_8 = arith.constant 3.000000e+38 : f32
    %44 = vector.broadcast %cst_8 : f32 to vector<32x32xf32>
    %45 = arith.select %40, %44, %36 : vector<32x32xi1>, vector<32x32xf32>
    %cst_9 = arith.constant dense<0x7F800000> : vector<32xf32>
    %46 = vector.multi_reduction <minimumf>, %45, %cst_9 [1] : vector<32x32xf32> to vector<32xf32>
    %47 = vector.shape_cast %46 : vector<32xf32> to vector<32x1xf32>
    %48 = vector.broadcast %47 : vector<32x1xf32> to vector<32x32xf32>
    %49 = arith.cmpf oeq, %45, %48 : vector<32x32xf32>
    %50 = arith.extui %49 : vector<32x32xi1> to vector<32x32xi32>
    %51 = arith.sitofp %50 : vector<32x32xi32> to vector<32x32xf32>
    %52 = arith.truncf %51 : vector<32x32xf32> to vector<32x32xbf16>
    %cst_10 = arith.constant 3.000000e+38 : f32
    %53 = vector.broadcast %cst_10 : f32 to vector<32x32xf32>
    %54 = arith.select %49, %53, %45 : vector<32x32xi1>, vector<32x32xf32>
    %cst_11 = arith.constant dense<0x7F800000> : vector<32xf32>
    %55 = vector.multi_reduction <minimumf>, %54, %cst_11 [1] : vector<32x32xf32> to vector<32xf32>
    %56 = vector.shape_cast %55 : vector<32xf32> to vector<32x1xf32>
    %57 = vector.broadcast %56 : vector<32x1xf32> to vector<32x32xf32>
    %58 = arith.cmpf oeq, %54, %57 : vector<32x32xf32>
    %59 = arith.extui %58 : vector<32x32xi1> to vector<32x32xi32>
    %60 = arith.sitofp %59 : vector<32x32xi32> to vector<32x32xf32>
    %61 = arith.truncf %60 : vector<32x32xf32> to vector<32x32xbf16>
    %cst_12 = arith.constant 3.000000e+38 : f32
    %62 = vector.broadcast %cst_12 : f32 to vector<32x32xf32>
    %63 = arith.select %58, %62, %54 : vector<32x32xi1>, vector<32x32xf32>
    %cst_13 = arith.constant dense<0x7F800000> : vector<32xf32>
    %64 = vector.multi_reduction <minimumf>, %63, %cst_13 [1] : vector<32x32xf32> to vector<32xf32>
    %65 = vector.shape_cast %64 : vector<32xf32> to vector<32x1xf32>
    %66 = vector.broadcast %65 : vector<32x1xf32> to vector<32x32xf32>
    %67 = arith.cmpf oeq, %63, %66 : vector<32x32xf32>
    %68 = arith.extui %67 : vector<32x32xi1> to vector<32x32xi32>
    %69 = arith.sitofp %68 : vector<32x32xi32> to vector<32x32xf32>
    %70 = arith.truncf %69 : vector<32x32xf32> to vector<32x32xbf16>
    %cst_14 = arith.constant 3.000000e+38 : f32
    %71 = vector.broadcast %cst_14 : f32 to vector<32x32xf32>
    %72 = arith.select %67, %71, %63 : vector<32x32xi1>, vector<32x32xf32>
    %cst_15 = arith.constant dense<0x7F800000> : vector<32xf32>
    %73 = vector.multi_reduction <minimumf>, %72, %cst_15 [1] : vector<32x32xf32> to vector<32xf32>
    %74 = vector.shape_cast %73 : vector<32xf32> to vector<32x1xf32>
    %75 = vector.broadcast %74 : vector<32x1xf32> to vector<32x32xf32>
    %76 = arith.cmpf oeq, %72, %75 : vector<32x32xf32>
    %77 = arith.extui %76 : vector<32x32xi1> to vector<32x32xi32>
    %78 = arith.sitofp %77 : vector<32x32xi32> to vector<32x32xf32>
    %79 = arith.truncf %78 : vector<32x32xf32> to vector<32x32xbf16>
    %cst_16 = arith.constant 3.000000e+38 : f32
    %80 = vector.broadcast %cst_16 : f32 to vector<32x32xf32>
    %81 = arith.select %76, %80, %72 : vector<32x32xi1>, vector<32x32xf32>
    %cst_17 = arith.constant dense<0x7F800000> : vector<32xf32>
    %82 = vector.multi_reduction <minimumf>, %81, %cst_17 [1] : vector<32x32xf32> to vector<32xf32>
    %83 = vector.shape_cast %82 : vector<32xf32> to vector<32x1xf32>
    %84 = vector.broadcast %83 : vector<32x1xf32> to vector<32x32xf32>
    %85 = arith.cmpf oeq, %81, %84 : vector<32x32xf32>
    %86 = arith.extui %85 : vector<32x32xi1> to vector<32x32xi32>
    %87 = arith.sitofp %86 : vector<32x32xi32> to vector<32x32xf32>
    %88 = arith.truncf %87 : vector<32x32xf32> to vector<32x32xbf16>
    %cst_18 = arith.constant 3.000000e+38 : f32
    %89 = vector.broadcast %cst_18 : f32 to vector<32x32xf32>
    %90 = arith.select %85, %89, %81 : vector<32x32xi1>, vector<32x32xf32>
    %cst_19 = arith.constant dense<0x7F800000> : vector<32xf32>
    %91 = vector.multi_reduction <minimumf>, %90, %cst_19 [1] : vector<32x32xf32> to vector<32xf32>
    %92 = vector.shape_cast %91 : vector<32xf32> to vector<32x1xf32>
    %93 = vector.broadcast %92 : vector<32x1xf32> to vector<32x32xf32>
    %94 = arith.cmpf oeq, %90, %93 : vector<32x32xf32>
    %95 = arith.extui %94 : vector<32x32xi1> to vector<32x32xi32>
    %96 = arith.sitofp %95 : vector<32x32xi32> to vector<32x32xf32>
    %97 = arith.truncf %96 : vector<32x32xf32> to vector<32x32xbf16>
    %cst_20 = arith.constant 3.000000e+38 : f32
    %98 = vector.broadcast %cst_20 : f32 to vector<32x32xf32>
    %99 = arith.select %94, %98, %90 : vector<32x32xi1>, vector<32x32xf32>
    %cst_21 = arith.constant dense<0x7F800000> : vector<32xf32>
    %100 = vector.multi_reduction <minimumf>, %99, %cst_21 [1] : vector<32x32xf32> to vector<32xf32>
    %101 = vector.shape_cast %100 : vector<32xf32> to vector<32x1xf32>
    %102 = vector.broadcast %101 : vector<32x1xf32> to vector<32x32xf32>
    %103 = arith.cmpf oeq, %99, %102 : vector<32x32xf32>
    %104 = arith.extui %103 : vector<32x32xi1> to vector<32x32xi32>
    %105 = arith.sitofp %104 : vector<32x32xi32> to vector<32x32xf32>
    %106 = arith.truncf %105 : vector<32x32xf32> to vector<32x32xbf16>
    %107 = tpu.concatenate %43, %52, %61, %70, %79, %88, %97, %106 in 0 : vector<32x32xbf16>, vector<32x32xbf16>, vector<32x32xbf16>, vector<32x32xbf16>, vector<32x32xbf16>, vector<32x32xbf16>, vector<32x32xbf16>, vector<32x32xbf16> -> vector<256x32xbf16>
    %108 = vector.extract_strided_slice %0 {offsets = [1, 0, 0], sizes = [1, 32, 3], strides = [1, 1, 1]} : vector<2x32x3xf32> to vector<1x32x3xf32>
    %109 = vector.shape_cast %108 : vector<1x32x3xf32> to vector<32x3xf32>
    %c1 = arith.constant 1 : index
    %c0_22 = arith.constant 0 : index
    %c0_23 = arith.constant 0 : index
    %110 = vector.load %arg2[%c1, %c0_22, %c0_23] : memref<2x3x32xf32, #tpu.memory_space<vmem>>, vector<1x3x32xf32>
    %111 = vector.shape_cast %110 : vector<1x3x32xf32> to vector<3x32xf32>
    %cst_24 = arith.constant 0.000000e+00 : f32
    %112 = vector.broadcast %cst_24 : f32 to vector<32x32xf32>
    %113 = vector.extract_strided_slice %109 {offsets = [0, 0], sizes = [32, 1], strides = [1, 1]} : vector<32x3xf32> to vector<32x1xf32>
    %114 = vector.extract_strided_slice %111 {offsets = [0, 0], sizes = [1, 32], strides = [1, 1]} : vector<3x32xf32> to vector<1x32xf32>
    %115 = vector.broadcast %113 : vector<32x1xf32> to vector<32x32xf32>
    %116 = vector.broadcast %114 : vector<1x32xf32> to vector<32x32xf32>
    %117 = arith.subf %115, %116 : vector<32x32xf32>
    %118 = arith.mulf %117, %117 : vector<32x32xf32>
    %119 = arith.addf %112, %118 : vector<32x32xf32>
    %120 = vector.extract_strided_slice %109 {offsets = [0, 1], sizes = [32, 1], strides = [1, 1]} : vector<32x3xf32> to vector<32x1xf32>
    %121 = vector.extract_strided_slice %111 {offsets = [1, 0], sizes = [1, 32], strides = [1, 1]} : vector<3x32xf32> to vector<1x32xf32>
    %122 = vector.broadcast %120 : vector<32x1xf32> to vector<32x32xf32>
    %123 = vector.broadcast %121 : vector<1x32xf32> to vector<32x32xf32>
    %124 = arith.subf %122, %123 : vector<32x32xf32>
    %125 = arith.mulf %124, %124 : vector<32x32xf32>
    %126 = arith.addf %119, %125 : vector<32x32xf32>
    %127 = vector.extract_strided_slice %109 {offsets = [0, 2], sizes = [32, 1], strides = [1, 1]} : vector<32x3xf32> to vector<32x1xf32>
    %128 = vector.extract_strided_slice %111 {offsets = [2, 0], sizes = [1, 32], strides = [1, 1]} : vector<3x32xf32> to vector<1x32xf32>
    %129 = vector.broadcast %127 : vector<32x1xf32> to vector<32x32xf32>
    %130 = vector.broadcast %128 : vector<1x32xf32> to vector<32x32xf32>
    %131 = arith.subf %129, %130 : vector<32x32xf32>
    %132 = arith.mulf %131, %131 : vector<32x32xf32>
    %133 = arith.addf %126, %132 : vector<32x32xf32>
    %cst_25 = arith.constant 1.000000e+00 : f32
    %134 = vector.broadcast %cst_25 : f32 to vector<32x32xf32>
    %135 = arith.addf %133, %134 : vector<32x32xf32>
    %136 = tpu.bitcast %135 : vector<32x32xf32> -> vector<32x32xi32>
    %c5_i32_26 = arith.constant 5 : i32
    %137 = vector.broadcast %c5_i32_26 : i32 to vector<32x32xi32>
    %138 = arith.shrsi %136, %137 : vector<32x32xi32>
    %c5_i32_27 = arith.constant 5 : i32
    %139 = vector.broadcast %c5_i32_27 : i32 to vector<32x32xi32>
    %140 = arith.shli %138, %139 : vector<32x32xi32>
    %141 = arith.ori %140, %1 : vector<32x32xi32>
    %142 = tpu.bitcast %141 : vector<32x32xi32> -> vector<32x32xf32>
    %cst_28 = arith.constant dense<0x7F800000> : vector<32xf32>
    %143 = vector.multi_reduction <minimumf>, %142, %cst_28 [1] : vector<32x32xf32> to vector<32xf32>
    %144 = vector.shape_cast %143 : vector<32xf32> to vector<32x1xf32>
    %145 = vector.broadcast %144 : vector<32x1xf32> to vector<32x32xf32>
    %146 = arith.cmpf oeq, %142, %145 : vector<32x32xf32>
    %147 = arith.extui %146 : vector<32x32xi1> to vector<32x32xi32>
    %148 = arith.sitofp %147 : vector<32x32xi32> to vector<32x32xf32>
    %149 = arith.truncf %148 : vector<32x32xf32> to vector<32x32xbf16>
    %cst_29 = arith.constant 3.000000e+38 : f32
    %150 = vector.broadcast %cst_29 : f32 to vector<32x32xf32>
    %151 = arith.select %146, %150, %142 : vector<32x32xi1>, vector<32x32xf32>
    %cst_30 = arith.constant dense<0x7F800000> : vector<32xf32>
    %152 = vector.multi_reduction <minimumf>, %151, %cst_30 [1] : vector<32x32xf32> to vector<32xf32>
    %153 = vector.shape_cast %152 : vector<32xf32> to vector<32x1xf32>
    %154 = vector.broadcast %153 : vector<32x1xf32> to vector<32x32xf32>
    %155 = arith.cmpf oeq, %151, %154 : vector<32x32xf32>
    %156 = arith.extui %155 : vector<32x32xi1> to vector<32x32xi32>
    %157 = arith.sitofp %156 : vector<32x32xi32> to vector<32x32xf32>
    %158 = arith.truncf %157 : vector<32x32xf32> to vector<32x32xbf16>
    %cst_31 = arith.constant 3.000000e+38 : f32
    %159 = vector.broadcast %cst_31 : f32 to vector<32x32xf32>
    %160 = arith.select %155, %159, %151 : vector<32x32xi1>, vector<32x32xf32>
    %cst_32 = arith.constant dense<0x7F800000> : vector<32xf32>
    %161 = vector.multi_reduction <minimumf>, %160, %cst_32 [1] : vector<32x32xf32> to vector<32xf32>
    %162 = vector.shape_cast %161 : vector<32xf32> to vector<32x1xf32>
    %163 = vector.broadcast %162 : vector<32x1xf32> to vector<32x32xf32>
    %164 = arith.cmpf oeq, %160, %163 : vector<32x32xf32>
    %165 = arith.extui %164 : vector<32x32xi1> to vector<32x32xi32>
    %166 = arith.sitofp %165 : vector<32x32xi32> to vector<32x32xf32>
    %167 = arith.truncf %166 : vector<32x32xf32> to vector<32x32xbf16>
    %cst_33 = arith.constant 3.000000e+38 : f32
    %168 = vector.broadcast %cst_33 : f32 to vector<32x32xf32>
    %169 = arith.select %164, %168, %160 : vector<32x32xi1>, vector<32x32xf32>
    %cst_34 = arith.constant dense<0x7F800000> : vector<32xf32>
    %170 = vector.multi_reduction <minimumf>, %169, %cst_34 [1] : vector<32x32xf32> to vector<32xf32>
    %171 = vector.shape_cast %170 : vector<32xf32> to vector<32x1xf32>
    %172 = vector.broadcast %171 : vector<32x1xf32> to vector<32x32xf32>
    %173 = arith.cmpf oeq, %169, %172 : vector<32x32xf32>
    %174 = arith.extui %173 : vector<32x32xi1> to vector<32x32xi32>
    %175 = arith.sitofp %174 : vector<32x32xi32> to vector<32x32xf32>
    %176 = arith.truncf %175 : vector<32x32xf32> to vector<32x32xbf16>
    %cst_35 = arith.constant 3.000000e+38 : f32
    %177 = vector.broadcast %cst_35 : f32 to vector<32x32xf32>
    %178 = arith.select %173, %177, %169 : vector<32x32xi1>, vector<32x32xf32>
    %cst_36 = arith.constant dense<0x7F800000> : vector<32xf32>
    %179 = vector.multi_reduction <minimumf>, %178, %cst_36 [1] : vector<32x32xf32> to vector<32xf32>
    %180 = vector.shape_cast %179 : vector<32xf32> to vector<32x1xf32>
    %181 = vector.broadcast %180 : vector<32x1xf32> to vector<32x32xf32>
    %182 = arith.cmpf oeq, %178, %181 : vector<32x32xf32>
    %183 = arith.extui %182 : vector<32x32xi1> to vector<32x32xi32>
    %184 = arith.sitofp %183 : vector<32x32xi32> to vector<32x32xf32>
    %185 = arith.truncf %184 : vector<32x32xf32> to vector<32x32xbf16>
    %cst_37 = arith.constant 3.000000e+38 : f32
    %186 = vector.broadcast %cst_37 : f32 to vector<32x32xf32>
    %187 = arith.select %182, %186, %178 : vector<32x32xi1>, vector<32x32xf32>
    %cst_38 = arith.constant dense<0x7F800000> : vector<32xf32>
    %188 = vector.multi_reduction <minimumf>, %187, %cst_38 [1] : vector<32x32xf32> to vector<32xf32>
    %189 = vector.shape_cast %188 : vector<32xf32> to vector<32x1xf32>
    %190 = vector.broadcast %189 : vector<32x1xf32> to vector<32x32xf32>
    %191 = arith.cmpf oeq, %187, %190 : vector<32x32xf32>
    %192 = arith.extui %191 : vector<32x32xi1> to vector<32x32xi32>
    %193 = arith.sitofp %192 : vector<32x32xi32> to vector<32x32xf32>
    %194 = arith.truncf %193 : vector<32x32xf32> to vector<32x32xbf16>
    %cst_39 = arith.constant 3.000000e+38 : f32
    %195 = vector.broadcast %cst_39 : f32 to vector<32x32xf32>
    %196 = arith.select %191, %195, %187 : vector<32x32xi1>, vector<32x32xf32>
    %cst_40 = arith.constant dense<0x7F800000> : vector<32xf32>
    %197 = vector.multi_reduction <minimumf>, %196, %cst_40 [1] : vector<32x32xf32> to vector<32xf32>
    %198 = vector.shape_cast %197 : vector<32xf32> to vector<32x1xf32>
    %199 = vector.broadcast %198 : vector<32x1xf32> to vector<32x32xf32>
    %200 = arith.cmpf oeq, %196, %199 : vector<32x32xf32>
    %201 = arith.extui %200 : vector<32x32xi1> to vector<32x32xi32>
    %202 = arith.sitofp %201 : vector<32x32xi32> to vector<32x32xf32>
    %203 = arith.truncf %202 : vector<32x32xf32> to vector<32x32xbf16>
    %cst_41 = arith.constant 3.000000e+38 : f32
    %204 = vector.broadcast %cst_41 : f32 to vector<32x32xf32>
    %205 = arith.select %200, %204, %196 : vector<32x32xi1>, vector<32x32xf32>
    %cst_42 = arith.constant dense<0x7F800000> : vector<32xf32>
    %206 = vector.multi_reduction <minimumf>, %205, %cst_42 [1] : vector<32x32xf32> to vector<32xf32>
    %207 = vector.shape_cast %206 : vector<32xf32> to vector<32x1xf32>
    %208 = vector.broadcast %207 : vector<32x1xf32> to vector<32x32xf32>
    %209 = arith.cmpf oeq, %205, %208 : vector<32x32xf32>
    %210 = arith.extui %209 : vector<32x32xi1> to vector<32x32xi32>
    %211 = arith.sitofp %210 : vector<32x32xi32> to vector<32x32xf32>
    %212 = arith.truncf %211 : vector<32x32xf32> to vector<32x32xbf16>
    %213 = tpu.concatenate %149, %158, %167, %176, %185, %194, %203, %212 in 0 : vector<32x32xbf16>, vector<32x32xbf16>, vector<32x32xbf16>, vector<32x32xbf16>, vector<32x32xbf16>, vector<32x32xbf16>, vector<32x32xbf16>, vector<32x32xbf16> -> vector<256x32xbf16>
    %c0_43 = arith.constant 0 : index
    %c0_44 = arith.constant 0 : index
    %c0_45 = arith.constant 0 : index
    %214 = vector.load %arg3[%c0_43, %c0_44, %c0_45] : memref<2x32x128xf32, #tpu.memory_space<vmem>>, vector<2x32x128xf32>
    %c0_46 = arith.constant 0 : index
    %c0_47 = arith.constant 0 : index
    %215 = vector.load %arg4[%c0_46, %c0_47] : memref<3x128xf32, #tpu.memory_space<vmem>>, vector<3x128xf32>
    %216 = vector.extract_strided_slice %0 {offsets = [0, 0, 0], sizes = [2, 32, 1], strides = [1, 1, 1]} : vector<2x32x3xf32> to vector<2x32x1xf32>
    %217 = vector.extract_strided_slice %215 {offsets = [0, 0], sizes = [1, 128], strides = [1, 1]} : vector<3x128xf32> to vector<1x128xf32>
    %218 = vector.shape_cast %217 : vector<1x128xf32> to vector<1x1x128xf32>
    %219 = vector.broadcast %216 : vector<2x32x1xf32> to vector<2x32x128xf32>
    %220 = vector.broadcast %218 : vector<1x1x128xf32> to vector<2x32x128xf32>
    %221 = arith.mulf %219, %220 : vector<2x32x128xf32>
    %222 = vector.extract_strided_slice %0 {offsets = [0, 0, 1], sizes = [2, 32, 1], strides = [1, 1, 1]} : vector<2x32x3xf32> to vector<2x32x1xf32>
    %223 = vector.extract_strided_slice %215 {offsets = [1, 0], sizes = [1, 128], strides = [1, 1]} : vector<3x128xf32> to vector<1x128xf32>
    %224 = vector.shape_cast %223 : vector<1x128xf32> to vector<1x1x128xf32>
    %225 = vector.broadcast %222 : vector<2x32x1xf32> to vector<2x32x128xf32>
    %226 = vector.broadcast %224 : vector<1x1x128xf32> to vector<2x32x128xf32>
    %227 = arith.mulf %225, %226 : vector<2x32x128xf32>
    %228 = arith.addf %221, %227 : vector<2x32x128xf32>
    %229 = vector.extract_strided_slice %0 {offsets = [0, 0, 2], sizes = [2, 32, 1], strides = [1, 1, 1]} : vector<2x32x3xf32> to vector<2x32x1xf32>
    %230 = vector.extract_strided_slice %215 {offsets = [2, 0], sizes = [1, 128], strides = [1, 1]} : vector<3x128xf32> to vector<1x128xf32>
    %231 = vector.shape_cast %230 : vector<1x128xf32> to vector<1x1x128xf32>
    %232 = vector.broadcast %229 : vector<2x32x1xf32> to vector<2x32x128xf32>
    %233 = vector.broadcast %231 : vector<1x1x128xf32> to vector<2x32x128xf32>
    %234 = arith.mulf %232, %233 : vector<2x32x128xf32>
    %235 = arith.addf %228, %234 : vector<2x32x128xf32>
    %236 = vector.shape_cast %214 : vector<2x32x128xf32> to vector<64x128xf32>
    %237 = arith.truncf %236 : vector<64x128xf32> to vector<64x128xbf16>
    %c0_48 = arith.constant 0 : index
    %c0_49 = arith.constant 0 : index
    %238 = vector.load %arg5[%c0_48, %c0_49] : memref<128x128xbf16, #tpu.memory_space<vmem>>, vector<128x128xbf16>
    %cst_50 = arith.constant dense<0.000000e+00> : vector<64x128xf32>
    %239 = tpu.matmul %237, %238, %cst_50 {dimension_numbers = #tpu.dot_dimension_numbers<[1], [0], [0], [1], [0, 0, 1, 1], [], []>} : vector<64x128xbf16>, vector<128x128xbf16>, vector<64x128xf32> -> vector<64x128xf32>
    %240 = vector.shape_cast %239 : vector<64x128xf32> to vector<2x32x128xf32>
    %241 = arith.addf %240, %235 : vector<2x32x128xf32>
    %242 = arith.truncf %241 : vector<2x32x128xf32> to vector<2x32x128xbf16>
    %243 = vector.extract_strided_slice %242 {offsets = [0, 0, 0], sizes = [1, 32, 128], strides = [1, 1, 1]} : vector<2x32x128xbf16> to vector<1x32x128xbf16>
    %244 = vector.shape_cast %243 : vector<1x32x128xbf16> to vector<32x128xbf16>
    %cst_51 = arith.constant dense<0.000000e+00> : vector<256x128xf32>
    %245 = tpu.matmul %107, %244, %cst_51 {dimension_numbers = #tpu.dot_dimension_numbers<[1], [0], [0], [1], [0, 0, 1, 1], [], []>} : vector<256x32xbf16>, vector<32x128xbf16>, vector<256x128xf32> -> vector<256x128xf32>
    %246 = vector.extract_strided_slice %242 {offsets = [1, 0, 0], sizes = [1, 32, 128], strides = [1, 1, 1]} : vector<2x32x128xbf16> to vector<1x32x128xbf16>
    %247 = vector.shape_cast %246 : vector<1x32x128xbf16> to vector<32x128xbf16>
    %cst_52 = arith.constant dense<0.000000e+00> : vector<256x128xf32>
    %248 = tpu.matmul %213, %247, %cst_52 {dimension_numbers = #tpu.dot_dimension_numbers<[1], [0], [0], [1], [0, 0, 1, 1], [], []>} : vector<256x32xbf16>, vector<32x128xbf16>, vector<256x128xf32> -> vector<256x128xf32>
    %249 = vector.shape_cast %245 : vector<256x128xf32> to vector<1x256x128xf32>
    %250 = vector.shape_cast %248 : vector<256x128xf32> to vector<1x256x128xf32>
    %251 = tpu.concatenate %249, %250 in 0 : vector<1x256x128xf32>, vector<1x256x128xf32> -> vector<2x256x128xf32>
    %252 = vector.shape_cast %251 : vector<2x256x128xf32> to vector<2x8x32x128xf32>
    %253 = vector.shape_cast %235 : vector<2x32x128xf32> to vector<2x1x32x128xf32>
    %254 = vector.broadcast %253 : vector<2x1x32x128xf32> to vector<2x8x32x128xf32>
    %255 = arith.subf %252, %254 : vector<2x8x32x128xf32>
    %256 = vector.shape_cast %255 : vector<2x8x32x128xf32> to vector<2x256x128xf32>
    %c0_53 = arith.constant 0 : index
    %c0_54 = arith.constant 0 : index
    %257 = vector.load %arg6[%c0_53, %c0_54] : memref<1x128xf32, #tpu.memory_space<vmem>>, vector<1x128xf32>
    %c0_55 = arith.constant 0 : index
    %c0_56 = arith.constant 0 : index
    %258 = vector.load %arg7[%c0_55, %c0_56] : memref<1x128xf32, #tpu.memory_space<vmem>>, vector<1x128xf32>
    %cst_57 = arith.constant dense<0.000000e+00> : vector<2x128xf32>
    %259 = vector.multi_reduction <add>, %256, %cst_57 [1] : vector<2x256x128xf32> to vector<2x128xf32>
    %260 = vector.shape_cast %259 : vector<2x128xf32> to vector<2x1x128xf32>
    %cst_58 = arith.constant 2.560000e+02 : f32
    %261 = vector.broadcast %cst_58 : f32 to vector<2x1x128xf32>
    %262 = arith.divf %260, %261 : vector<2x1x128xf32>
    %263 = arith.mulf %256, %256 : vector<2x256x128xf32>
    %cst_59 = arith.constant dense<0.000000e+00> : vector<2x128xf32>
    %264 = vector.multi_reduction <add>, %263, %cst_59 [1] : vector<2x256x128xf32> to vector<2x128xf32>
    %265 = vector.shape_cast %264 : vector<2x128xf32> to vector<2x1x128xf32>
    %cst_60 = arith.constant 2.560000e+02 : f32
    %266 = vector.broadcast %cst_60 : f32 to vector<2x1x128xf32>
    %267 = arith.divf %265, %266 : vector<2x1x128xf32>
    %268 = arith.mulf %262, %262 : vector<2x1x128xf32>
    %269 = arith.subf %267, %268 : vector<2x1x128xf32>
    %cst_61 = arith.constant 0.000000e+00 : f32
    %270 = vector.broadcast %cst_61 : f32 to vector<2x1x128xf32>
    %271 = arith.maximumf %269, %270 : vector<2x1x128xf32>
    %cst_62 = arith.constant 9.99999974E-6 : f32
    %272 = vector.broadcast %cst_62 : f32 to vector<2x1x128xf32>
    %273 = arith.addf %271, %272 : vector<2x1x128xf32>
    %274 = math.rsqrt %273 : vector<2x1x128xf32>
    %275 = vector.shape_cast %257 : vector<1x128xf32> to vector<1x1x128xf32>
    %276 = vector.broadcast %275 : vector<1x1x128xf32> to vector<2x1x128xf32>
    %277 = arith.mulf %276, %274 : vector<2x1x128xf32>
    %278 = arith.mulf %262, %277 : vector<2x1x128xf32>
    %279 = vector.shape_cast %258 : vector<1x128xf32> to vector<1x1x128xf32>
    %280 = vector.broadcast %279 : vector<1x1x128xf32> to vector<2x1x128xf32>
    %281 = arith.subf %280, %278 : vector<2x1x128xf32>
    %282 = vector.broadcast %277 : vector<2x1x128xf32> to vector<2x256x128xf32>
    %283 = arith.mulf %256, %282 : vector<2x256x128xf32>
    %284 = vector.broadcast %281 : vector<2x1x128xf32> to vector<2x256x128xf32>
    %285 = arith.addf %283, %284 : vector<2x256x128xf32>
    %cst_63 = arith.constant 0.000000e+00 : f32
    %286 = vector.broadcast %cst_63 : f32 to vector<2x256x128xf32>
    %287 = arith.maximumf %285, %286 : vector<2x256x128xf32>
    %288 = arith.truncf %287 : vector<2x256x128xf32> to vector<2x256x128xbf16>
    %289 = vector.shape_cast %288 : vector<2x256x128xbf16> to vector<512x128xbf16>
    %c0_64 = arith.constant 0 : index
    %c0_65 = arith.constant 0 : index
    %290 = vector.load %arg8[%c0_64, %c0_65] : memref<128x128xbf16, #tpu.memory_space<vmem>>, vector<128x128xbf16>
    %cst_66 = arith.constant dense<0.000000e+00> : vector<512x128xf32>
    %291 = tpu.matmul %289, %290, %cst_66 {dimension_numbers = #tpu.dot_dimension_numbers<[1], [0], [0], [1], [0, 0, 1, 1], [], []>} : vector<512x128xbf16>, vector<128x128xbf16>, vector<512x128xf32> -> vector<512x128xf32>
    %292 = vector.shape_cast %291 : vector<512x128xf32> to vector<2x256x128xf32>
    %c0_67 = arith.constant 0 : index
    %c0_68 = arith.constant 0 : index
    %293 = vector.load %arg9[%c0_67, %c0_68] : memref<1x128xf32, #tpu.memory_space<vmem>>, vector<1x128xf32>
    %c0_69 = arith.constant 0 : index
    %c0_70 = arith.constant 0 : index
    %294 = vector.load %arg10[%c0_69, %c0_70] : memref<1x128xf32, #tpu.memory_space<vmem>>, vector<1x128xf32>
    %cst_71 = arith.constant dense<0.000000e+00> : vector<2x128xf32>
    %295 = vector.multi_reduction <add>, %292, %cst_71 [1] : vector<2x256x128xf32> to vector<2x128xf32>
    %296 = vector.shape_cast %295 : vector<2x128xf32> to vector<2x1x128xf32>
    %cst_72 = arith.constant 2.560000e+02 : f32
    %297 = vector.broadcast %cst_72 : f32 to vector<2x1x128xf32>
    %298 = arith.divf %296, %297 : vector<2x1x128xf32>
    %299 = arith.mulf %292, %292 : vector<2x256x128xf32>
    %cst_73 = arith.constant dense<0.000000e+00> : vector<2x128xf32>
    %300 = vector.multi_reduction <add>, %299, %cst_73 [1] : vector<2x256x128xf32> to vector<2x128xf32>
    %301 = vector.shape_cast %300 : vector<2x128xf32> to vector<2x1x128xf32>
    %cst_74 = arith.constant 2.560000e+02 : f32
    %302 = vector.broadcast %cst_74 : f32 to vector<2x1x128xf32>
    %303 = arith.divf %301, %302 : vector<2x1x128xf32>
    %304 = arith.mulf %298, %298 : vector<2x1x128xf32>
    %305 = arith.subf %303, %304 : vector<2x1x128xf32>
    %cst_75 = arith.constant 0.000000e+00 : f32
    %306 = vector.broadcast %cst_75 : f32 to vector<2x1x128xf32>
    %307 = arith.maximumf %305, %306 : vector<2x1x128xf32>
    %cst_76 = arith.constant 9.99999974E-6 : f32
    %308 = vector.broadcast %cst_76 : f32 to vector<2x1x128xf32>
    %309 = arith.addf %307, %308 : vector<2x1x128xf32>
    %310 = math.rsqrt %309 : vector<2x1x128xf32>
    %311 = vector.shape_cast %293 : vector<1x128xf32> to vector<1x1x128xf32>
    %312 = vector.broadcast %311 : vector<1x1x128xf32> to vector<2x1x128xf32>
    %313 = arith.mulf %312, %310 : vector<2x1x128xf32>
    %314 = arith.mulf %298, %313 : vector<2x1x128xf32>
    %315 = vector.shape_cast %294 : vector<1x128xf32> to vector<1x1x128xf32>
    %316 = vector.broadcast %315 : vector<1x1x128xf32> to vector<2x1x128xf32>
    %317 = arith.subf %316, %314 : vector<2x1x128xf32>
    %318 = vector.broadcast %313 : vector<2x1x128xf32> to vector<2x256x128xf32>
    %319 = arith.mulf %292, %318 : vector<2x256x128xf32>
    %320 = vector.broadcast %317 : vector<2x1x128xf32> to vector<2x256x128xf32>
    %321 = arith.addf %319, %320 : vector<2x256x128xf32>
    %cst_77 = arith.constant 0.000000e+00 : f32
    %322 = vector.broadcast %cst_77 : f32 to vector<2x256x128xf32>
    %323 = arith.maximumf %321, %322 : vector<2x256x128xf32>
    %324 = arith.truncf %323 : vector<2x256x128xf32> to vector<2x256x128xbf16>
    %325 = vector.shape_cast %324 : vector<2x256x128xbf16> to vector<512x128xbf16>
    %c0_78 = arith.constant 0 : index
    %c0_79 = arith.constant 0 : index
    %326 = vector.load %arg11[%c0_78, %c0_79] : memref<128x128xbf16, #tpu.memory_space<vmem>>, vector<128x128xbf16>
    %cst_80 = arith.constant dense<0.000000e+00> : vector<512x128xf32>
    %327 = tpu.matmul %325, %326, %cst_80 {dimension_numbers = #tpu.dot_dimension_numbers<[1], [0], [0], [1], [0, 0, 1, 1], [], []>} : vector<512x128xbf16>, vector<128x128xbf16>, vector<512x128xf32> -> vector<512x128xf32>
    %328 = vector.shape_cast %327 : vector<512x128xf32> to vector<2x256x128xf32>
    %c0_81 = arith.constant 0 : index
    %c0_82 = arith.constant 0 : index
    %329 = vector.load %arg12[%c0_81, %c0_82] : memref<1x128xf32, #tpu.memory_space<vmem>>, vector<1x128xf32>
    %c0_83 = arith.constant 0 : index
    %c0_84 = arith.constant 0 : index
    %330 = vector.load %arg13[%c0_83, %c0_84] : memref<1x128xf32, #tpu.memory_space<vmem>>, vector<1x128xf32>
    %cst_85 = arith.constant dense<0.000000e+00> : vector<2x128xf32>
    %331 = vector.multi_reduction <add>, %328, %cst_85 [1] : vector<2x256x128xf32> to vector<2x128xf32>
    %332 = vector.shape_cast %331 : vector<2x128xf32> to vector<2x1x128xf32>
    %cst_86 = arith.constant 2.560000e+02 : f32
    %333 = vector.broadcast %cst_86 : f32 to vector<2x1x128xf32>
    %334 = arith.divf %332, %333 : vector<2x1x128xf32>
    %335 = arith.mulf %328, %328 : vector<2x256x128xf32>
    %cst_87 = arith.constant dense<0.000000e+00> : vector<2x128xf32>
    %336 = vector.multi_reduction <add>, %335, %cst_87 [1] : vector<2x256x128xf32> to vector<2x128xf32>
    %337 = vector.shape_cast %336 : vector<2x128xf32> to vector<2x1x128xf32>
    %cst_88 = arith.constant 2.560000e+02 : f32
    %338 = vector.broadcast %cst_88 : f32 to vector<2x1x128xf32>
    %339 = arith.divf %337, %338 : vector<2x1x128xf32>
    %340 = arith.mulf %334, %334 : vector<2x1x128xf32>
    %341 = arith.subf %339, %340 : vector<2x1x128xf32>
    %cst_89 = arith.constant 0.000000e+00 : f32
    %342 = vector.broadcast %cst_89 : f32 to vector<2x1x128xf32>
    %343 = arith.maximumf %341, %342 : vector<2x1x128xf32>
    %cst_90 = arith.constant 9.99999974E-6 : f32
    %344 = vector.broadcast %cst_90 : f32 to vector<2x1x128xf32>
    %345 = arith.addf %343, %344 : vector<2x1x128xf32>
    %346 = math.rsqrt %345 : vector<2x1x128xf32>
    %347 = vector.shape_cast %329 : vector<1x128xf32> to vector<1x1x128xf32>
    %348 = vector.broadcast %347 : vector<1x1x128xf32> to vector<2x1x128xf32>
    %349 = arith.mulf %348, %346 : vector<2x1x128xf32>
    %350 = arith.mulf %334, %349 : vector<2x1x128xf32>
    %351 = vector.shape_cast %330 : vector<1x128xf32> to vector<1x1x128xf32>
    %352 = vector.broadcast %351 : vector<1x1x128xf32> to vector<2x1x128xf32>
    %353 = arith.subf %352, %350 : vector<2x1x128xf32>
    %354 = vector.broadcast %349 : vector<2x1x128xf32> to vector<2x256x128xf32>
    %355 = arith.mulf %328, %354 : vector<2x256x128xf32>
    %356 = vector.broadcast %353 : vector<2x1x128xf32> to vector<2x256x128xf32>
    %357 = arith.addf %355, %356 : vector<2x256x128xf32>
    %cst_91 = arith.constant 0.000000e+00 : f32
    %358 = vector.broadcast %cst_91 : f32 to vector<2x256x128xf32>
    %359 = arith.maximumf %357, %358 : vector<2x256x128xf32>
    %360 = arith.truncf %359 : vector<2x256x128xf32> to vector<2x256x128xbf16>
    %361 = vector.shape_cast %360 : vector<2x256x128xbf16> to vector<2x8x32x128xbf16>
    %cst_92 = arith.constant dense<0xFF80> : vector<2x32x128xbf16>
    %362 = vector.multi_reduction <maximumf>, %361, %cst_92 [1] : vector<2x8x32x128xbf16> to vector<2x32x128xbf16>
    %c0_93 = arith.constant 0 : index
    %c0_94 = arith.constant 0 : index
    %363 = vector.load %arg14[%c0_93, %c0_94] : memref<3x128xf32, #tpu.memory_space<vmem>>, vector<3x128xf32>
    %364 = vector.extract_strided_slice %0 {offsets = [0, 0, 0], sizes = [2, 32, 1], strides = [1, 1, 1]} : vector<2x32x3xf32> to vector<2x32x1xf32>
    %365 = vector.extract_strided_slice %363 {offsets = [0, 0], sizes = [1, 128], strides = [1, 1]} : vector<3x128xf32> to vector<1x128xf32>
    %366 = vector.shape_cast %365 : vector<1x128xf32> to vector<1x1x128xf32>
    %367 = vector.broadcast %364 : vector<2x32x1xf32> to vector<2x32x128xf32>
    %368 = vector.broadcast %366 : vector<1x1x128xf32> to vector<2x32x128xf32>
    %369 = arith.mulf %367, %368 : vector<2x32x128xf32>
    %370 = vector.extract_strided_slice %0 {offsets = [0, 0, 1], sizes = [2, 32, 1], strides = [1, 1, 1]} : vector<2x32x3xf32> to vector<2x32x1xf32>
    %371 = vector.extract_strided_slice %363 {offsets = [1, 0], sizes = [1, 128], strides = [1, 1]} : vector<3x128xf32> to vector<1x128xf32>
    %372 = vector.shape_cast %371 : vector<1x128xf32> to vector<1x1x128xf32>
    %373 = vector.broadcast %370 : vector<2x32x1xf32> to vector<2x32x128xf32>
    %374 = vector.broadcast %372 : vector<1x1x128xf32> to vector<2x32x128xf32>
    %375 = arith.mulf %373, %374 : vector<2x32x128xf32>
    %376 = arith.addf %369, %375 : vector<2x32x128xf32>
    %377 = vector.extract_strided_slice %0 {offsets = [0, 0, 2], sizes = [2, 32, 1], strides = [1, 1, 1]} : vector<2x32x3xf32> to vector<2x32x1xf32>
    %378 = vector.extract_strided_slice %363 {offsets = [2, 0], sizes = [1, 128], strides = [1, 1]} : vector<3x128xf32> to vector<1x128xf32>
    %379 = vector.shape_cast %378 : vector<1x128xf32> to vector<1x1x128xf32>
    %380 = vector.broadcast %377 : vector<2x32x1xf32> to vector<2x32x128xf32>
    %381 = vector.broadcast %379 : vector<1x1x128xf32> to vector<2x32x128xf32>
    %382 = arith.mulf %380, %381 : vector<2x32x128xf32>
    %383 = arith.addf %376, %382 : vector<2x32x128xf32>
    %384 = vector.shape_cast %362 : vector<2x32x128xbf16> to vector<64x128xbf16>
    %c0_95 = arith.constant 0 : index
    %c0_96 = arith.constant 0 : index
    %385 = vector.load %arg15[%c0_95, %c0_96] : memref<128x128xbf16, #tpu.memory_space<vmem>>, vector<128x128xbf16>
    %cst_97 = arith.constant dense<0.000000e+00> : vector<64x128xf32>
    %386 = tpu.matmul %384, %385, %cst_97 {dimension_numbers = #tpu.dot_dimension_numbers<[1], [0], [0], [1], [0, 0, 1, 1], [], []>} : vector<64x128xbf16>, vector<128x128xbf16>, vector<64x128xf32> -> vector<64x128xf32>
    %387 = vector.shape_cast %386 : vector<64x128xf32> to vector<2x32x128xf32>
    %388 = arith.addf %387, %383 : vector<2x32x128xf32>
    %389 = arith.truncf %388 : vector<2x32x128xf32> to vector<2x32x128xbf16>
    %390 = vector.extract_strided_slice %389 {offsets = [0, 0, 0], sizes = [1, 32, 128], strides = [1, 1, 1]} : vector<2x32x128xbf16> to vector<1x32x128xbf16>
    %391 = vector.shape_cast %390 : vector<1x32x128xbf16> to vector<32x128xbf16>
    %cst_98 = arith.constant dense<0.000000e+00> : vector<256x128xf32>
    %392 = tpu.matmul %107, %391, %cst_98 {dimension_numbers = #tpu.dot_dimension_numbers<[1], [0], [0], [1], [0, 0, 1, 1], [], []>} : vector<256x32xbf16>, vector<32x128xbf16>, vector<256x128xf32> -> vector<256x128xf32>
    %393 = vector.extract_strided_slice %389 {offsets = [1, 0, 0], sizes = [1, 32, 128], strides = [1, 1, 1]} : vector<2x32x128xbf16> to vector<1x32x128xbf16>
    %394 = vector.shape_cast %393 : vector<1x32x128xbf16> to vector<32x128xbf16>
    %cst_99 = arith.constant dense<0.000000e+00> : vector<256x128xf32>
    %395 = tpu.matmul %213, %394, %cst_99 {dimension_numbers = #tpu.dot_dimension_numbers<[1], [0], [0], [1], [0, 0, 1, 1], [], []>} : vector<256x32xbf16>, vector<32x128xbf16>, vector<256x128xf32> -> vector<256x128xf32>
    %396 = vector.shape_cast %392 : vector<256x128xf32> to vector<1x256x128xf32>
    %397 = vector.shape_cast %395 : vector<256x128xf32> to vector<1x256x128xf32>
    %398 = tpu.concatenate %396, %397 in 0 : vector<1x256x128xf32>, vector<1x256x128xf32> -> vector<2x256x128xf32>
    %399 = vector.shape_cast %398 : vector<2x256x128xf32> to vector<2x8x32x128xf32>
    %400 = vector.shape_cast %383 : vector<2x32x128xf32> to vector<2x1x32x128xf32>
    %401 = vector.broadcast %400 : vector<2x1x32x128xf32> to vector<2x8x32x128xf32>
    %402 = arith.subf %399, %401 : vector<2x8x32x128xf32>
    %403 = vector.shape_cast %402 : vector<2x8x32x128xf32> to vector<2x256x128xf32>
    %c0_100 = arith.constant 0 : index
    %c0_101 = arith.constant 0 : index
    %404 = vector.load %arg16[%c0_100, %c0_101] : memref<1x128xf32, #tpu.memory_space<vmem>>, vector<1x128xf32>
    %c0_102 = arith.constant 0 : index
    %c0_103 = arith.constant 0 : index
    %405 = vector.load %arg17[%c0_102, %c0_103] : memref<1x128xf32, #tpu.memory_space<vmem>>, vector<1x128xf32>
    %cst_104 = arith.constant dense<0.000000e+00> : vector<2x128xf32>
    %406 = vector.multi_reduction <add>, %403, %cst_104 [1] : vector<2x256x128xf32> to vector<2x128xf32>
    %407 = vector.shape_cast %406 : vector<2x128xf32> to vector<2x1x128xf32>
    %cst_105 = arith.constant 2.560000e+02 : f32
    %408 = vector.broadcast %cst_105 : f32 to vector<2x1x128xf32>
    %409 = arith.divf %407, %408 : vector<2x1x128xf32>
    %410 = arith.mulf %403, %403 : vector<2x256x128xf32>
    %cst_106 = arith.constant dense<0.000000e+00> : vector<2x128xf32>
    %411 = vector.multi_reduction <add>, %410, %cst_106 [1] : vector<2x256x128xf32> to vector<2x128xf32>
    %412 = vector.shape_cast %411 : vector<2x128xf32> to vector<2x1x128xf32>
    %cst_107 = arith.constant 2.560000e+02 : f32
    %413 = vector.broadcast %cst_107 : f32 to vector<2x1x128xf32>
    %414 = arith.divf %412, %413 : vector<2x1x128xf32>
    %415 = arith.mulf %409, %409 : vector<2x1x128xf32>
    %416 = arith.subf %414, %415 : vector<2x1x128xf32>
    %cst_108 = arith.constant 0.000000e+00 : f32
    %417 = vector.broadcast %cst_108 : f32 to vector<2x1x128xf32>
    %418 = arith.maximumf %416, %417 : vector<2x1x128xf32>
    %cst_109 = arith.constant 9.99999974E-6 : f32
    %419 = vector.broadcast %cst_109 : f32 to vector<2x1x128xf32>
    %420 = arith.addf %418, %419 : vector<2x1x128xf32>
    %421 = math.rsqrt %420 : vector<2x1x128xf32>
    %422 = vector.shape_cast %404 : vector<1x128xf32> to vector<1x1x128xf32>
    %423 = vector.broadcast %422 : vector<1x1x128xf32> to vector<2x1x128xf32>
    %424 = arith.mulf %423, %421 : vector<2x1x128xf32>
    %425 = arith.mulf %409, %424 : vector<2x1x128xf32>
    %426 = vector.shape_cast %405 : vector<1x128xf32> to vector<1x1x128xf32>
    %427 = vector.broadcast %426 : vector<1x1x128xf32> to vector<2x1x128xf32>
    %428 = arith.subf %427, %425 : vector<2x1x128xf32>
    %429 = vector.broadcast %424 : vector<2x1x128xf32> to vector<2x256x128xf32>
    %430 = arith.mulf %403, %429 : vector<2x256x128xf32>
    %431 = vector.broadcast %428 : vector<2x1x128xf32> to vector<2x256x128xf32>
    %432 = arith.addf %430, %431 : vector<2x256x128xf32>
    %433 = vector.shape_cast %432 : vector<2x256x128xf32> to vector<2x8x32x128xf32>
    %cst_110 = arith.constant dense<0xFF800000> : vector<2x32x128xf32>
    %434 = vector.multi_reduction <maximumf>, %433, %cst_110 [1] : vector<2x8x32x128xf32> to vector<2x32x128xf32>
    %c0_111 = arith.constant 0 : index
    %c0_112 = arith.constant 0 : index
    %c0_113 = arith.constant 0 : index
    %435 = vector.load %arg18[%c0_111, %c0_112, %c0_113] : memref<2x32x128xf32, #tpu.memory_space<vmem>>, vector<2x32x128xf32>
    tpu.vector_store %arg18[%c0_111, %c0_112, %c0_113], %434 {strides = array<i32>} : memref<2x32x128xf32, #tpu.memory_space<vmem>>, vector<2x32x128xf32>,
    return
  }
  func.func @transform_0(%arg0: i32) -> (i32, i32, i32) {
    %c0_i32 = arith.constant 0 : i32
    %c0_i32_0 = arith.constant 0 : i32
    %c0_i32_1 = arith.constant 0 : i32
    return %arg0, %c0_i32, %c0_i32_0 : i32, i32, i32
  }
  func.func @transform_1(%arg0: i32) -> (i32, i32, i32) {
    %c0_i32 = arith.constant 0 : i32
    %c0_i32_0 = arith.constant 0 : i32
    %c0_i32_1 = arith.constant 0 : i32
    return %arg0, %c0_i32, %c0_i32_0 : i32, i32, i32
  }
  func.func @transform_2(%arg0: i32) -> (i32, i32, i32) {
    %c0_i32 = arith.constant 0 : i32
    %c0_i32_0 = arith.constant 0 : i32
    %c0_i32_1 = arith.constant 0 : i32
    return %arg0, %c0_i32, %c0_i32_0 : i32, i32, i32
  }
  func.func @transform_3(%arg0: i32) -> (i32, i32) {
    %c0_i32 = arith.constant 0 : i32
    %c0_i32_0 = arith.constant 0 : i32
    %c0_i32_1 = arith.constant 0 : i32
    return %c0_i32, %c0_i32_0 : i32, i32
  }
  func.func @transform_4(%arg0: i32) -> (i32, i32) {
    %c0_i32 = arith.constant 0 : i32
    %c0_i32_0 = arith.constant 0 : i32
    %c0_i32_1 = arith.constant 0 : i32
    return %c0_i32, %c0_i32_0 : i32, i32
  }
  func.func @transform_5(%arg0: i32) -> (i32, i32) {
    %c0_i32 = arith.constant 0 : i32
    %c0_i32_0 = arith.constant 0 : i32
    %c0_i32_1 = arith.constant 0 : i32
    return %c0_i32, %c0_i32_0 : i32, i32
  }
  func.func @transform_6(%arg0: i32) -> (i32, i32) {
    %c0_i32 = arith.constant 0 : i32
    %c0_i32_0 = arith.constant 0 : i32
    %c0_i32_1 = arith.constant 0 : i32
    return %c0_i32, %c0_i32_0 : i32, i32
  }
  func.func @transform_7(%arg0: i32) -> (i32, i32) {
    %c0_i32 = arith.constant 0 : i32
    %c0_i32_0 = arith.constant 0 : i32
    %c0_i32_1 = arith.constant 0 : i32
    return %c0_i32, %c0_i32_0 : i32, i32
  }
  func.func @transform_8(%arg0: i32) -> (i32, i32) {
    %c0_i32 = arith.constant 0 : i32
    %c0_i32_0 = arith.constant 0 : i32
    %c0_i32_1 = arith.constant 0 : i32
    return %c0_i32, %c0_i32_0 : i32, i32
  }
  func.func @transform_9(%arg0: i32) -> (i32, i32) {
    %c0_i32 = arith.constant 0 : i32
    %c0_i32_0 = arith.constant 0 : i32
    %c0_i32_1 = arith.constant 0 : i32
    return %c0_i32, %c0_i32_0 : i32, i32
  }
  func.func @transform_10(%arg0: i32) -> (i32, i32) {
    %c0_i32 = arith.constant 0 : i32
    %c0_i32_0 = arith.constant 0 : i32
    %c0_i32_1 = arith.constant 0 : i32
    return %c0_i32, %c0_i32_0 : i32, i32
  }
  func.func @transform_11(%arg0: i32) -> (i32, i32) {
    %c0_i32 = arith.constant 0 : i32
    %c0_i32_0 = arith.constant 0 : i32
    %c0_i32_1 = arith.constant 0 : i32
    return %c0_i32, %c0_i32_0 : i32, i32
  }
  func.func @transform_12(%arg0: i32) -> (i32, i32) {
    %c0_i32 = arith.constant 0 : i32
    %c0_i32_0 = arith.constant 0 : i32
    %c0_i32_1 = arith.constant 0 : i32
    return %c0_i32, %c0_i32_0 : i32, i32
  }
  func.func @transform_13(%arg0: i32) -> (i32, i32) {
    %c0_i32 = arith.constant 0 : i32
    %c0_i32_0 = arith.constant 0 : i32
    %c0_i32_1 = arith.constant 0 : i32
    return %c0_i32, %c0_i32_0 : i32, i32
  }
  func.func @transform_14(%arg0: i32) -> (i32, i32) {
    %c0_i32 = arith.constant 0 : i32
    %c0_i32_0 = arith.constant 0 : i32
    %c0_i32_1 = arith.constant 0 : i32
    return %c0_i32, %c0_i32_0 : i32, i32
  }
  func.func @transform_15(%arg0: i32) -> (i32, i32) {
    %c0_i32 = arith.constant 0 : i32
    %c0_i32_0 = arith.constant 0 : i32
    %c0_i32_1 = arith.constant 0 : i32
    return %c0_i32, %c0_i32_0 : i32, i32
  }
  func.func @transform_16(%arg0: i32) -> (i32, i32) {
    %c0_i32 = arith.constant 0 : i32
    %c0_i32_0 = arith.constant 0 : i32
    %c0_i32_1 = arith.constant 0 : i32
    return %c0_i32, %c0_i32_0 : i32, i32
  }
  func.func @transform_17(%arg0: i32) -> (i32, i32, i32) {
    %c0_i32 = arith.constant 0 : i32
    %c0_i32_0 = arith.constant 0 : i32
    %c0_i32_1 = arith.constant 0 : i32
    return %arg0, %c0_i32, %c0_i32_0 : i32, i32, i32
  }
}

</mosaic_0001>

<llo_original>
// kernel: h0_net_forward.1
$region0: #{h0_net_forward.1}
  #allocation0 [shape = 'u32[]', space=smem, size = 0x4, offset = 0x4, fixed_abs, tag = 'smem constant byte address 0x4 - core index']
  #allocation1 [shape = 'u32[144,128]{1,0:T(1,128)}', space=vmem, size = 0x12000, scoped, tag = 'internal scratch']
  %s0 = inlined_call_operand.vmem [shape: f32[4,32,3], index: 0, kind: input, shape index: {}]
  %s1 = inlined_call_operand.vmem [shape: f32[4,3,32], index: 1, kind: input, shape index: {}]
  %s2 = inlined_call_operand.vmem [shape: f32[4,32,128], index: 2, kind: input, shape index: {}]
  %s3 = inlined_call_operand.vmem [shape: f32[3,128], index: 3, kind: input, shape index: {}]
  %s4 = inlined_call_operand.vmem [shape: bf16[128,128], index: 4, kind: input, shape index: {}]
  %s5 = inlined_call_operand.vmem [shape: f32[1,128], index: 5, kind: input, shape index: {}]
  %s6 = inlined_call_operand.vmem [shape: f32[1,128], index: 6, kind: input, shape index: {}]
  %s7 = inlined_call_operand.vmem [shape: bf16[128,128], index: 7, kind: input, shape index: {}]
  %s8 = inlined_call_operand.vmem [shape: f32[1,128], index: 8, kind: input, shape index: {}]
  %s9 = inlined_call_operand.vmem [shape: f32[1,128], index: 9, kind: input, shape index: {}]
  %s10 = inlined_call_operand.vmem [shape: bf16[128,128], index: 10, kind: input, shape index: {}]
  %s11 = inlined_call_operand.vmem [shape: f32[1,128], index: 11, kind: input, shape index: {}]
  %s12 = inlined_call_operand.vmem [shape: f32[1,128], index: 12, kind: input, shape index: {}]
  %s13 = inlined_call_operand.vmem [shape: f32[3,128], index: 13, kind: input, shape index: {}]
  %s14 = inlined_call_operand.vmem [shape: bf16[128,128], index: 14, kind: input, shape index: {}]
  %s15 = inlined_call_operand.vmem [shape: f32[1,128], index: 15, kind: input, shape index: {}]
  %s16 = inlined_call_operand.vmem [shape: f32[1,128], index: 16, kind: input, shape index: {}]
  %s17 = inlined_call_operand.hbm [shape: f32[4,32,128], index: 17, kind: output, shape index: {}]
  %s18 = sld [smem:[#allocation0]]
  $region101: #{h0_net_forward.1} parent=0
    _
  %s20 = ssub.s32 1, %s18
  %s21 = scalar_select 0, %s20, %s18
  $region1: #{h0_net_forward.1} parent=0
    #allocation2 [shape = 'u8[65536]{0}', space=vmem, size = 0x10000, scoped, tag = 'output window, operand 0']
    #allocation3 [shape = 's32[2]{0}', space=sflag, size = 0x8, scoped, tag = 'scoped memory for h0_net_forward.1']
    %22 = vsyncpa [#allocation3], 0
    %s23 = scalar_lea.sflag [#allocation3], 1
    %24 = vsyncpa %s23, 0
    loop: start=0, step=1, limit=4
    $region2: #{h0_net_forward.1} parent=1 // loop_pre_header
      _
    $region3: #{h0_net_forward.1} parent=1 // loop_header
      %s26 = sphi 0, %s30
      %p27 = scmp.ge.s32.totalorder %s26, 4
      %s36 = sphi 0, %s38
      %s39 = sphi 0, %s36
      %s40 = sphi 0, %s39
      %s56 = sphi 0, %s40
      %s62 = sphi 0, %s64
      %s65 = sphi 0, %s62
      %s66 = sphi 0, %s65
      %s82 = sphi 0, %s66
      %s88 = sphi 0, %s90
      %s91 = sphi 0, %s88
      %s92 = sphi 0, %s91
      %s108 = sphi 0, %s92
      %s112 = sphi 0, %s112
      %s114 = sphi 0, %s112
      %s115 = sphi 0, %s114
      %s129 = sphi 0, %s115
      %s133 = sphi 0, %s133
      %s135 = sphi 0, %s133
      %s136 = sphi 0, %s135
      %s150 = sphi 0, %s136
      %s154 = sphi 0, %s154
      %s156 = sphi 0, %s154
      %s157 = sphi 0, %s156
      %s171 = sphi 0, %s157
      %s175 = sphi 0, %s175
      %s177 = sphi 0, %s175
      %s178 = sphi 0, %s177
      %s192 = sphi 0, %s178
      %s196 = sphi 0, %s196
      %s198 = sphi 0, %s196
      %s199 = sphi 0, %s198
      %s213 = sphi 0, %s199
      %s217 = sphi 0, %s217
      %s219 = sphi 0, %s217
      %s220 = sphi 0, %s219
      %s234 = sphi 0, %s220
      %s238 = sphi 0, %s238
      %s240 = sphi 0, %s238
      %s241 = sphi 0, %s240
      %s255 = sphi 0, %s241
      %s259 = sphi 0, %s259
      %s261 = sphi 0, %s259
      %s262 = sphi 0, %s261
      %s276 = sphi 0, %s262
      %s280 = sphi 0, %s280
      %s282 = sphi 0, %s280
      %s283 = sphi 0, %s282
      %s297 = sphi 0, %s283
      %s301 = sphi 0, %s301
      %s303 = sphi 0, %s301
      %s304 = sphi 0, %s303
      %s318 = sphi 0, %s304
      %s322 = sphi 0, %s322
      %s324 = sphi 0, %s322
      %s325 = sphi 0, %s324
      %s339 = sphi 0, %s325
      %s343 = sphi 0, %s343
      %s345 = sphi 0, %s343
      %s346 = sphi 0, %s345
      %s360 = sphi 0, %s346
      %s364 = sphi 0, %s364
      %s366 = sphi 0, %s364
      %s367 = sphi 0, %s366
      %s381 = sphi 0, %s367
      %s385 = sphi 0, %s385
      %s387 = sphi 0, %s385
      %s388 = sphi 0, %s387
      %s402 = sphi 0, %s388
      %s408 = sphi 0, %s410
      %s411 = sphi 0, %s408
      %s412 = sphi 0, %s411
      %s428 = sphi 0, %s412
    $region4: #{h0_net_forward.1} parent=1 // loop_header_branch
      %29 = sbr.rel (%p27) target = $region8
    $region5: #{h0_net_forward.1} parent=1 // loop_body
      %s31 = ssub.s32 %s26, 1
      %s32 = ssub.s32 %s26, 2
      %s33 = sadd.s32 %s26, 1
      %s34 = ssub.s32 %s26, %s33
      %p35 = scmp.eq.s32.totalorder %s34, 0
      %s37 = sadd.s32 %s36, 1
      %s38 = scalar_select %p35, %s36, %s37
      %p41 = pneg %p35
      %p42 = scmp.eq.s32.totalorder %s26, 1
      %p43 = por %p41, %p42
      %p44 = scmp.ne.s32.totalorder %s36, %s39
      %p45 = scmp.eq.s32.totalorder %s26, 0
      %p46 = por %p44, %p45
      %p47 = scmp.ne.s32.totalorder %s36, %s39
      %p48 = scmp.eq.s32.totalorder %s31, 1
      %p49 = por %p47, %p48
      %p50 = scmp.ne.s32.totalorder %s39, %s40
      %p51 = scmp.eq.s32.totalorder %s31, 0
      %p52 = por %p50, %p51
      %p53 = scmp.ne.s32.totalorder %s39, %s40
      %p54 = scmp.eq.s32.totalorder %s32, 1
      %p55 = por %p53, %p54
      %p57 = scmp.ne.s32.totalorder %s40, %s56
      %p58 = scmp.eq.s32.totalorder %s32, 0
      %p59 = por %p57, %p58
      %s60 = ssub.s32 %s26, %s33
      %p61 = scmp.eq.s32.totalorder %s60, 0
      %s63 = sadd.s32 %s62, 1
      %s64 = scalar_select %p61, %s62, %s63
      %p67 = pneg %p61
      %p68 = scmp.eq.s32.totalorder %s26, 1
      %p69 = por %p67, %p68
      %p70 = scmp.ne.s32.totalorder %s62, %s65
      %p71 = scmp.eq.s32.totalorder %s26, 0
      %p72 = por %p70, %p71
      %p73 = scmp.ne.s32.totalorder %s62, %s65
      %p74 = scmp.eq.s32.totalorder %s31, 1
      %p75 = por %p73, %p74
      %p76 = scmp.ne.s32.totalorder %s65, %s66
      %p77 = scmp.eq.s32.totalorder %s31, 0
      %p78 = por %p76, %p77
      %p79 = scmp.ne.s32.totalorder %s65, %s66
      %p80 = scmp.eq.s32.totalorder %s32, 1
      %p81 = por %p79, %p80
      %p83 = scmp.ne.s32.totalorder %s66, %s82
      %p84 = scmp.eq.s32.totalorder %s32, 0
      %p85 = por %p83, %p84
      %s86 = ssub.s32 %s26, %s33
      %p87 = scmp.eq.s32.totalorder %s86, 0
      %s89 = sadd.s32 %s88, 1
      %s90 = scalar_select %p87, %s88, %s89
      %p93 = pneg %p87
      %p94 = scmp.eq.s32.totalorder %s26, 1
      %p95 = por %p93, %p94
      %p96 = scmp.ne.s32.totalorder %s88, %s91
      %p97 = scmp.eq.s32.totalorder %s26, 0
      %p98 = por %p96, %p97
      %p99 = scmp.ne.s32.totalorder %s88, %s91
      %p100 = scmp.eq.s32.totalorder %s31, 1
      %p101 = por %p99, %p100
      %p102 = scmp.ne.s32.totalorder %s91, %s92
      %p103 = scmp.eq.s32.totalorder %s31, 0
      %p104 = por %p102, %p103
      %p105 = scmp.ne.s32.totalorder %s91, %s92
      %p106 = scmp.eq.s32.totalorder %s32, 1
      %p107 = por %p105, %p106
      %p109 = scmp.ne.s32.totalorder %s92, %s108
      %p110 = scmp.eq.s32.totalorder %s32, 0
      %p111 = por %p109, %p110
      %s113 = sadd.s32 %s112, 1
      %p116 = scmp.eq.s32.totalorder %s26, 1
      %p117 = scmp.ne.s32.totalorder %s112, %s114
      %p118 = scmp.eq.s32.totalorder %s26, 0
      %p119 = por %p117, %p118
      %p120 = scmp.ne.s32.totalorder %s112, %s114
      %p121 = scmp.eq.s32.totalorder %s31, 1
      %p122 = por %p120, %p121
      %p123 = scmp.ne.s32.totalorder %s114, %s115
      %p124 = scmp.eq.s32.totalorder %s31, 0
      %p125 = por %p123, %p124
      %p126 = scmp.ne.s32.totalorder %s114, %s115
      %p127 = scmp.eq.s32.totalorder %s32, 1
      %p128 = por %p126, %p127
      %p130 = scmp.ne.s32.totalorder %s115, %s129
      %p131 = scmp.eq.s32.totalorder %s32, 0
      %p132 = por %p130, %p131
      %s134 = sadd.s32 %s133, 1
      %p137 = scmp.eq.s32.totalorder %s26, 1
      %p138 = scmp.ne.s32.totalorder %s133, %s135
      %p139 = scmp.eq.s32.totalorder %s26, 0
      %p140 = por %p138, %p139
      %p141 = scmp.ne.s32.totalorder %s133, %s135
      %p142 = scmp.eq.s32.totalorder %s31, 1
      %p143 = por %p141, %p142
      %p144 = scmp.ne.s32.totalorder %s135, %s136
      %p145 = scmp.eq.s32.totalorder %s31, 0
      %p146 = por %p144, %p145
      %p147 = scmp.ne.s32.totalorder %s135, %s136
      %p148 = scmp.eq.s32.totalorder %s32, 1
      %p149 = por %p147, %p148
      %p151 = scmp.ne.s32.totalorder %s136, %s150
      %p152 = scmp.eq.s32.totalorder %s32, 0
      %p153 = por %p151, %p152
      %s155 = sadd.s32 %s154, 1
      %p158 = scmp.eq.s32.totalorder %s26, 1
      %p159 = scmp.ne.s32.totalorder %s154, %s156
      %p160 = scmp.eq.s32.totalorder %s26, 0
      %p161 = por %p159, %p160
      %p162 = scmp.ne.s32.totalorder %s154, %s156
      %p163 = scmp.eq.s32.totalorder %s31, 1
      %p164 = por %p162, %p163
      %p165 = scmp.ne.s32.totalorder %s156, %s157
      %p166 = scmp.eq.s32.totalorder %s31, 0
      %p167 = por %p165, %p166
      %p168 = scmp.ne.s32.totalorder %s156, %s157
      %p169 = scmp.eq.s32.totalorder %s32, 1
      %p170 = por %p168, %p169
      %p172 = scmp.ne.s32.totalorder %s157, %s171
      %p173 = scmp.eq.s32.totalorder %s32, 0
      %p174 = por %p172, %p173
      %s176 = sadd.s32 %s175, 1
      %p179 = scmp.eq.s32.totalorder %s26, 1
      %p180 = scmp.ne.s32.totalorder %s175, %s177
      %p181 = scmp.eq.s32.totalorder %s26, 0
      %p182 = por %p180, %p181
      %p183 = scmp.ne.s32.totalorder %s175, %s177
      %p184 = scmp.eq.s32.totalorder %s31, 1
      %p185 = por %p183, %p184
      %p186 = scmp.ne.s32.totalorder %s177, %s178
      %p187 = scmp.eq.s32.totalorder %s31, 0
      %p188 = por %p186, %p187
      %p189 = scmp.ne.s32.totalorder %s177, %s178
      %p190 = scmp.eq.s32.totalorder %s32, 1
      %p191 = por %p189, %p190
      %p193 = scmp.ne.s32.totalorder %s178, %s192
      %p194 = scmp.eq.s32.totalorder %s32, 0
      %p195 = por %p193, %p194
      %s197 = sadd.s32 %s196, 1
      %p200 = scmp.eq.s32.totalorder %s26, 1
      %p201 = scmp.ne.s32.totalorder %s196, %s198
      %p202 = scmp.eq.s32.totalorder %s26, 0
      %p203 = por %p201, %p202
      %p204 = scmp.ne.s32.totalorder %s196, %s198
      %p205 = scmp.eq.s32.totalorder %s31, 1
      %p206 = por %p204, %p205
      %p207 = scmp.ne.s32.totalorder %s198, %s199
      %p208 = scmp.eq.s32.totalorder %s31, 0
      %p209 = por %p207, %p208
      %p210 = scmp.ne.s32.totalorder %s198, %s199
      %p211 = scmp.eq.s32.totalorder %s32, 1
      %p212 = por %p210, %p211
      %p214 = scmp.ne.s32.totalorder %s199, %s213
      %p215 = scmp.eq.s32.totalorder %s32, 0
      %p216 = por %p214, %p215
      %s218 = sadd.s32 %s217, 1
      %p221 = scmp.eq.s32.totalorder %s26, 1
      %p222 = scmp.ne.s32.totalorder %s217, %s219
      %p223 = scmp.eq.s32.totalorder %s26, 0
      %p224 = por %p222, %p223
      %p225 = scmp.ne.s32.totalorder %s217, %s219
      %p226 = scmp.eq.s32.totalorder %s31, 1
      %p227 = por %p225, %p226
      %p228 = scmp.ne.s32.totalorder %s219, %s220
      %p229 = scmp.eq.s32.totalorder %s31, 0
      %p230 = por %p228, %p229
      %p231 = scmp.ne.s32.totalorder %s219, %s220
      %p232 = scmp.eq.s32.totalorder %s32, 1
      %p233 = por %p231, %p232
      %p235 = scmp.ne.s32.totalorder %s220, %s234
      %p236 = scmp.eq.s32.totalorder %s32, 0
      %p237 = por %p235, %p236
      %s239 = sadd.s32 %s238, 1
      %p242 = scmp.eq.s32.totalorder %s26, 1
      %p243 = scmp.ne.s32.totalorder %s238, %s240
      %p244 = scmp.eq.s32.totalorder %s26, 0
      %p245 = por %p243, %p244
      %p246 = scmp.ne.s32.totalorder %s238, %s240
      %p247 = scmp.eq.s32.totalorder %s31, 1
      %p248 = por %p246, %p247
      %p249 = scmp.ne.s32.totalorder %s240, %s241
      %p250 = scmp.eq.s32.totalorder %s31, 0
      %p251 = por %p249, %p250
      %p252 = scmp.ne.s32.totalorder %s240, %s241
      %p253 = scmp.eq.s32.totalorder %s32, 1
      %p254 = por %p252, %p253
      %p256 = scmp.ne.s32.totalorder %s241, %s255
      %p257 = scmp.eq.s32.totalorder %s32, 0
      %p258 = por %p256, %p257
      %s260 = sadd.s32 %s259, 1
      %p263 = scmp.eq.s32.totalorder %s26, 1
      %p264 = scmp.ne.s32.totalorder %s259, %s261
      %p265 = scmp.eq.s32.totalorder %s26, 0
      %p266 = por %p264, %p265
      %p267 = scmp.ne.s32.totalorder %s259, %s261
      %p268 = scmp.eq.s32.totalorder %s31, 1
      %p269 = por %p267, %p268
      %p270 = scmp.ne.s32.totalorder %s261, %s262
      %p271 = scmp.eq.s32.totalorder %s31, 0
      %p272 = por %p270, %p271
      %p273 = scmp.ne.s32.totalorder %s261, %s262
      %p274 = scmp.eq.s32.totalorder %s32, 1
      %p275 = por %p273, %p274
      %p277 = scmp.ne.s32.totalorder %s262, %s276
      %p278 = scmp.eq.s32.totalorder %s32, 0
      %p279 = por %p277, %p278
      %s281 = sadd.s32 %s280, 1
      %p284 = scmp.eq.s32.totalorder %s26, 1
      %p285 = scmp.ne.s32.totalorder %s280, %s282
      %p286 = scmp.eq.s32.totalorder %s26, 0
      %p287 = por %p285, %p286
      %p288 = scmp.ne.s32.totalorder %s280, %s282
      %p289 = scmp.eq.s32.totalorder %s31, 1
      %p290 = por %p288, %p289
      %p291 = scmp.ne.s32.totalorder %s282, %s283
      %p292 = scmp.eq.s32.totalorder %s31, 0
      %p293 = por %p291, %p292
      %p294 = scmp.ne.s32.totalorder %s282, %s283
      %p295 = scmp.eq.s32.totalorder %s32, 1
      %p296 = por %p294, %p295
      %p298 = scmp.ne.s32.totalorder %s283, %s297
      %p299 = scmp.eq.s32.totalorder %s32, 0
      %p300 = por %p298, %p299
      %s302 = sadd.s32 %s301, 1
      %p305 = scmp.eq.s32.totalorder %s26, 1
      %p306 = scmp.ne.s32.totalorder %s301, %s303
      %p307 = scmp.eq.s32.totalorder %s26, 0
      %p308 = por %p306, %p307
      %p309 = scmp.ne.s32.totalorder %s301, %s303
      %p310 = scmp.eq.s32.totalorder %s31, 1
      %p311 = por %p309, %p310
      %p312 = scmp.ne.s32.totalorder %s303, %s304
      %p313 = scmp.eq.s32.totalorder %s31, 0
      %p314 = por %p312, %p313
      %p315 = scmp.ne.s32.totalorder %s303, %s304
      %p316 = scmp.eq.s32.totalorder %s32, 1
      %p317 = por %p315, %p316
      %p319 = scmp.ne.s32.totalorder %s304, %s318
      %p320 = scmp.eq.s32.totalorder %s32, 0
      %p321 = por %p319, %p320
      %s323 = sadd.s32 %s322, 1
      %p326 = scmp.eq.s32.totalorder %s26, 1
      %p327 = scmp.ne.s32.totalorder %s322, %s324
      %p328 = scmp.eq.s32.totalorder %s26, 0
      %p329 = por %p327, %p328
      %p330 = scmp.ne.s32.totalorder %s322, %s324
      %p331 = scmp.eq.s32.totalorder %s31, 1
      %p332 = por %p330, %p331
      %p333 = scmp.ne.s32.totalorder %s324, %s325
      %p334 = scmp.eq.s32.totalorder %s31, 0
      %p335 = por %p333, %p334
      %p336 = scmp.ne.s32.totalorder %s324, %s325
      %p337 = scmp.eq.s32.totalorder %s32, 1
      %p338 = por %p336, %p337
      %p340 = scmp.ne.s32.totalorder %s325, %s339
      %p341 = scmp.eq.s32.totalorder %s32, 0
      %p342 = por %p340, %p341
      %s344 = sadd.s32 %s343, 1
      %p347 = scmp.eq.s32.totalorder %s26, 1
      %p348 = scmp.ne.s32.totalorder %s343, %s345
      %p349 = scmp.eq.s32.totalorder %s26, 0
      %p350 = por %p348, %p349
      %p351 = scmp.ne.s32.totalorder %s343, %s345
      %p352 = scmp.eq.s32.totalorder %s31, 1
      %p353 = por %p351, %p352
      %p354 = scmp.ne.s32.totalorder %s345, %s346
      %p355 = scmp.eq.s32.totalorder %s31, 0
      %p356 = por %p354, %p355
      %p357 = scmp.ne.s32.totalorder %s345, %s346
      %p358 = scmp.eq.s32.totalorder %s32, 1
      %p359 = por %p357, %p358
      %p361 = scmp.ne.s32.totalorder %s346, %s360
      %p362 = scmp.eq.s32.totalorder %s32, 0
      %p363 = por %p361, %p362
      %s365 = sadd.s32 %s364, 1
      %p368 = scmp.eq.s32.totalorder %s26, 1
      %p369 = scmp.ne.s32.totalorder %s364, %s366
      %p370 = scmp.eq.s32.totalorder %s26, 0
      %p371 = por %p369, %p370
      %p372 = scmp.ne.s32.totalorder %s364, %s366
      %p373 = scmp.eq.s32.totalorder %s31, 1
      %p374 = por %p372, %p373
      %p375 = scmp.ne.s32.totalorder %s366, %s367
      %p376 = scmp.eq.s32.totalorder %s31, 0
      %p377 = por %p375, %p376
      %p378 = scmp.ne.s32.totalorder %s366, %s367
      %p379 = scmp.eq.s32.totalorder %s32, 1
      %p380 = por %p378, %p379
      %p382 = scmp.ne.s32.totalorder %s367, %s381
      %p383 = scmp.eq.s32.totalorder %s32, 0
      %p384 = por %p382, %p383
      %s386 = sadd.s32 %s385, 1
      %p389 = scmp.eq.s32.totalorder %s26, 1
      %p390 = scmp.ne.s32.totalorder %s385, %s387
      %p391 = scmp.eq.s32.totalorder %s26, 0
      %p392 = por %p390, %p391
      %p393 = scmp.ne.s32.totalorder %s385, %s387
      %p394 = scmp.eq.s32.totalorder %s31, 1
      %p395 = por %p393, %p394
      %p396 = scmp.ne.s32.totalorder %s387, %s388
      %p397 = scmp.eq.s32.totalorder %s31, 0
      %p398 = por %p396, %p397
      %p399 = scmp.ne.s32.totalorder %s387, %s388
      %p400 = scmp.eq.s32.totalorder %s32, 1
      %p401 = por %p399, %p400
      %p403 = scmp.ne.s32.totalorder %s388, %s402
      %p404 = scmp.eq.s32.totalorder %s32, 0
      %p405 = por %p403, %p404
      %s406 = ssub.s32 %s26, %s33
      %p407 = scmp.eq.s32.totalorder %s406, 0
      %s409 = sadd.s32 %s408, 1
      %s410 = scalar_select %p407, %s408, %s409
      %p413 = pneg %p407
      %p414 = scmp.eq.s32.totalorder %s26, 1
      %p415 = por %p413, %p414
      %p416 = scmp.ne.s32.totalorder %s408, %s411
      %p417 = scmp.eq.s32.totalorder %s26, 0
      %p418 = por %p416, %p417
      %p419 = scmp.ne.s32.totalorder %s408, %s411
      %p420 = scmp.eq.s32.totalorder %s31, 1
      %p421 = por %p419, %p420
      %p422 = scmp.ne.s32.totalorder %s411, %s412
      %p423 = scmp.eq.s32.totalorder %s31, 0
      %p424 = por %p422, %p423
      %p425 = scmp.ne.s32.totalorder %s411, %s412
      %p426 = scmp.eq.s32.totalorder %s32, 1
      %p427 = por %p425, %p426
      %p429 = scmp.ne.s32.totalorder %s412, %s428
      %p430 = scmp.eq.s32.totalorder %s32, 0
      %p431 = por %p429, %p430
      %p432 = scmp.le.s32.totalorder 1, %s26
      %p433 = scmp.lt.s32.totalorder %s26, 3
      %p434 = pnand %p432, %p433
      %p435 = pneg %p434
      // Predicated region
      $region9: #{h0_net_forward.1} parent=5 // pred_check
        _
      $region10: #{h0_net_forward.1} parent=5 // pred_check_branch
        %437 = sbr.rel (%p434) target = $region12
      $region11: #{h0_net_forward.1} parent=5 // pred_region
        %s438 = ssub.s32 %s26, 1
        // Predicated region
        $region13: #{h0_net_forward.1} parent=11 // pred_check
          %p439 = pneg %p125
        $region14: #{h0_net_forward.1} parent=11 // pred_check_branch
          %441 = sbr.rel (%p439) target = $region16
        $region15: #{h0_net_forward.1} parent=11 // pred_region
          _
        $region16: #{h0_net_forward.1} parent=11 // pred_fallthru
          _
        // Predicated region
        $region17: #{h0_net_forward.1} parent=11 // pred_check
          %p442 = pneg %p146
        $region18: #{h0_net_forward.1} parent=11 // pred_check_branch
          %444 = sbr.rel (%p442) target = $region20
        $region19: #{h0_net_forward.1} parent=11 // pred_region
          _
        $region20: #{h0_net_forward.1} parent=11 // pred_fallthru
          _
        // Predicated region
        $region21: #{h0_net_forward.1} parent=11 // pred_check
          %p445 = pneg %p167
        $region22: #{h0_net_forward.1} parent=11 // pred_check_branch
          %447 = sbr.rel (%p445) target = $region24
        $region23: #{h0_net_forward.1} parent=11 // pred_region
          _
        $region24: #{h0_net_forward.1} parent=11 // pred_fallthru
          _
        // Predicated region
        $region25: #{h0_net_forward.1} parent=11 // pred_check
          %p448 = pneg %p188
        $region26: #{h0_net_forward.1} parent=11 // pred_check_branch
          %450 = sbr.rel (%p448) target = $region28
        $region27: #{h0_net_forward.1} parent=11 // pred_region
          _
        $region28: #{h0_net_forward.1} parent=11 // pred_fallthru
          _
        // Predicated region
        $region29: #{h0_net_forward.1} parent=11 // pred_check
          %p451 = pneg %p209
        $region30: #{h0_net_forward.1} parent=11 // pred_check_branch
          %453 = sbr.rel (%p451) target = $region32
        $region31: #{h0_net_forward.1} parent=11 // pred_region
          _
        $region32: #{h0_net_forward.1} parent=11 // pred_fallthru
          _
        // Predicated region
        $region33: #{h0_net_forward.1} parent=11 // pred_check
          %p454 = pneg %p230
        $region34: #{h0_net_forward.1} parent=11 // pred_check_branch
          %456 = sbr.rel (%p454) target = $region36
        $region35: #{h0_net_forward.1} parent=11 // pred_region
          _
        $region36: #{h0_net_forward.1} parent=11 // pred_fallthru
          _
        // Predicated region
        $region37: #{h0_net_forward.1} parent=11 // pred_check
          %p457 = pneg %p251
        $region38: #{h0_net_forward.1} parent=11 // pred_check_branch
          %459 = sbr.rel (%p457) target = $region40
        $region39: #{h0_net_forward.1} parent=11 // pred_region
          _
        $region40: #{h0_net_forward.1} parent=11 // pred_fallthru
          _
        // Predicated region
        $region41: #{h0_net_forward.1} parent=11 // pred_check
          %p460 = pneg %p272
        $region42: #{h0_net_forward.1} parent=11 // pred_check_branch
          %462 = sbr.rel (%p460) target = $region44
        $region43: #{h0_net_forward.1} parent=11 // pred_region
          _
        $region44: #{h0_net_forward.1} parent=11 // pred_fallthru
          _
        // Predicated region
        $region45: #{h0_net_forward.1} parent=11 // pred_check
          %p463 = pneg %p293
        $region46: #{h0_net_forward.1} parent=11 // pred_check_branch
          %465 = sbr.rel (%p463) target = $region48
        $region47: #{h0_net_forward.1} parent=11 // pred_region
          _
        $region48: #{h0_net_forward.1} parent=11 // pred_fallthru
          _
        // Predicated region
        $region49: #{h0_net_forward.1} parent=11 // pred_check
          %p466 = pneg %p314
        $region50: #{h0_net_forward.1} parent=11 // pred_check_branch
          %468 = sbr.rel (%p466) target = $region52
        $region51: #{h0_net_forward.1} parent=11 // pred_region
          _
        $region52: #{h0_net_forward.1} parent=11 // pred_fallthru
          _
        // Predicated region
        $region53: #{h0_net_forward.1} parent=11 // pred_check
          %p469 = pneg %p335
        $region54: #{h0_net_forward.1} parent=11 // pred_check_branch
          %471 = sbr.rel (%p469) target = $region56
        $region55: #{h0_net_forward.1} parent=11 // pred_region
          _
        $region56: #{h0_net_forward.1} parent=11 // pred_fallthru
          _
        // Predicated region
        $region57: #{h0_net_forward.1} parent=11 // pred_check
          %p472 = pneg %p356
        $region58: #{h0_net_forward.1} parent=11 // pred_check_branch
          %474 = sbr.rel (%p472) target = $region60
        $region59: #{h0_net_forward.1} parent=11 // pred_region
          _
        $region60: #{h0_net_forward.1} parent=11 // pred_fallthru
          _
        // Predicated region
        $region61: #{h0_net_forward.1} parent=11 // pred_check
          %p475 = pneg %p377
        $region62: #{h0_net_forward.1} parent=11 // pred_check_branch
          %477 = sbr.rel (%p475) target = $region64
        $region63: #{h0_net_forward.1} parent=11 // pred_region
          _
        $region64: #{h0_net_forward.1} parent=11 // pred_fallthru
          _
        // Predicated region
        $region65: #{h0_net_forward.1} parent=11 // pred_check
          %p478 = pneg %p398
        $region66: #{h0_net_forward.1} parent=11 // pred_check_branch
          %480 = sbr.rel (%p478) target = $region68
        $region67: #{h0_net_forward.1} parent=11 // pred_region
          _
        $region68: #{h0_net_forward.1} parent=11 // pred_fallthru
          _
      $region12: #{h0_net_forward.1} parent=5 // pred_fallthru
        _
      %p481 = scmp.lt.s32.totalorder %s26, 2
      // Predicated region
      $region69: #{h0_net_forward.1} parent=5 // pred_check
        %p482 = pneg %p481
      $region70: #{h0_net_forward.1} parent=5 // pred_check_branch
        %484 = sbr.rel (%p482) target = $region72
      $region71: #{h0_net_forward.1} parent=5 // pred_region
        // Predicated region
        $region73: #{h0_net_forward.1} parent=71 // pred_check
          %p485 = pneg %p46
        $region74: #{h0_net_forward.1} parent=71 // pred_check_branch
          %487 = sbr.rel (%p485) target = $region76
        $region75: #{h0_net_forward.1} parent=71 // pred_region
          %s488 = smul.u32 2, %s26
          %p489 = scmp.lt.s32.totalorder %s488, 3
          %s490 = scalar_select %p489, %s488, 3
          %s491 = smul.addr %s490, 4
          %s492 = smul.addr %s491, 8
          %s493 = scalar_lea.vmem %s0, %s492
          %s494 = smul.u32 2, %s26
        $region76: #{h0_net_forward.1} parent=71 // pred_fallthru
          _
        // Predicated region
        $region77: #{h0_net_forward.1} parent=71 // pred_check
          %p495 = pneg %p72
        $region78: #{h0_net_forward.1} parent=71 // pred_check_branch
          %497 = sbr.rel (%p495) target = $region80
        $region79: #{h0_net_forward.1} parent=71 // pred_region
          %s498 = smul.u32 2, %s26
          %p499 = scmp.lt.s32.totalorder %s498, 3
          %s500 = scalar_select %p499, %s498, 3
          %s501 = smul.addr %s500, 4
          %s502 = scalar_lea.vmem %s1, %s501
          %s503 = smul.u32 2, %s26
        $region80: #{h0_net_forward.1} parent=71 // pred_fallthru
          _
        // Predicated region
        $region81: #{h0_net_forward.1} parent=71 // pred_check
          %p504 = pneg %p98
        $region82: #{h0_net_forward.1} parent=71 // pred_check_branch
          %506 = sbr.rel (%p504) target = $region84
        $region83: #{h0_net_forward.1} parent=71 // pred_region
          %s507 = smul.u32 2, %s26
          %p508 = scmp.lt.s32.totalorder %s507, 3
          %s509 = scalar_select %p508, %s507, 3
          %s510 = smul.addr %s509, 4
          %s511 = smul.addr %s510, 8
          %s512 = scalar_lea.vmem %s2, %s511
          %s513 = smul.u32 2, %s26
        $region84: #{h0_net_forward.1} parent=71 // pred_fallthru
          _
      $region72: #{h0_net_forward.1} parent=5 // pred_fallthru
        _
      %p514 = scmp.le.s32.totalorder 1, %s26
      %p515 = scmp.lt.s32.totalorder %s26, 3
      %p516 = pnand %p514, %p515
      %p517 = pneg %p516
      // Predicated region
      $region85: #{h0_net_forward.1} parent=5 // pred_check
        _
      $region86: #{h0_net_forward.1} parent=5 // pred_check_branch
        %519 = sbr.rel (%p516) target = $region88
      $region87: #{h0_net_forward.1} parent=5 // pred_region
        %s520 = ssub.s32 %s26, 1
        %s521 = smul.u32 2, %s31
        %p522 = scmp.lt.s32.totalorder %s521, 3
        %s523 = scalar_select %p522, %s521, 3
        %s524 = smul.addr %s523, 4
        %s525 = smul.addr %s524, 8
        %s526 = scalar_lea.vmem %s0, %s525
        %p527 = pneg %p52
        %p528 = pneg %p49
        %s529 = smul.u32 2, %s31
        %p530 = scmp.lt.s32.totalorder %s529, 3
        %s531 = scalar_select %p530, %s529, 3
        %s532 = smul.addr %s531, 4
        %s533 = scalar_lea.vmem %s1, %s532
        %p534 = pneg %p78
        %p535 = pneg %p75
        %s536 = smul.u32 2, %s31
        %p537 = scmp.lt.s32.totalorder %s536, 3
        %s538 = scalar_select %p537, %s536, 3
        %s539 = smul.addr %s538, 4
        %s540 = smul.addr %s539, 8
        %s541 = scalar_lea.vmem %s2, %s540
        %p542 = pneg %p104
        %p543 = pneg %p101
        %p544 = pneg %p125
        %p545 = pneg %p122
        %p546 = pneg %p146
        %p547 = pneg %p143
        %p548 = pneg %p167
        %p549 = pneg %p164
        %p550 = pneg %p188
        %p551 = pneg %p185
        %p552 = pneg %p209
        %p553 = pneg %p206
        %p554 = pneg %p230
        %p555 = pneg %p227
        %p556 = pneg %p251
        %p557 = pneg %p248
        %p558 = pneg %p272
        %p559 = pneg %p269
        %p560 = pneg %p293
        %p561 = pneg %p290
        %p562 = pneg %p314
        %p563 = pneg %p311
        %p564 = pneg %p335
        %p565 = pneg %p332
        %p566 = pneg %p356
        %p567 = pneg %p353
        %p568 = pneg %p377
        %p569 = pneg %p374
        %p570 = pneg %p398
        %p571 = pneg %p395
        %p572 = pneg %p424
        %p573 = pneg %p421
        %s574 = sand.u32 %s411, 1
        %s575 = scalar_lea.sflag [#allocation3], %s574
        %s576 = sand.u32 %s411, 1
        %s577 = smul.addr %s576, 64
        %s578 = scalar_lea.vmem [#allocation2], %s577
        %s579 = smul.u32 2, %s31
        %p580 = scmp.lt.s32.totalorder %s579, 3
        %s581 = scalar_select %p580, %s579, 3
        %s582 = smul.addr %s581, 4
        %s583 = smul.addr %s582, 8
        %s584 = scalar_lea.vmem %s0, %s583
        %s585 = smul.u32 2, %s31
        %s586 = smul.u32 2, %s31
        %p587 = scmp.lt.s32.totalorder %s586, 3
        %s588 = scalar_select %p587, %s586, 3
        %s589 = smul.addr %s588, 4
        %s590 = scalar_lea.vmem %s1, %s589
        %s591 = smul.u32 2, %s31
        %s592 = smul.u32 2, %s31
        %p593 = scmp.lt.s32.totalorder %s592, 3
        %s594 = scalar_select %p593, %s592, 3
        %s595 = smul.addr %s594, 4
        %s596 = smul.addr %s595, 8
        %s597 = scalar_lea.vmem %s2, %s596
        %s598 = smul.u32 2, %s31
        %s599 = smul.u32 2, %s31
        %v601 = vld [vmem:[%s584] sm:$0xff]
        %v602 = vld [vmem:[%s584 + $0x8] sm:$0xff]
        %v603 = vld [vmem:[%s584 + $0x10] sm:$0xff]
        %v604 = vld [vmem:[%s584 + $0x18] sm:$0xff]
        %v605 = vld [vmem:[%s584 + $0x20] sm:$0xff]
        %v606 = vld [vmem:[%s584 + $0x28] sm:$0xff]
        %v607 = vld [vmem:[%s584 + $0x30] sm:$0xff]
        %v608 = vld [vmem:[%s584 + $0x38] sm:$0xff]
        %v609 = vlaneseq
        %v610 = vand.u32 %v609, 127
        %v611 = vld [vmem:[%s590] sm:$0x7]
        %613 = vset.pattern.permute.xlu0 0
        %614 = vperm.xlu0 %613, %v601
        %v615 = vpop.permute.xlu0 %614
        %618 = vset.pattern.permute.xlu0 0
        %619 = vperm.xlu0 %618, %v602
        %v620 = vpop.permute.xlu0 %619
        %623 = vset.pattern.permute.xlu0 0
        %624 = vperm.xlu0 %623, %v603
        %v625 = vpop.permute.xlu0 %624
        %628 = vset.pattern.permute.xlu0 0
        %629 = vperm.xlu0 %628, %v604
        %v630 = vpop.permute.xlu0 %629
        %v632 = vlaneseq
        %v633 = vshrl.u32 %v632, 7
        %v634 = vsub.s32 0, %v633
        %v635 = vrot.slane %v611, %v634
        %v636 = vsub.f32 %v615, %v635
        %v637 = vsub.f32 %v620, %v635
        %v638 = vsub.f32 %v625, %v635
        %v639 = vsub.f32 %v630, %v635
        %v640 = vmul.f32 %v636, %v636
        %v641 = vmul.f32 %v637, %v637
        %v642 = vmul.f32 %v638, %v638
        %v643 = vmul.f32 %v639, %v639
        %v644 = vadd.f32 %v640, 0.0
        %v645 = vadd.f32 %v641, 0.0
        %v646 = vadd.f32 %v642, 0.0
        %v647 = vadd.f32 %v643, 0.0
        %648 = vset.pattern.permute.xlu0 1
        %649 = vperm.xlu0 %648, %v601
        %v650 = vpop.permute.xlu0 %649
        %652 = vset.pattern.permute.xlu0 1
        %653 = vperm.xlu0 %652, %v602
        %v654 = vpop.permute.xlu0 %653
        %656 = vset.pattern.permute.xlu0 1
        %657 = vperm.xlu0 %656, %v603
        %v658 = vpop.permute.xlu0 %657
        %660 = vset.pattern.permute.xlu0 1
        %661 = vperm.xlu0 %660, %v604
        %v662 = vpop.permute.xlu0 %661
        %v664 = vlaneseq
        %v665 = vshrl.u32 %v664, 7
        %v666 = vsub.s32 1, %v665
        %v667 = vrot.slane %v611, %v666
        %v668 = vsub.f32 %v650, %v667
        %v669 = vsub.f32 %v654, %v667
        %v670 = vsub.f32 %v658, %v667
        %v671 = vsub.f32 %v662, %v667
        %v672 = vmul.f32 %v668, %v668
        %v673 = vmul.f32 %v669, %v669
        %v674 = vmul.f32 %v670, %v670
        %v675 = vmul.f32 %v671, %v671
        %v676 = vadd.f32 %v644, %v672
        %v677 = vadd.f32 %v645, %v673
        %v678 = vadd.f32 %v646, %v674
        %v679 = vadd.f32 %v647, %v675
        %680 = vset.pattern.permute.xlu0 2
        %681 = vperm.xlu0 %680, %v601
        %v682 = vpop.permute.xlu0 %681
        %684 = vset.pattern.permute.xlu0 2
        %685 = vperm.xlu0 %684, %v602
        %v686 = vpop.permute.xlu0 %685
        %688 = vset.pattern.permute.xlu0 2
        %689 = vperm.xlu0 %688, %v603
        %v690 = vpop.permute.xlu0 %689
        %692 = vset.pattern.permute.xlu0 2
        %693 = vperm.xlu0 %692, %v604
        %v694 = vpop.permute.xlu0 %693
        %v696 = vlaneseq
        %v697 = vshrl.u32 %v696, 7
        %v698 = vsub.s32 2, %v697
        %v699 = vrot.slane %v611, %v698
        %v700 = vsub.f32 %v682, %v699
        %v701 = vsub.f32 %v686, %v699
        %v702 = vsub.f32 %v690, %v699
        %v703 = vsub.f32 %v694, %v699
        %v704 = vmul.f32 %v700, %v700
        %v705 = vmul.f32 %v701, %v701
        %v706 = vmul.f32 %v702, %v702
        %v707 = vmul.f32 %v703, %v703
        %v708 = vadd.f32 %v676, %v704
        %v709 = vadd.f32 %v677, %v705
        %v710 = vadd.f32 %v678, %v706
        %v711 = vadd.f32 %v679, %v707
        %v712 = vadd.f32 %v708, 1.0
        %v713 = vadd.f32 %v709, 1.0
        %v714 = vadd.f32 %v710, 1.0
        %v715 = vadd.f32 %v711, 1.0
        %v720 = vshra.s32 %v712, 5
        %v721 = vshra.s32 %v713, 5
        %v722 = vshra.s32 %v714, 5
        %v723 = vshra.s32 %v715, 5
        %v724 = vshll.u32 %v720, 5
        %v725 = vshll.u32 %v721, 5
        %v726 = vshll.u32 %v722, 5
        %v727 = vshll.u32 %v723, 5
        %v728 = vor.u32 %v724, %v610
        %v729 = vor.u32 %v725, %v610
        %v730 = vor.u32 %v726, %v610
        %v731 = vor.u32 %v727, %v610
        %vm736 = vcmask 261120
        %v737 = vsel %vm736, %v728, inf
        %738 = vmin.xlane.f32.xlu0 %v737
        %v739 = vpop.xlane.xlu0 %738
        %v740 = vsel %vm736, %v729, inf
        %741 = vmin.xlane.f32.xlu0 %v740
        %v742 = vpop.xlane.xlu0 %741
        %v743 = vsel %vm736, %v730, inf
        %744 = vmin.xlane.f32.xlu0 %v743
        %v745 = vpop.xlane.xlu0 %744
        %v746 = vsel %vm736, %v731, inf
        %747 = vmin.xlane.f32.xlu0 %v746
        %v748 = vpop.xlane.xlu0 %747
        %vm749 = vcmp.eq.f32.partialorder %v728, %v739
        %vm750 = vcmp.eq.f32.partialorder %v729, %v742
        %vm751 = vcmp.eq.f32.partialorder %v730, %v745
        %vm752 = vcmp.eq.f32.partialorder %v731, %v748
        %v753 = vsel %vm749, 1, 0
        %v754 = vsel %vm750, 1, 0
        %v755 = vsel %vm751, 1, 0
        %v756 = vsel %vm752, 1, 0
        %v757 = vcvt.s32.f32 %v753
        %v758 = vcvt.s32.f32 %v754
        %v759 = vcvt.s32.f32 %v755
        %v760 = vcvt.s32.f32 %v756
        %v761 = vpack.c.bf16 %v758, %v757
        %v762 = vpack.c.bf16 %v760, %v759
        %v763 = vsel %vm749, 3e+38, %v728
        %v764 = vsel %vm750, 3e+38, %v729
        %v765 = vsel %vm751, 3e+38, %v730
        %v766 = vsel %vm752, 3e+38, %v731
        %v767 = vsel %vm736, %v763, inf
        %768 = vmin.xlane.f32.xlu0 %v767
        %v769 = vpop.xlane.xlu0 %768
        %v770 = vsel %vm736, %v764, inf
        %771 = vmin.xlane.f32.xlu0 %v770
        %v772 = vpop.xlane.xlu0 %771
        %v773 = vsel %vm736, %v765, inf
        %774 = vmin.xlane.f32.xlu0 %v773
        %v775 = vpop.xlane.xlu0 %774
        %v776 = vsel %vm736, %v766, inf
        %777 = vmin.xlane.f32.xlu0 %v776
        %v778 = vpop.xlane.xlu0 %777
        %vm779 = vcmp.eq.f32.partialorder %v763, %v769
        %vm780 = vcmp.eq.f32.partialorder %v764, %v772
        %vm781 = vcmp.eq.f32.partialorder %v765, %v775
        %vm782 = vcmp.eq.f32.partialorder %v766, %v778
        %v783 = vsel %vm779, 1, 0
        %v784 = vsel %vm780, 1, 0
        %v785 = vsel %vm781, 1, 0
        %v786 = vsel %vm782, 1, 0
        %v787 = vcvt.s32.f32 %v783
        %v788 = vcvt.s32.f32 %v784
        %v789 = vcvt.s32.f32 %v785
        %v790 = vcvt.s32.f32 %v786
        %v791 = vpack.c.bf16 %v788, %v787
        %v792 = vpack.c.bf16 %v790, %v789
        %v793 = vsel %vm779, 3e+38, %v763
        %v794 = vsel %vm780, 3e+38, %v764
        %v795 = vsel %vm781, 3e+38, %v765
        %v796 = vsel %vm782, 3e+38, %v766
        %v797 = vsel %vm736, %v793, inf
        %798 = vmin.xlane.f32.xlu0 %v797
        %v799 = vpop.xlane.xlu0 %798
        %v800 = vsel %vm736, %v794, inf
        %801 = vmin.xlane.f32.xlu0 %v800
        %v802 = vpop.xlane.xlu0 %801
        %v803 = vsel %vm736, %v795, inf
        %804 = vmin.xlane.f32.xlu0 %v803
        %v805 = vpop.xlane.xlu0 %804
        %v806 = vsel %vm736, %v796, inf
        %807 = vmin.xlane.f32.xlu0 %v806
        %v808 = vpop.xlane.xlu0 %807
        %vm809 = vcmp.eq.f32.partialorder %v793, %v799
        %vm810 = vcmp.eq.f32.partialorder %v794, %v802
        %vm811 = vcmp.eq.f32.partialorder %v795, %v805
        %vm812 = vcmp.eq.f32.partialorder %v796, %v808
        %v813 = vsel %vm809, 1, 0
        %v814 = vsel %vm810, 1, 0
        %v815 = vsel %vm811, 1, 0
        %v816 = vsel %vm812, 1, 0
        %v817 = vcvt.s32.f32 %v813
        %v818 = vcvt.s32.f32 %v814
        %v819 = vcvt.s32.f32 %v815
        %v820 = vcvt.s32.f32 %v816
        %v821 = vpack.c.bf16 %v818, %v817
        %v822 = vpack.c.bf16 %v820, %v819
        %v823 = vsel %vm809, 3e+38, %v793
        %v824 = vsel %vm810, 3e+38, %v794
        %v825 = vsel %vm811, 3e+38, %v795
        %v826 = vsel %vm812, 3e+38, %v796
        %v827 = vsel %vm736, %v823, inf
        %828 = vmin.xlane.f32.xlu0 %v827
        %v829 = vpop.xlane.xlu0 %828
        %v830 = vsel %vm736, %v824, inf
        %831 = vmin.xlane.f32.xlu0 %v830
        %v832 = vpop.xlane.xlu0 %831
        %v833 = vsel %vm736, %v825, inf
        %834 = vmin.xlane.f32.xlu0 %v833
        %v835 = vpop.xlane.xlu0 %834
        %v836 = vsel %vm736, %v826, inf
        %837 = vmin.xlane.f32.xlu0 %v836
        %v838 = vpop.xlane.xlu0 %837
        %vm839 = vcmp.eq.f32.partialorder %v823, %v829
        %vm840 = vcmp.eq.f32.partialorder %v824, %v832
        %vm841 = vcmp.eq.f32.partialorder %v825, %v835
        %vm842 = vcmp.eq.f32.partialorder %v826, %v838
        %v843 = vsel %vm839, 1, 0
        %v844 = vsel %vm840, 1, 0
        %v845 = vsel %vm841, 1, 0
        %v846 = vsel %vm842, 1, 0
        %v847 = vcvt.s32.f32 %v843
        %v848 = vcvt.s32.f32 %v844
        %v849 = vcvt.s32.f32 %v845
        %v850 = vcvt.s32.f32 %v846
        %v851 = vpack.c.bf16 %v848, %v847
        %v852 = vpack.c.bf16 %v850, %v849
        %v853 = vsel %vm839, 3e+38, %v823
        %v854 = vsel %vm840, 3e+38, %v824
        %v855 = vsel %vm841, 3e+38, %v825
        %v856 = vsel %vm842, 3e+38, %v826
        %v857 = vsel %vm736, %v853, inf
        %858 = vmin.xlane.f32.xlu0 %v857
        %v859 = vpop.xlane.xlu0 %858
        %v860 = vsel %vm736, %v854, inf
        %861 = vmin.xlane.f32.xlu0 %v860
        %v862 = vpop.xlane.xlu0 %861
        %v863 = vsel %vm736, %v855, inf
        %864 = vmin.xlane.f32.xlu0 %v863
        %v865 = vpop.xlane.xlu0 %864
        %v866 = vsel %vm736, %v856, inf
        %867 = vmin.xlane.f32.xlu0 %v866
        %v868 = vpop.xlane.xlu0 %867
        %vm869 = vcmp.eq.f32.partialorder %v853, %v859
        %vm870 = vcmp.eq.f32.partialorder %v854, %v862
        %vm871 = vcmp.eq.f32.partialorder %v855, %v865
        %vm872 = vcmp.eq.f32.partialorder %v856, %v868
        %v873 = vsel %vm869, 1, 0
        %v874 = vsel %vm870, 1, 0
        %v875 = vsel %vm871, 1, 0
        %v876 = vsel %vm872, 1, 0
        %v877 = vcvt.s32.f32 %v873
        %v878 = vcvt.s32.f32 %v874
        %v879 = vcvt.s32.f32 %v875
        %v880 = vcvt.s32.f32 %v876
        %v881 = vpack.c.bf16 %v878, %v877
        %v882 = vpack.c.bf16 %v880, %v879
        %v883 = vsel %vm869, 3e+38, %v853
        %v884 = vsel %vm870, 3e+38, %v854
        %v885 = vsel %vm871, 3e+38, %v855
        %v886 = vsel %vm872, 3e+38, %v856
        %v887 = vsel %vm736, %v883, inf
        %888 = vmin.xlane.f32.xlu0 %v887
        %v889 = vpop.xlane.xlu0 %888
        %v890 = vsel %vm736, %v884, inf
        %891 = vmin.xlane.f32.xlu0 %v890
        %v892 = vpop.xlane.xlu0 %891
        %v893 = vsel %vm736, %v885, inf
        %894 = vmin.xlane.f32.xlu0 %v893
        %v895 = vpop.xlane.xlu0 %894
        %v896 = vsel %vm736, %v886, inf
        %897 = vmin.xlane.f32.xlu0 %v896
        %v898 = vpop.xlane.xlu0 %897
        %vm899 = vcmp.eq.f32.partialorder %v883, %v889
        %vm900 = vcmp.eq.f32.partialorder %v884, %v892
        %vm901 = vcmp.eq.f32.partialorder %v885, %v895
        %vm902 = vcmp.eq.f32.partialorder %v886, %v898
        %v903 = vsel %vm899, 1, 0
        %v904 = vsel %vm900, 1, 0
        %v905 = vsel %vm901, 1, 0
        %v906 = vsel %vm902, 1, 0
        %v907 = vcvt.s32.f32 %v903
        %v908 = vcvt.s32.f32 %v904
        %v909 = vcvt.s32.f32 %v905
        %v910 = vcvt.s32.f32 %v906
        %v911 = vpack.c.bf16 %v908, %v907
        %v912 = vpack.c.bf16 %v910, %v909
        %v913 = vsel %vm899, 3e+38, %v883
        %v914 = vsel %vm900, 3e+38, %v884
        %v915 = vsel %vm901, 3e+38, %v885
        %v916 = vsel %vm902, 3e+38, %v886
        %v917 = vsel %vm736, %v913, inf
        %918 = vmin.xlane.f32.xlu0 %v917
        %v919 = vpop.xlane.xlu0 %918
        %v920 = vsel %vm736, %v914, inf
        %921 = vmin.xlane.f32.xlu0 %v920
        %v922 = vpop.xlane.xlu0 %921
        %v923 = vsel %vm736, %v915, inf
        %924 = vmin.xlane.f32.xlu0 %v923
        %v925 = vpop.xlane.xlu0 %924
        %v926 = vsel %vm736, %v916, inf
        %927 = vmin.xlane.f32.xlu0 %v926
        %v928 = vpop.xlane.xlu0 %927
        %vm929 = vcmp.eq.f32.partialorder %v913, %v919
        %vm930 = vcmp.eq.f32.partialorder %v914, %v922
        %vm931 = vcmp.eq.f32.partialorder %v915, %v925
        %vm932 = vcmp.eq.f32.partialorder %v916, %v928
        %v933 = vsel %vm929, 1, 0
        %v934 = vsel %vm930, 1, 0
        %v935 = vsel %vm931, 1, 0
        %v936 = vsel %vm932, 1, 0
        %v937 = vcvt.s32.f32 %v933
        %v938 = vcvt.s32.f32 %v934
        %v939 = vcvt.s32.f32 %v935
        %v940 = vcvt.s32.f32 %v936
        %v941 = vpack.c.bf16 %v938, %v937
        %v942 = vpack.c.bf16 %v940, %v939
        %v943 = vsel %vm929, 3e+38, %v913
        %v944 = vsel %vm930, 3e+38, %v914
        %v945 = vsel %vm931, 3e+38, %v915
        %v946 = vsel %vm932, 3e+38, %v916
        %v947 = vsel %vm736, %v943, inf
        %948 = vmin.xlane.f32.xlu0 %v947
        %v949 = vpop.xlane.xlu0 %948
        %v950 = vsel %vm736, %v944, inf
        %951 = vmin.xlane.f32.xlu0 %v950
        %v952 = vpop.xlane.xlu0 %951
        %v953 = vsel %vm736, %v945, inf
        %954 = vmin.xlane.f32.xlu0 %v953
        %v955 = vpop.xlane.xlu0 %954
        %v956 = vsel %vm736, %v946, inf
        %957 = vmin.xlane.f32.xlu0 %v956
        %v958 = vpop.xlane.xlu0 %957
        %vm959 = vcmp.eq.f32.partialorder %v943, %v949
        %vm960 = vcmp.eq.f32.partialorder %v944, %v952
        %vm961 = vcmp.eq.f32.partialorder %v945, %v955
        %vm962 = vcmp.eq.f32.partialorder %v946, %v958
        %v963 = vsel %vm959, 1, 0
        %v964 = vsel %vm960, 1, 0
        %v965 = vsel %vm961, 1, 0
        %v966 = vsel %vm962, 1, 0
        %v967 = vcvt.s32.f32 %v963
        %v968 = vcvt.s32.f32 %v964
        %v969 = vcvt.s32.f32 %v965
        %v970 = vcvt.s32.f32 %v966
        %v971 = vpack.c.bf16 %v968, %v967
        %v972 = vpack.c.bf16 %v970, %v969
        %s973 = scalar_lea.vmem %s590, 4
        %v974 = vld [vmem:[%s973] sm:$0x7]
        %976 = vset.pattern.permute.xlu0 0
        %977 = vperm.xlu0 %976, %v605
        %v978 = vpop.permute.xlu0 %977
        %981 = vset.pattern.permute.xlu0 0
        %982 = vperm.xlu0 %981, %v606
        %v983 = vpop.permute.xlu0 %982
        %986 = vset.pattern.permute.xlu0 0
        %987 = vperm.xlu0 %986, %v607
        %v988 = vpop.permute.xlu0 %987
        %991 = vset.pattern.permute.xlu0 0
        %992 = vperm.xlu0 %991, %v608
        %v993 = vpop.permute.xlu0 %992
        %v995 = vlaneseq
        %v996 = vshrl.u32 %v995, 7
        %v997 = vsub.s32 0, %v996
        %v998 = vrot.slane %v974, %v997
        %v999 = vsub.f32 %v978, %v998
        %v1000 = vsub.f32 %v983, %v998
        %v1001 = vsub.f32 %v988, %v998
        %v1002 = vsub.f32 %v993, %v998
        %v1003 = vmul.f32 %v999, %v999
        %v1004 = vmul.f32 %v1000, %v1000
        %v1005 = vmul.f32 %v1001, %v1001
        %v1006 = vmul.f32 %v1002, %v1002
        %v1007 = vadd.f32 %v1003, 0.0
        %v1008 = vadd.f32 %v1004, 0.0
        %v1009 = vadd.f32 %v1005, 0.0
        %v1010 = vadd.f32 %v1006, 0.0
        %1011 = vset.pattern.permute.xlu0 1
        %1012 = vperm.xlu0 %1011, %v605
        %v1013 = vpop.permute.xlu0 %1012
        %1015 = vset.pattern.permute.xlu0 1
        %1016 = vperm.xlu0 %1015, %v606
        %v1017 = vpop.permute.xlu0 %1016
        %1019 = vset.pattern.permute.xlu0 1
        %1020 = vperm.xlu0 %1019, %v607
        %v1021 = vpop.permute.xlu0 %1020
        %1023 = vset.pattern.permute.xlu0 1
        %1024 = vperm.xlu0 %1023, %v608
        %v1025 = vpop.permute.xlu0 %1024
        %v1027 = vlaneseq
        %v1028 = vshrl.u32 %v1027, 7
        %v1029 = vsub.s32 1, %v1028
        %v1030 = vrot.slane %v974, %v1029
        %v1031 = vsub.f32 %v1013, %v1030
        %v1032 = vsub.f32 %v1017, %v1030
        %v1033 = vsub.f32 %v1021, %v1030
        %v1034 = vsub.f32 %v1025, %v1030
        %v1035 = vmul.f32 %v1031, %v1031
        %v1036 = vmul.f32 %v1032, %v1032
        %v1037 = vmul.f32 %v1033, %v1033
        %v1038 = vmul.f32 %v1034, %v1034
        %v1039 = vadd.f32 %v1007, %v1035
        %v1040 = vadd.f32 %v1008, %v1036
        %v1041 = vadd.f32 %v1009, %v1037
        %v1042 = vadd.f32 %v1010, %v1038
        %1043 = vset.pattern.permute.xlu0 2
        %1044 = vperm.xlu0 %1043, %v605
        %v1045 = vpop.permute.xlu0 %1044
        %1047 = vset.pattern.permute.xlu0 2
        %1048 = vperm.xlu0 %1047, %v606
        %v1049 = vpop.permute.xlu0 %1048
        %1051 = vset.pattern.permute.xlu0 2
        %1052 = vperm.xlu0 %1051, %v607
        %v1053 = vpop.permute.xlu0 %1052
        %1055 = vset.pattern.permute.xlu0 2
        %1056 = vperm.xlu0 %1055, %v608
        %v1057 = vpop.permute.xlu0 %1056
        %v1059 = vlaneseq
        %v1060 = vshrl.u32 %v1059, 7
        %v1061 = vsub.s32 2, %v1060
        %v1062 = vrot.slane %v974, %v1061
        %v1063 = vsub.f32 %v1045, %v1062
        %v1064 = vsub.f32 %v1049, %v1062
        %v1065 = vsub.f32 %v1053, %v1062
        %v1066 = vsub.f32 %v1057, %v1062
        %v1067 = vmul.f32 %v1063, %v1063
        %v1068 = vmul.f32 %v1064, %v1064
        %v1069 = vmul.f32 %v1065, %v1065
        %v1070 = vmul.f32 %v1066, %v1066
        %v1071 = vadd.f32 %v1039, %v1067
        %v1072 = vadd.f32 %v1040, %v1068
        %v1073 = vadd.f32 %v1041, %v1069
        %v1074 = vadd.f32 %v1042, %v1070
        %v1075 = vadd.f32 %v1071, 1.0
        %v1076 = vadd.f32 %v1072, 1.0
        %v1077 = vadd.f32 %v1073, 1.0
        %v1078 = vadd.f32 %v1074, 1.0
        %v1083 = vshra.s32 %v1075, 5
        %v1084 = vshra.s32 %v1076, 5
        %v1085 = vshra.s32 %v1077, 5
        %v1086 = vshra.s32 %v1078, 5
        %v1087 = vshll.u32 %v1083, 5
        %v1088 = vshll.u32 %v1084, 5
        %v1089 = vshll.u32 %v1085, 5
        %v1090 = vshll.u32 %v1086, 5
        %v1091 = vor.u32 %v1087, %v610
        %v1092 = vor.u32 %v1088, %v610
        %v1093 = vor.u32 %v1089, %v610
        %v1094 = vor.u32 %v1090, %v610
        %v1099 = vsel %vm736, %v1091, inf
        %1100 = vmin.xlane.f32.xlu0 %v1099
        %v1101 = vpop.xlane.xlu0 %1100
        %v1102 = vsel %vm736, %v1092, inf
        %1103 = vmin.xlane.f32.xlu0 %v1102
        %v1104 = vpop.xlane.xlu0 %1103
        %v1105 = vsel %vm736, %v1093, inf
        %1106 = vmin.xlane.f32.xlu0 %v1105
        %v1107 = vpop.xlane.xlu0 %1106
        %v1108 = vsel %vm736, %v1094, inf
        %1109 = vmin.xlane.f32.xlu0 %v1108
        %v1110 = vpop.xlane.xlu0 %1109
        %vm1111 = vcmp.eq.f32.partialorder %v1091, %v1101
        %vm1112 = vcmp.eq.f32.partialorder %v1092, %v1104
        %vm1113 = vcmp.eq.f32.partialorder %v1093, %v1107
        %vm1114 = vcmp.eq.f32.partialorder %v1094, %v1110
        %v1115 = vsel %vm1111, 1, 0
        %v1116 = vsel %vm1112, 1, 0
        %v1117 = vsel %vm1113, 1, 0
        %v1118 = vsel %vm1114, 1, 0
        %v1119 = vcvt.s32.f32 %v1115
        %v1120 = vcvt.s32.f32 %v1116
        %v1121 = vcvt.s32.f32 %v1117
        %v1122 = vcvt.s32.f32 %v1118
        %v1123 = vpack.c.bf16 %v1120, %v1119
        %v1124 = vpack.c.bf16 %v1122, %v1121
        %v1125 = vsel %vm1111, 3e+38, %v1091
        %v1126 = vsel %vm1112, 3e+38, %v1092
        %v1127 = vsel %vm1113, 3e+38, %v1093
        %v1128 = vsel %vm1114, 3e+38, %v1094
        %v1129 = vsel %vm736, %v1125, inf
        %1130 = vmin.xlane.f32.xlu0 %v1129
        %v1131 = vpop.xlane.xlu0 %1130
        %v1132 = vsel %vm736, %v1126, inf
        %1133 = vmin.xlane.f32.xlu0 %v1132
        %v1134 = vpop.xlane.xlu0 %1133
        %v1135 = vsel %vm736, %v1127, inf
        %1136 = vmin.xlane.f32.xlu0 %v1135
        %v1137 = vpop.xlane.xlu0 %1136
        %v1138 = vsel %vm736, %v1128, inf
        %1139 = vmin.xlane.f32.xlu0 %v1138
        %v1140 = vpop.xlane.xlu0 %1139
        %vm1141 = vcmp.eq.f32.partialorder %v1125, %v1131
        %vm1142 = vcmp.eq.f32.partialorder %v1126, %v1134
        %vm1143 = vcmp.eq.f32.partialorder %v1127, %v1137
        %vm1144 = vcmp.eq.f32.partialorder %v1128, %v1140
        %v1145 = vsel %vm1141, 1, 0
        %v1146 = vsel %vm1142, 1, 0
        %v1147 = vsel %vm1143, 1, 0
        %v1148 = vsel %vm1144, 1, 0
        %v1149 = vcvt.s32.f32 %v1145
        %v1150 = vcvt.s32.f32 %v1146
        %v1151 = vcvt.s32.f32 %v1147
        %v1152 = vcvt.s32.f32 %v1148
        %v1153 = vpack.c.bf16 %v1150, %v1149
        %v1154 = vpack.c.bf16 %v1152, %v1151
        %v1155 = vsel %vm1141, 3e+38, %v1125
        %v1156 = vsel %vm1142, 3e+38, %v1126
        %v1157 = vsel %vm1143, 3e+38, %v1127
        %v1158 = vsel %vm1144, 3e+38, %v1128
        %v1159 = vsel %vm736, %v1155, inf
        %1160 = vmin.xlane.f32.xlu0 %v1159
        %v1161 = vpop.xlane.xlu0 %1160
        %v1162 = vsel %vm736, %v1156, inf
        %1163 = vmin.xlane.f32.xlu0 %v1162
        %v1164 = vpop.xlane.xlu0 %1163
        %v1165 = vsel %vm736, %v1157, inf
        %1166 = vmin.xlane.f32.xlu0 %v1165
        %v1167 = vpop.xlane.xlu0 %1166
        %v1168 = vsel %vm736, %v1158, inf
        %1169 = vmin.xlane.f32.xlu0 %v1168
        %v1170 = vpop.xlane.xlu0 %1169
        %vm1171 = vcmp.eq.f32.partialorder %v1155, %v1161
        %vm1172 = vcmp.eq.f32.partialorder %v1156, %v1164
        %vm1173 = vcmp.eq.f32.partialorder %v1157, %v1167
        %vm1174 = vcmp.eq.f32.partialorder %v1158, %v1170
        %v1175 = vsel %vm1171, 1, 0
        %v1176 = vsel %vm1172, 1, 0
        %v1177 = vsel %vm1173, 1, 0
        %v1178 = vsel %vm1174, 1, 0
        %v1179 = vcvt.s32.f32 %v1175
        %v1180 = vcvt.s32.f32 %v1176
        %v1181 = vcvt.s32.f32 %v1177
        %v1182 = vcvt.s32.f32 %v1178
        %v1183 = vpack.c.bf16 %v1180, %v1179
        %v1184 = vpack.c.bf16 %v1182, %v1181
        %v1185 = vsel %vm1171, 3e+38, %v1155
        %v1186 = vsel %vm1172, 3e+38, %v1156
        %v1187 = vsel %vm1173, 3e+38, %v1157
        %v1188 = vsel %vm1174, 3e+38, %v1158
        %v1189 = vsel %vm736, %v1185, inf
        %1190 = vmin.xlane.f32.xlu0 %v1189
        %v1191 = vpop.xlane.xlu0 %1190
        %v1192 = vsel %vm736, %v1186, inf
        %1193 = vmin.xlane.f32.xlu0 %v1192
        %v1194 = vpop.xlane.xlu0 %1193
        %v1195 = vsel %vm736, %v1187, inf
        %1196 = vmin.xlane.f32.xlu0 %v1195
        %v1197 = vpop.xlane.xlu0 %1196
        %v1198 = vsel %vm736, %v1188, inf
        %1199 = vmin.xlane.f32.xlu0 %v1198
        %v1200 = vpop.xlane.xlu0 %1199
        %vm1201 = vcmp.eq.f32.partialorder %v1185, %v1191
        %vm1202 = vcmp.eq.f32.partialorder %v1186, %v1194
        %vm1203 = vcmp.eq.f32.partialorder %v1187, %v1197
        %vm1204 = vcmp.eq.f32.partialorder %v1188, %v1200
        %v1205 = vsel %vm1201, 1, 0
        %v1206 = vsel %vm1202, 1, 0
        %v1207 = vsel %vm1203, 1, 0
        %v1208 = vsel %vm1204, 1, 0
        %v1209 = vcvt.s32.f32 %v1205
        %v1210 = vcvt.s32.f32 %v1206
        %v1211 = vcvt.s32.f32 %v1207
        %v1212 = vcvt.s32.f32 %v1208
        %v1213 = vpack.c.bf16 %v1210, %v1209
        %v1214 = vpack.c.bf16 %v1212, %v1211
        %v1215 = vsel %vm1201, 3e+38, %v1185
        %v1216 = vsel %vm1202, 3e+38, %v1186
        %v1217 = vsel %vm1203, 3e+38, %v1187
        %v1218 = vsel %vm1204, 3e+38, %v1188
        %v1219 = vsel %vm736, %v1215, inf
        %1220 = vmin.xlane.f32.xlu0 %v1219
        %v1221 = vpop.xlane.xlu0 %1220
        %v1222 = vsel %vm736, %v1216, inf
        %1223 = vmin.xlane.f32.xlu0 %v1222
        %v1224 = vpop.xlane.xlu0 %1223
        %v1225 = vsel %vm736, %v1217, inf
        %1226 = vmin.xlane.f32.xlu0 %v1225
        %v1227 = vpop.xlane.xlu0 %1226
        %v1228 = vsel %vm736, %v1218, inf
        %1229 = vmin.xlane.f32.xlu0 %v1228
        %v1230 = vpop.xlane.xlu0 %1229
        %vm1231 = vcmp.eq.f32.partialorder %v1215, %v1221
        %vm1232 = vcmp.eq.f32.partialorder %v1216, %v1224
        %vm1233 = vcmp.eq.f32.partialorder %v1217, %v1227
        %vm1234 = vcmp.eq.f32.partialorder %v1218, %v1230
        %v1235 = vsel %vm1231, 1, 0
        %v1236 = vsel %vm1232, 1, 0
        %v1237 = vsel %vm1233, 1, 0
        %v1238 = vsel %vm1234, 1, 0
        %v1239 = vcvt.s32.f32 %v1235
        %v1240 = vcvt.s32.f32 %v1236
        %v1241 = vcvt.s32.f32 %v1237
        %v1242 = vcvt.s32.f32 %v1238
        %v1243 = vpack.c.bf16 %v1240, %v1239
        %v1244 = vpack.c.bf16 %v1242, %v1241
        %v1245 = vsel %vm1231, 3e+38, %v1215
        %v1246 = vsel %vm1232, 3e+38, %v1216
        %v1247 = vsel %vm1233, 3e+38, %v1217
        %v1248 = vsel %vm1234, 3e+38, %v1218
        %v1249 = vsel %vm736, %v1245, inf
        %1250 = vmin.xlane.f32.xlu0 %v1249
        %v1251 = vpop.xlane.xlu0 %1250
        %v1252 = vsel %vm736, %v1246, inf
        %1253 = vmin.xlane.f32.xlu0 %v1252
        %v1254 = vpop.xlane.xlu0 %1253
        %v1255 = vsel %vm736, %v1247, inf
        %1256 = vmin.xlane.f32.xlu0 %v1255
        %v1257 = vpop.xlane.xlu0 %1256
        %v1258 = vsel %vm736, %v1248, inf
        %1259 = vmin.xlane.f32.xlu0 %v1258
        %v1260 = vpop.xlane.xlu0 %1259
        %vm1261 = vcmp.eq.f32.partialorder %v1245, %v1251
        %vm1262 = vcmp.eq.f32.partialorder %v1246, %v1254
        %vm1263 = vcmp.eq.f32.partialorder %v1247, %v1257
        %vm1264 = vcmp.eq.f32.partialorder %v1248, %v1260
        %v1265 = vsel %vm1261, 1, 0
        %v1266 = vsel %vm1262, 1, 0
        %v1267 = vsel %vm1263, 1, 0
        %v1268 = vsel %vm1264, 1, 0
        %v1269 = vcvt.s32.f32 %v1265
        %v1270 = vcvt.s32.f32 %v1266
        %v1271 = vcvt.s32.f32 %v1267
        %v1272 = vcvt.s32.f32 %v1268
        %v1273 = vpack.c.bf16 %v1270, %v1269
        %v1274 = vpack.c.bf16 %v1272, %v1271
        %v1275 = vsel %vm1261, 3e+38, %v1245
        %v1276 = vsel %vm1262, 3e+38, %v1246
        %v1277 = vsel %vm1263, 3e+38, %v1247
        %v1278 = vsel %vm1264, 3e+38, %v1248
        %v1279 = vsel %vm736, %v1275, inf
        %1280 = vmin.xlane.f32.xlu0 %v1279
        %v1281 = vpop.xlane.xlu0 %1280
        %v1282 = vsel %vm736, %v1276, inf
        %1283 = vmin.xlane.f32.xlu0 %v1282
        %v1284 = vpop.xlane.xlu0 %1283
        %v1285 = vsel %vm736, %v1277, inf
        %1286 = vmin.xlane.f32.xlu0 %v1285
        %v1287 = vpop.xlane.xlu0 %1286
        %v1288 = vsel %vm736, %v1278, inf
        %1289 = vmin.xlane.f32.xlu0 %v1288
        %v1290 = vpop.xlane.xlu0 %1289
        %vm1291 = vcmp.eq.f32.partialorder %v1275, %v1281
        %vm1292 = vcmp.eq.f32.partialorder %v1276, %v1284
        %vm1293 = vcmp.eq.f32.partialorder %v1277, %v1287
        %vm1294 = vcmp.eq.f32.partialorder %v1278, %v1290
        %v1295 = vsel %vm1291, 1, 0
        %v1296 = vsel %vm1292, 1, 0
        %v1297 = vsel %vm1293, 1, 0
        %v1298 = vsel %vm1294, 1, 0
        %v1299 = vcvt.s32.f32 %v1295
        %v1300 = vcvt.s32.f32 %v1296
        %v1301 = vcvt.s32.f32 %v1297
        %v1302 = vcvt.s32.f32 %v1298
        %v1303 = vpack.c.bf16 %v1300, %v1299
        %v1304 = vpack.c.bf16 %v1302, %v1301
        %v1305 = vsel %vm1291, 3e+38, %v1275
        %v1306 = vsel %vm1292, 3e+38, %v1276
        %v1307 = vsel %vm1293, 3e+38, %v1277
        %v1308 = vsel %vm1294, 3e+38, %v1278
        %v1309 = vsel %vm736, %v1305, inf
        %1310 = vmin.xlane.f32.xlu0 %v1309
        %v1311 = vpop.xlane.xlu0 %1310
        %v1312 = vsel %vm736, %v1306, inf
        %1313 = vmin.xlane.f32.xlu0 %v1312
        %v1314 = vpop.xlane.xlu0 %1313
        %v1315 = vsel %vm736, %v1307, inf
        %1316 = vmin.xlane.f32.xlu0 %v1315
        %v1317 = vpop.xlane.xlu0 %1316
        %v1318 = vsel %vm736, %v1308, inf
        %1319 = vmin.xlane.f32.xlu0 %v1318
        %v1320 = vpop.xlane.xlu0 %1319
        %vm1321 = vcmp.eq.f32.partialorder %v1305, %v1311
        %vm1322 = vcmp.eq.f32.partialorder %v1306, %v1314
        %vm1323 = vcmp.eq.f32.partialorder %v1307, %v1317
        %vm1324 = vcmp.eq.f32.partialorder %v1308, %v1320
        %v1325 = vsel %vm1321, 1, 0
        %v1326 = vsel %vm1322, 1, 0
        %v1327 = vsel %vm1323, 1, 0
        %v1328 = vsel %vm1324, 1, 0
        %v1329 = vcvt.s32.f32 %v1325
        %v1330 = vcvt.s32.f32 %v1326
        %v1331 = vcvt.s32.f32 %v1327
        %v1332 = vcvt.s32.f32 %v1328
        %v1333 = vpack.c.bf16 %v1330, %v1329
        %v1334 = vpack.c.bf16 %v1332, %v1331
        %v1335 = vld [vmem:[%s597] sm:$0xff]
        %v1336 = vld [vmem:[%s597 + $0x8] sm:$0xff]
        %v1337 = vld [vmem:[%s597 + $0x10] sm:$0xff]
        %v1338 = vld [vmem:[%s597 + $0x18] sm:$0xff]
        %v1339 = vld [vmem:[%s597 + $0x20] sm:$0xff]
        %v1340 = vld [vmem:[%s597 + $0x28] sm:$0xff]
        %v1341 = vld [vmem:[%s597 + $0x30] sm:$0xff]
        %v1342 = vld [vmem:[%s597 + $0x38] sm:$0xff]
        %v1343 = vld [vmem:[%s3] sm:$0x7]
        %v1344 = vlaneseq
        %v1345 = vshrl.u32 %v1344, 7
        %v1346 = vsub.s32 0, %v1345
        %v1347 = vrot.slane %v1343, %v1346
        %v1348 = vmul.f32 %v615, %v1347
        %v1349 = vmul.f32 %v620, %v1347
        %v1350 = vmul.f32 %v625, %v1347
        %v1351 = vmul.f32 %v630, %v1347
        %v1352 = vmul.f32 %v978, %v1347
        %v1353 = vmul.f32 %v983, %v1347
        %v1354 = vmul.f32 %v988, %v1347
        %v1355 = vmul.f32 %v993, %v1347
        %v1356 = vlaneseq
        %v1357 = vshrl.u32 %v1356, 7
        %v1358 = vsub.s32 1, %v1357
        %v1359 = vrot.slane %v1343, %v1358
        %v1360 = vmul.f32 %v650, %v1359
        %v1361 = vmul.f32 %v654, %v1359
        %v1362 = vmul.f32 %v658, %v1359
        %v1363 = vmul.f32 %v662, %v1359
        %v1364 = vmul.f32 %v1013, %v1359
        %v1365 = vmul.f32 %v1017, %v1359
        %v1366 = vmul.f32 %v1021, %v1359
        %v1367 = vmul.f32 %v1025, %v1359
        %v1368 = vadd.f32 %v1348, %v1360
        %v1369 = vadd.f32 %v1349, %v1361
        %v1370 = vadd.f32 %v1350, %v1362
        %v1371 = vadd.f32 %v1351, %v1363
        %v1372 = vadd.f32 %v1352, %v1364
        %v1373 = vadd.f32 %v1353, %v1365
        %v1374 = vadd.f32 %v1354, %v1366
        %v1375 = vadd.f32 %v1355, %v1367
        %v1376 = vlaneseq
        %v1377 = vshrl.u32 %v1376, 7
        %v1378 = vsub.s32 2, %v1377
        %v1379 = vrot.slane %v1343, %v1378
        %v1380 = vmul.f32 %v682, %v1379
        %v1381 = vmul.f32 %v686, %v1379
        %v1382 = vmul.f32 %v690, %v1379
        %v1383 = vmul.f32 %v694, %v1379
        %v1384 = vmul.f32 %v1045, %v1379
        %v1385 = vmul.f32 %v1049, %v1379
        %v1386 = vmul.f32 %v1053, %v1379
        %v1387 = vmul.f32 %v1057, %v1379
        %v1388 = vadd.f32 %v1368, %v1380
        %v1389 = vadd.f32 %v1369, %v1381
        %v1390 = vadd.f32 %v1370, %v1382
        %v1391 = vadd.f32 %v1371, %v1383
        %v1392 = vadd.f32 %v1372, %v1384
        %v1393 = vadd.f32 %v1373, %v1385
        %v1394 = vadd.f32 %v1374, %v1386
        %v1395 = vadd.f32 %v1375, %v1387
        %v1396 = vpack.c.bf16 %v1336, %v1335
        %v1397 = vpack.c.bf16 %v1338, %v1337
        %v1398 = vpack.c.bf16 %v1340, %v1339
        %v1399 = vpack.c.bf16 %v1342, %v1341
        %v1400 = vld [vmem:[%s4] sm:$0xf]
        %v1401 = vld [vmem:[%s4 + $0x4] sm:$0xf]
        %v1402 = vld [vmem:[%s4 + $0x8] sm:$0xf]
        %v1403 = vld [vmem:[%s4 + $0xc] sm:$0xf]
        %v1404 = vld [vmem:[%s4 + $0x10] sm:$0xf]
        %v1405 = vld [vmem:[%s4 + $0x14] sm:$0xf]
        %v1406 = vld [vmem:[%s4 + $0x18] sm:$0xf]
        %v1407 = vld [vmem:[%s4 + $0x1c] sm:$0xf]
        %v1408 = vld [vmem:[%s4 + $0x20] sm:$0xf]
        %v1409 = vld [vmem:[%s4 + $0x24] sm:$0xf]
        %v1410 = vld [vmem:[%s4 + $0x28] sm:$0xf]
        %v1411 = vld [vmem:[%s4 + $0x2c] sm:$0xf]
        %v1412 = vld [vmem:[%s4 + $0x30] sm:$0xf]
        %v1413 = vld [vmem:[%s4 + $0x34] sm:$0xf]
        %v1414 = vld [vmem:[%s4 + $0x38] sm:$0xf]
        %v1415 = vld [vmem:[%s4 + $0x3c] sm:$0xf]
        %v1432 = vunpack.c.l.b16 %v1400
        %v1433 = vunpack.c.l.b16 %v1401
        %v1434 = vunpack.c.l.b16 %v1402
        %v1435 = vunpack.c.l.b16 %v1403
        %v1436 = vunpack.c.l.b16 %v1404
        %v1437 = vunpack.c.l.b16 %v1405
        %v1438 = vunpack.c.l.b16 %v1406
        %v1439 = vunpack.c.l.b16 %v1407
        %v1440 = vunpack.c.l.b16 %v1408
        %v1441 = vunpack.c.l.b16 %v1409
        %v1442 = vunpack.c.l.b16 %v1410
        %v1443 = vunpack.c.l.b16 %v1411
        %v1444 = vunpack.c.l.b16 %v1412
        %v1445 = vunpack.c.l.b16 %v1413
        %v1446 = vunpack.c.l.b16 %v1414
        %v1447 = vunpack.c.l.b16 %v1415
        %v1448 = vpack.c.b16 %v1433, %v1432
        %v1449 = vpack.c.b16 %v1435, %v1434
        %v1450 = vpack.c.b16 %v1437, %v1436
        %v1451 = vpack.c.b16 %v1439, %v1438
        %v1452 = vpack.c.b16 %v1441, %v1440
        %v1453 = vpack.c.b16 %v1443, %v1442
        %v1454 = vpack.c.b16 %v1445, %v1444
        %v1455 = vpack.c.b16 %v1447, %v1446
        %1464 = vmatprep.subr.bf16.mxu0 0
        %1465 = vmatpush1.bf16.msra.mxu0 %v1448
        %1466 = vmatprep.subr.bf16.mxu0 0
        %1467 = vmatpush1.bf16.msra.mxu0 %v1449
        %1468 = vmatprep.subr.bf16.mxu0 0
        %1469 = vmatpush1.bf16.msra.mxu0 %v1450
        %1470 = vmatprep.subr.bf16.mxu0 0
        %1471 = vmatpush1.bf16.msra.mxu0 %v1451
        %1472 = vmatprep.subr.bf16.mxu0 0
        %1473 = vmatpush1.bf16.msra.mxu0 %v1452
        %1474 = vmatprep.subr.bf16.mxu0 0
        %1475 = vmatpush1.bf16.msra.mxu0 %v1453
        %1476 = vmatprep.subr.bf16.mxu0 0
        %1477 = vmatpush1.bf16.msra.mxu0 %v1454
        %1478 = vmatprep.subr.bf16.mxu0 0
        %1479 = vmatpush1.bf16.msra.mxu0 %v1455
        %1480 = vmatprep.subr.bf16.mxu0 0
        %1481 = vmatpush1.bf16.msra.mxu0 0
        %1482 = vmatprep.subr.bf16.mxu0 0
        %1483 = vmatpush1.bf16.msra.mxu0 0
        %1484 = vmatprep.subr.bf16.mxu0 0
        %1485 = vmatpush1.bf16.msra.mxu0 0
        %1486 = vmatprep.subr.bf16.mxu0 0
        %1487 = vmatpush1.bf16.msra.mxu0 0
        %1488 = vmatprep.subr.bf16.mxu0 0
        %1489 = vmatpush1.bf16.msra.mxu0 0
        %1490 = vmatprep.subr.bf16.mxu0 0
        %1491 = vmatpush1.bf16.msra.mxu0 0
        %1492 = vmatprep.subr.bf16.mxu0 0
        %1493 = vmatpush1.bf16.msra.mxu0 0
        %1494 = vmatprep.subr.bf16.mxu0 0
        %1495 = vmatpush1.bf16.msra.mxu0 0
        %1496 = vmatprep.mubr.bf16.mxu0 0
        %1497 = vmatmul.mubr.bf16.gmra.mrb[0].mxu0 %v1396
        %v1498 = vpop.f32.mrb[0].mxu0
        %v1499 = vadd.f32 0.0, %v1498
        %v1500 = vpop.f32.mrb[0].mxu0
        %v1501 = vpop.f32.mrb[0].mxu0
        %v1502 = vadd.f32 0.0, %v1501
        %v1503 = vpop.f32.mrb[0].mxu0
        %1504 = vmatprep.mubr.bf16.mxu0 0
        %1505 = vmatmul.mubr.bf16.gmra.mrb[0].mxu0 %v1397
        %v1506 = vpop.f32.mrb[0].mxu0
        %v1507 = vadd.f32 0.0, %v1506
        %v1508 = vpop.f32.mrb[0].mxu0
        %v1509 = vpop.f32.mrb[0].mxu0
        %v1510 = vadd.f32 0.0, %v1509
        %v1511 = vpop.f32.mrb[0].mxu0
        %1512 = vmatprep.mubr.bf16.mxu0 0
        %1513 = vmatmul.mubr.bf16.gmra.mrb[0].mxu0 %v1398
        %v1514 = vpop.f32.mrb[0].mxu0
        %v1515 = vadd.f32 0.0, %v1514
        %v1516 = vpop.f32.mrb[0].mxu0
        %v1517 = vpop.f32.mrb[0].mxu0
        %v1518 = vadd.f32 0.0, %v1517
        %v1519 = vpop.f32.mrb[0].mxu0
        %1520 = vmatprep.mubr.bf16.mxu0 0
        %1521 = vmatmul.mubr.bf16.gmra.mrb[0].mxu0 %v1399
        %v1522 = vpop.f32.mrb[0].mxu0
        %v1523 = vadd.f32 0.0, %v1522
        %v1524 = vpop.f32.mrb[0].mxu0
        %v1525 = vpop.f32.mrb[0].mxu0
        %v1526 = vadd.f32 0.0, %v1525
        %v1527 = vpop.f32.mrb[0].mxu0
        %1528 = vdwg.mxu0
        %v1529 = vadd.f32 %v1499, %v1388
        %v1530 = vadd.f32 %v1502, %v1389
        %v1531 = vadd.f32 %v1507, %v1390
        %v1532 = vadd.f32 %v1510, %v1391
        %v1533 = vadd.f32 %v1515, %v1392
        %v1534 = vadd.f32 %v1518, %v1393
        %v1535 = vadd.f32 %v1523, %v1394
        %v1536 = vadd.f32 %v1526, %v1395
        %v1537 = vpack.c.bf16 %v1530, %v1529
        %v1538 = vpack.c.bf16 %v1532, %v1531
        %v1539 = vpack.c.bf16 %v1534, %v1533
        %v1540 = vpack.c.bf16 %v1536, %v1535
        %v1542 = vsel %vm736, %v761, 0
        %v1545 = vsel %vm736, %v762, 0
        %v1548 = vsel %vm736, %v791, 0
        %v1551 = vsel %vm736, %v792, 0
        %v1554 = vsel %vm736, %v821, 0
        %v1557 = vsel %vm736, %v822, 0
        %v1560 = vsel %vm736, %v851, 0
        %v1563 = vsel %vm736, %v852, 0
        %v1566 = vsel %vm736, %v881, 0
        %v1569 = vsel %vm736, %v882, 0
        %v1572 = vsel %vm736, %v911, 0
        %v1575 = vsel %vm736, %v912, 0
        %v1578 = vsel %vm736, %v941, 0
        %v1581 = vsel %vm736, %v942, 0
        %v1584 = vsel %vm736, %v971, 0
        %v1587 = vsel %vm736, %v972, 0
        %1589 = vmatprep.subr.bf16.mxu0 0
        %1590 = vmatpush1.bf16.msra.mxu0 %v1537
        %1591 = vmatprep.subr.bf16.mxu0 0
        %1592 = vmatpush1.bf16.msra.mxu0 %v1538
        %1593 = vmatprep.subr.bf16.mxu0 0
        %1594 = vmatpush1.bf16.msra.mxu0 0
        %1595 = vmatprep.subr.bf16.mxu0 0
        %1596 = vmatpush1.bf16.msra.mxu0 0
        %1597 = vmatprep.subr.bf16.mxu0 0
        %1598 = vmatpush1.bf16.msra.mxu0 0
        %1599 = vmatprep.subr.bf16.mxu0 0
        %1600 = vmatpush1.bf16.msra.mxu0 0
        %1601 = vmatprep.subr.bf16.mxu0 0
        %1602 = vmatpush1.bf16.msra.mxu0 0
        %1603 = vmatprep.subr.bf16.mxu0 0
        %1604 = vmatpush1.bf16.msra.mxu0 0
        %1605 = vmatprep.subr.bf16.mxu0 0
        %1606 = vmatpush1.bf16.msra.mxu0 0
        %1607 = vmatprep.subr.bf16.mxu0 0
        %1608 = vmatpush1.bf16.msra.mxu0 0
        %1609 = vmatprep.subr.bf16.mxu0 0
        %1610 = vmatpush1.bf16.msra.mxu0 0
        %1611 = vmatprep.subr.bf16.mxu0 0
        %1612 = vmatpush1.bf16.msra.mxu0 0
        %1613 = vmatprep.subr.bf16.mxu0 0
        %1614 = vmatpush1.bf16.msra.mxu0 0
        %1615 = vmatprep.subr.bf16.mxu0 0
        %1616 = vmatpush1.bf16.msra.mxu0 0
        %1617 = vmatprep.subr.bf16.mxu0 0
        %1618 = vmatpush1.bf16.msra.mxu0 0
        %1619 = vmatprep.subr.bf16.mxu0 0
        %1620 = vmatpush1.bf16.msra.mxu0 0
        %1621 = vmatprep.mubr.bf16.mxu0 0
        %1622 = vmatmul.mubr.bf16.gmra.mrb[0].mxu0 %v1542
        %v1623 = vpop.f32.mrb[0].mxu0
        %v1624 = vadd.f32 0.0, %v1623
        %v1625 = vpop.f32.mrb[0].mxu0
        %v1626 = vpop.f32.mrb[0].mxu0
        %v1627 = vadd.f32 0.0, %v1626
        %v1628 = vpop.f32.mrb[0].mxu0
        %1629 = vmatprep.mubr.bf16.mxu0 0
        %1630 = vmatmul.mubr.bf16.gmra.mrb[0].mxu0 %v1545
        %v1631 = vpop.f32.mrb[0].mxu0
        %v1632 = vadd.f32 0.0, %v1631
        %v1633 = vpop.f32.mrb[0].mxu0
        %v1634 = vpop.f32.mrb[0].mxu0
        %v1635 = vadd.f32 0.0, %v1634
        %v1636 = vpop.f32.mrb[0].mxu0
        %1637 = vmatprep.mubr.bf16.mxu0 0
        %1638 = vmatmul.mubr.bf16.gmra.mrb[0].mxu0 %v1548
        %v1639 = vpop.f32.mrb[0].mxu0
        %v1640 = vadd.f32 0.0, %v1639
        %v1641 = vpop.f32.mrb[0].mxu0
        %v1642 = vpop.f32.mrb[0].mxu0
        %v1643 = vadd.f32 0.0, %v1642
        %v1644 = vpop.f32.mrb[0].mxu0
        %1645 = vmatprep.mubr.bf16.mxu0 0
        %1646 = vmatmul.mubr.bf16.gmra.mrb[0].mxu0 %v1551
        %v1647 = vpop.f32.mrb[0].mxu0
        %v1648 = vadd.f32 0.0, %v1647
        %v1649 = vpop.f32.mrb[0].mxu0
        %v1650 = vpop.f32.mrb[0].mxu0
        %v1651 = vadd.f32 0.0, %v1650
        %v1652 = vpop.f32.mrb[0].mxu0
        %1653 = vmatprep.mubr.bf16.mxu0 0
        %1654 = vmatmul.mubr.bf16.gmra.mrb[0].mxu0 %v1554
        %v1655 = vpop.f32.mrb[0].mxu0
        %v1656 = vadd.f32 0.0, %v1655
        %v1657 = vpop.f32.mrb[0].mxu0
        %v1658 = vpop.f32.mrb[0].mxu0
        %v1659 = vadd.f32 0.0, %v1658
        %v1660 = vpop.f32.mrb[0].mxu0
        %1661 = vmatprep.mubr.bf16.mxu0 0
        %1662 = vmatmul.mubr.bf16.gmra.mrb[0].mxu0 %v1557
        %v1663 = vpop.f32.mrb[0].mxu0
        %v1664 = vadd.f32 0.0, %v1663
        %v1665 = vpop.f32.mrb[0].mxu0
        %v1666 = vpop.f32.mrb[0].mxu0
        %v1667 = vadd.f32 0.0, %v1666
        %v1668 = vpop.f32.mrb[0].mxu0
        %1669 = vmatprep.mubr.bf16.mxu0 0
        %1670 = vmatmul.mubr.bf16.gmra.mrb[0].mxu0 %v1560
        %v1671 = vpop.f32.mrb[0].mxu0
        %v1672 = vadd.f32 0.0, %v1671
        %v1673 = vpop.f32.mrb[0].mxu0
        %v1674 = vpop.f32.mrb[0].mxu0
        %v1675 = vadd.f32 0.0, %v1674
        %v1676 = vpop.f32.mrb[0].mxu0
        %1677 = vmatprep.mubr.bf16.mxu0 0
        %1678 = vmatmul.mubr.bf16.gmra.mrb[0].mxu0 %v1563
        %v1679 = vpop.f32.mrb[0].mxu0
        %v1680 = vadd.f32 0.0, %v1679
        %v1681 = vpop.f32.mrb[0].mxu0
        %v1682 = vpop.f32.mrb[0].mxu0
        %v1683 = vadd.f32 0.0, %v1682
        %v1684 = vpop.f32.mrb[0].mxu0
        %1685 = vmatprep.mubr.bf16.mxu0 0
        %1686 = vmatmul.mubr.bf16.gmra.mrb[0].mxu0 %v1566
        %v1687 = vpop.f32.mrb[0].mxu0
        %v1688 = vadd.f32 0.0, %v1687
        %v1689 = vpop.f32.mrb[0].mxu0
        %v1690 = vpop.f32.mrb[0].mxu0
        %v1691 = vadd.f32 0.0, %v1690
        %v1692 = vpop.f32.mrb[0].mxu0
        %1693 = vmatprep.mubr.bf16.mxu0 0
        %1694 = vmatmul.mubr.bf16.gmra.mrb[0].mxu0 %v1569
        %v1695 = vpop.f32.mrb[0].mxu0
        %v1696 = vadd.f32 0.0, %v1695
        %v1697 = vpop.f32.mrb[0].mxu0
        %v1698 = vpop.f32.mrb[0].mxu0
        %v1699 = vadd.f32 0.0, %v1698
        %v1700 = vpop.f32.mrb[0].mxu0
        %1701 = vmatprep.mubr.bf16.mxu0 0
        %1702 = vmatmul.mubr.bf16.gmra.mrb[0].mxu0 %v1572
        %v1703 = vpop.f32.mrb[0].mxu0
        %v1704 = vadd.f32 0.0, %v1703
        %v1705 = vpop.f32.mrb[0].mxu0
        %v1706 = vpop.f32.mrb[0].mxu0
        %v1707 = vadd.f32 0.0, %v1706
        %v1708 = vpop.f32.mrb[0].mxu0
        %1709 = vmatprep.mubr.bf16.mxu0 0
        %1710 = vmatmul.mubr.bf16.gmra.mrb[0].mxu0 %v1575
        %v1711 = vpop.f32.mrb[0].mxu0
        %v1712 = vadd.f32 0.0, %v1711
        %v1713 = vpop.f32.mrb[0].mxu0
        %v1714 = vpop.f32.mrb[0].mxu0
        %v1715 = vadd.f32 0.0, %v1714
        %v1716 = vpop.f32.mrb[0].mxu0
        %1717 = vmatprep.mubr.bf16.mxu0 0
        %1718 = vmatmul.mubr.bf16.gmra.mrb[0].mxu0 %v1578
        %v1719 = vpop.f32.mrb[0].mxu0
        %v1720 = vadd.f32 0.0, %v1719
        %v1721 = vpop.f32.mrb[0].mxu0
        %v1722 = vpop.f32.mrb[0].mxu0
        %v1723 = vadd.f32 0.0, %v1722
        %v1724 = vpop.f32.mrb[0].mxu0
        %1725 = vmatprep.mubr.bf16.mxu0 0
        %1726 = vmatmul.mubr.bf16.gmra.mrb[0].mxu0 %v1581
        %v1727 = vpop.f32.mrb[0].mxu0
        %v1728 = vadd.f32 0.0, %v1727
        %v1729 = vpop.f32.mrb[0].mxu0
        %v1730 = vpop.f32.mrb[0].mxu0
        %v1731 = vadd.f32 0.0, %v1730
        %v1732 = vpop.f32.mrb[0].mxu0
        %1733 = vmatprep.mubr.bf16.mxu0 0
        %1734 = vmatmul.mubr.bf16.gmra.mrb[0].mxu0 %v1584
        %v1735 = vpop.f32.mrb[0].mxu0
        %v1736 = vadd.f32 0.0, %v1735
        %v1737 = vpop.f32.mrb[0].mxu0
        %v1738 = vpop.f32.mrb[0].mxu0
        %v1739 = vadd.f32 0.0, %v1738
        %v1740 = vpop.f32.mrb[0].mxu0
        %1741 = vmatprep.mubr.bf16.mxu0 0
        %1742 = vmatmul.mubr.bf16.gmra.mrb[0].mxu0 %v1587
        %v1743 = vpop.f32.mrb[0].mxu0
        %v1744 = vadd.f32 0.0, %v1743
        %v1745 = vpop.f32.mrb[0].mxu0
        %v1746 = vpop.f32.mrb[0].mxu0
        %v1747 = vadd.f32 0.0, %v1746
        %v1748 = vpop.f32.mrb[0].mxu0
        %1749 = vdwg.mxu0
        %v1751 = vsel %vm736, %v1123, 0
        %v1754 = vsel %vm736, %v1124, 0
        %v1757 = vsel %vm736, %v1153, 0
        %v1760 = vsel %vm736, %v1154, 0
        %v1763 = vsel %vm736, %v1183, 0
        %v1766 = vsel %vm736, %v1184, 0
        %v1769 = vsel %vm736, %v1213, 0
        %v1772 = vsel %vm736, %v1214, 0
        %v1775 = vsel %vm736, %v1243, 0
        %v1778 = vsel %vm736, %v1244, 0
        %v1781 = vsel %vm736, %v1273, 0
        %v1784 = vsel %vm736, %v1274, 0
        %v1787 = vsel %vm736, %v1303, 0
        %v1790 = vsel %vm736, %v1304, 0
        %v1793 = vsel %vm736, %v1333, 0
        %v1796 = vsel %vm736, %v1334, 0
        %1798 = vmatprep.subr.bf16.mxu0 0
        %1799 = vmatpush1.bf16.msra.mxu0 %v1539
        %1800 = vmatprep.subr.bf16.mxu0 0
        %1801 = vmatpush1.bf16.msra.mxu0 %v1540
        %1802 = vmatprep.subr.bf16.mxu0 0
        %1803 = vmatpush1.bf16.msra.mxu0 0
        %1804 = vmatprep.subr.bf16.mxu0 0
        %1805 = vmatpush1.bf16.msra.mxu0 0
        %1806 = vmatprep.subr.bf16.mxu0 0
        %1807 = vmatpush1.bf16.msra.mxu0 0
        %1808 = vmatprep.subr.bf16.mxu0 0
        %1809 = vmatpush1.bf16.msra.mxu0 0
        %1810 = vmatprep.subr.bf16.mxu0 0
        %1811 = vmatpush1.bf16.msra.mxu0 0
        %1812 = vmatprep.subr.bf16.mxu0 0
        %1813 = vmatpush1.bf16.msra.mxu0 0
        %1814 = vmatprep.subr.bf16.mxu0 0
        %1815 = vmatpush1.bf16.msra.mxu0 0
        %1816 = vmatprep.subr.bf16.mxu0 0
        %1817 = vmatpush1.bf16.msra.mxu0 0
        %1818 = vmatprep.subr.bf16.mxu0 0
        %1819 = vmatpush1.bf16.msra.mxu0 0
        %1820 = vmatprep.subr.bf16.mxu0 0
        %1821 = vmatpush1.bf16.msra.mxu0 0
        %1822 = vmatprep.subr.bf16.mxu0 0
        %1823 = vmatpush1.bf16.msra.mxu0 0
        %1824 = vmatprep.subr.bf16.mxu0 0
        %1825 = vmatpush1.bf16.msra.mxu0 0
        %1826 = vmatprep.subr.bf16.mxu0 0
        %1827 = vmatpush1.bf16.msra.mxu0 0
        %1828 = vmatprep.subr.bf16.mxu0 0
        %1829 = vmatpush1.bf16.msra.mxu0 0
        %1830 = vmatprep.mubr.bf16.mxu0 0
        %1831 = vmatmul.mubr.bf16.gmra.mrb[0].mxu0 %v1751
        %v1832 = vpop.f32.mrb[0].mxu0
        %v1833 = vadd.f32 0.0, %v1832
        %v1834 = vpop.f32.mrb[0].mxu0
        %v1835 = vpop.f32.mrb[0].mxu0
        %v1836 = vadd.f32 0.0, %v1835
        %v1837 = vpop.f32.mrb[0].mxu0
        %1838 = vmatprep.mubr.bf16.mxu0 0
        %1839 = vmatmul.mubr.bf16.gmra.mrb[0].mxu0 %v1754
        %v1840 = vpop.f32.mrb[0].mxu0
        %v1841 = vadd.f32 0.0, %v1840
        %v1842 = vpop.f32.mrb[0].mxu0
        %v1843 = vpop.f32.mrb[0].mxu0
        %v1844 = vadd.f32 0.0, %v1843
        %v1845 = vpop.f32.mrb[0].mxu0
        %1846 = vmatprep.mubr.bf16.mxu0 0
        %1847 = vmatmul.mubr.bf16.gmra.mrb[0].mxu0 %v1757
        %v1848 = vpop.f32.mrb[0].mxu0
        %v1849 = vadd.f32 0.0, %v1848
        %v1850 = vpop.f32.mrb[0].mxu0
        %v1851 = vpop.f32.mrb[0].mxu0
        %v1852 = vadd.f32 0.0, %v1851
        %v1853 = vpop.f32.mrb[0].mxu0
        %1854 = vmatprep.mubr.bf16.mxu0 0
        %1855 = vmatmul.mubr.bf16.gmra.mrb[0].mxu0 %v1760
        %v1856 = vpop.f32.mrb[0].mxu0
        %v1857 = vadd.f32 0.0, %v1856
        %v1858 = vpop.f32.mrb[0].mxu0
        %v1859 = vpop.f32.mrb[0].mxu0
        %v1860 = vadd.f32 0.0, %v1859
        %v1861 = vpop.f32.mrb[0].mxu0
        %1862 = vmatprep.mubr.bf16.mxu0 0
        %1863 = vmatmul.mubr.bf16.gmra.mrb[0].mxu0 %v1763
        %v1864 = vpop.f32.mrb[0].mxu0
        %v1865 = vadd.f32 0.0, %v1864
        %v1866 = vpop.f32.mrb[0].mxu0
        %v1867 = vpop.f32.mrb[0].mxu0
        %v1868 = vadd.f32 0.0, %v1867
        %v1869 = vpop.f32.mrb[0].mxu0
        %1870 = vmatprep.mubr.bf16.mxu0 0
        %1871 = vmatmul.mubr.bf16.gmra.mrb[0].mxu0 %v1766
        %v1872 = vpop.f32.mrb[0].mxu0
        %v1873 = vadd.f32 0.0, %v1872
        %v1874 = vpop.f32.mrb[0].mxu0
        %v1875 = vpop.f32.mrb[0].mxu0
        %v1876 = vadd.f32 0.0, %v1875
        %v1877 = vpop.f32.mrb[0].mxu0
        %1878 = vmatprep.mubr.bf16.mxu0 0
        %1879 = vmatmul.mubr.bf16.gmra.mrb[0].mxu0 %v1769
        %v1880 = vpop.f32.mrb[0].mxu0
        %v1881 = vadd.f32 0.0, %v1880
        %v1882 = vpop.f32.mrb[0].mxu0
        %v1883 = vpop.f32.mrb[0].mxu0
        %v1884 = vadd.f32 0.0, %v1883
        %v1885 = vpop.f32.mrb[0].mxu0
        %1886 = vmatprep.mubr.bf16.mxu0 0
        %1887 = vmatmul.mubr.bf16.gmra.mrb[0].mxu0 %v1772
        %v1888 = vpop.f32.mrb[0].mxu0
        %v1889 = vadd.f32 0.0, %v1888
        %v1890 = vpop.f32.mrb[0].mxu0
        %v1891 = vpop.f32.mrb[0].mxu0
        %v1892 = vadd.f32 0.0, %v1891
        %v1893 = vpop.f32.mrb[0].mxu0
        %1894 = vmatprep.mubr.bf16.mxu0 0
        %1895 = vmatmul.mubr.bf16.gmra.mrb[0].mxu0 %v1775
        %v1896 = vpop.f32.mrb[0].mxu0
        %v1897 = vadd.f32 0.0, %v1896
        %v1898 = vpop.f32.mrb[0].mxu0
        %v1899 = vpop.f32.mrb[0].mxu0
        %v1900 = vadd.f32 0.0, %v1899
        %v1901 = vpop.f32.mrb[0].mxu0
        %1902 = vmatprep.mubr.bf16.mxu0 0
        %1903 = vmatmul.mubr.bf16.gmra.mrb[0].mxu0 %v1778
        %v1904 = vpop.f32.mrb[0].mxu0
        %v1905 = vadd.f32 0.0, %v1904
        %v1906 = vpop.f32.mrb[0].mxu0
        %v1907 = vpop.f32.mrb[0].mxu0
        %v1908 = vadd.f32 0.0, %v1907
        %v1909 = vpop.f32.mrb[0].mxu0
        %1910 = vmatprep.mubr.bf16.mxu0 0
        %1911 = vmatmul.mubr.bf16.gmra.mrb[0].mxu0 %v1781
        %v1912 = vpop.f32.mrb[0].mxu0
        %v1913 = vadd.f32 0.0, %v1912
        %v1914 = vpop.f32.mrb[0].mxu0
        %v1915 = vpop.f32.mrb[0].mxu0
        %v1916 = vadd.f32 0.0, %v1915
        %v1917 = vpop.f32.mrb[0].mxu0
        %1918 = vmatprep.mubr.bf16.mxu0 0
        %1919 = vmatmul.mubr.bf16.gmra.mrb[0].mxu0 %v1784
        %v1920 = vpop.f32.mrb[0].mxu0
        %v1921 = vadd.f32 0.0, %v1920
        %v1922 = vpop.f32.mrb[0].mxu0
        %v1923 = vpop.f32.mrb[0].mxu0
        %v1924 = vadd.f32 0.0, %v1923
        %v1925 = vpop.f32.mrb[0].mxu0
        %1926 = vmatprep.mubr.bf16.mxu0 0
        %1927 = vmatmul.mubr.bf16.gmra.mrb[0].mxu0 %v1787
        %v1928 = vpop.f32.mrb[0].mxu0
        %v1929 = vadd.f32 0.0, %v1928
        %v1930 = vpop.f32.mrb[0].mxu0
        %v1931 = vpop.f32.mrb[0].mxu0
        %v1932 = vadd.f32 0.0, %v1931
        %v1933 = vpop.f32.mrb[0].mxu0
        %1934 = vmatprep.mubr.bf16.mxu0 0
        %1935 = vmatmul.mubr.bf16.gmra.mrb[0].mxu0 %v1790
        %v1936 = vpop.f32.mrb[0].mxu0
        %v1937 = vadd.f32 0.0, %v1936
        %v1938 = vpop.f32.mrb[0].mxu0
        %v1939 = vpop.f32.mrb[0].mxu0
        %v1940 = vadd.f32 0.0, %v1939
        %v1941 = vpop.f32.mrb[0].mxu0
        %1942 = vmatprep.mubr.bf16.mxu0 0
        %1943 = vmatmul.mubr.bf16.gmra.mrb[0].mxu0 %v1793
        %v1944 = vpop.f32.mrb[0].mxu0
        %v1945 = vadd.f32 0.0, %v1944
        %v1946 = vpop.f32.mrb[0].mxu0
        %v1947 = vpop.f32.mrb[0].mxu0
        %v1948 = vadd.f32 0.0, %v1947
        %v1949 = vpop.f32.mrb[0].mxu0
        %1950 = vmatprep.mubr.bf16.mxu0 0
        %1951 = vmatmul.mubr.bf16.gmra.mrb[0].mxu0 %v1796
        %v1952 = vpop.f32.mrb[0].mxu0
        %v1953 = vadd.f32 0.0, %v1952
        %v1954 = vpop.f32.mrb[0].mxu0
        %v1955 = vpop.f32.mrb[0].mxu0
        %v1956 = vadd.f32 0.0, %v1955
        %v1957 = vpop.f32.mrb[0].mxu0
        %1958 = vdwg.mxu0
        %v1959 = vsub.f32 %v1624, %v1388
        %v1960 = vsub.f32 %v1627, %v1389
        %v1961 = vsub.f32 %v1632, %v1390
        %v1962 = vsub.f32 %v1635, %v1391
        %v1963 = vsub.f32 %v1640, %v1388
        %v1964 = vsub.f32 %v1643, %v1389
        %v1965 = vsub.f32 %v1648, %v1390
        %v1966 = vsub.f32 %v1651, %v1391
        %v1967 = vsub.f32 %v1656, %v1388
        %v1968 = vsub.f32 %v1659, %v1389
        %v1969 = vsub.f32 %v1664, %v1390
        %v1970 = vsub.f32 %v1667, %v1391
        %v1971 = vsub.f32 %v1672, %v1388
        %v1972 = vsub.f32 %v1675, %v1389
        %v1973 = vsub.f32 %v1680, %v1390
        %v1974 = vsub.f32 %v1683, %v1391
        %v1975 = vsub.f32 %v1688, %v1388
        %v1976 = vsub.f32 %v1691, %v1389
        %v1977 = vsub.f32 %v1696, %v1390
        %v1978 = vsub.f32 %v1699, %v1391
        %v1979 = vsub.f32 %v1704, %v1388
        %v1980 = vsub.f32 %v1707, %v1389
        %v1981 = vsub.f32 %v1712, %v1390
        %v1982 = vsub.f32 %v1715, %v1391
        %v1983 = vsub.f32 %v1720, %v1388
        %v1984 = vsub.f32 %v1723, %v1389
        %v1985 = vsub.f32 %v1728, %v1390
        %v1986 = vsub.f32 %v1731, %v1391
        %v1987 = vsub.f32 %v1736, %v1388
        %v1988 = vsub.f32 %v1739, %v1389
        %v1989 = vsub.f32 %v1744, %v1390
        %v1990 = vsub.f32 %v1747, %v1391
        %v1991 = vsub.f32 %v1833, %v1392
        %v1992 = vsub.f32 %v1836, %v1393
        %v1993 = vsub.f32 %v1841, %v1394
        %v1994 = vsub.f32 %v1844, %v1395
        %v1995 = vsub.f32 %v1849, %v1392
        %v1996 = vsub.f32 %v1852, %v1393
        %v1997 = vsub.f32 %v1857, %v1394
        %v1998 = vsub.f32 %v1860, %v1395
        %v1999 = vsub.f32 %v1865, %v1392
        %v2000 = vsub.f32 %v1868, %v1393
        %v2001 = vsub.f32 %v1873, %v1394
        %v2002 = vsub.f32 %v1876, %v1395
        %v2003 = vsub.f32 %v1881, %v1392
        %v2004 = vsub.f32 %v1884, %v1393
        %v2005 = vsub.f32 %v1889, %v1394
        %v2006 = vsub.f32 %v1892, %v1395
        %v2007 = vsub.f32 %v1897, %v1392
        %v2008 = vsub.f32 %v1900, %v1393
        %v2009 = vsub.f32 %v1905, %v1394
        %v2010 = vsub.f32 %v1908, %v1395
        %v2011 = vsub.f32 %v1913, %v1392
        %v2012 = vsub.f32 %v1916, %v1393
        %v2013 = vsub.f32 %v1921, %v1394
        %v2014 = vsub.f32 %v1924, %v1395
        %v2015 = vsub.f32 %v1929, %v1392
        %v2016 = vsub.f32 %v1932, %v1393
        %v2017 = vsub.f32 %v1937, %v1394
        %v2018 = vsub.f32 %v1940, %v1395
        %v2019 = vsub.f32 %v1945, %v1392
        %v2020 = vsub.f32 %v1948, %v1393
        %v2021 = vsub.f32 %v1953, %v1394
        %v2022 = vsub.f32 %v1956, %v1395
        %v2023 = vld [vmem:[%s5] sm:$0x1]
        %v2024 = vld [vmem:[%s6] sm:$0x1]
        %v2025 = vadd.f32 %v1959, %v1960
        %v2026 = vadd.f32 %v2025, %v1961
        %v2027 = vadd.f32 %v2026, %v1962
        %v2028 = vadd.f32 %v2027, %v1963
        %v2029 = vadd.f32 %v2028, %v1964
        %v2030 = vadd.f32 %v2029, %v1965
        %v2031 = vadd.f32 %v2030, %v1966
        %v2032 = vadd.f32 %v2031, %v1967
        %v2033 = vadd.f32 %v2032, %v1968
        %v2034 = vadd.f32 %v2033, %v1969
        %v2035 = vadd.f32 %v2034, %v1970
        %v2036 = vadd.f32 %v2035, %v1971
        %v2037 = vadd.f32 %v2036, %v1972
        %v2038 = vadd.f32 %v2037, %v1973
        %v2039 = vadd.f32 %v2038, %v1974
        %v2040 = vadd.f32 %v2039, %v1975
        %v2041 = vadd.f32 %v2040, %v1976
        %v2042 = vadd.f32 %v2041, %v1977
        %v2043 = vadd.f32 %v2042, %v1978
        %v2044 = vadd.f32 %v2043, %v1979
        %v2045 = vadd.f32 %v2044, %v1980
        %v2046 = vadd.f32 %v2045, %v1981
        %v2047 = vadd.f32 %v2046, %v1982
        %v2048 = vadd.f32 %v2047, %v1983
        %v2049 = vadd.f32 %v2048, %v1984
        %v2050 = vadd.f32 %v2049, %v1985
        %v2051 = vadd.f32 %v2050, %v1986
        %v2052 = vadd.f32 %v2051, %v1987
        %v2053 = vadd.f32 %v2052, %v1988
        %v2054 = vadd.f32 %v2053, %v1989
        %v2055 = vadd.f32 %v2054, %v1990
        %v2056 = vrot.slane %v2055, 4
        %v2057 = vadd.f32 %v2055, %v2056
        %v2058 = vrot.slane %v2057, 2
        %v2059 = vadd.f32 %v2057, %v2058
        %v2060 = vrot.slane %v2059, 1
        %v2061 = vadd.f32 %v2059, %v2060
        %v2062 = vadd.f32 %v1991, %v1992
        %v2063 = vadd.f32 %v2062, %v1993
        %v2064 = vadd.f32 %v2063, %v1994
        %v2065 = vadd.f32 %v2064, %v1995
        %v2066 = vadd.f32 %v2065, %v1996
        %v2067 = vadd.f32 %v2066, %v1997
        %v2068 = vadd.f32 %v2067, %v1998
        %v2069 = vadd.f32 %v2068, %v1999
        %v2070 = vadd.f32 %v2069, %v2000
        %v2071 = vadd.f32 %v2070, %v2001
        %v2072 = vadd.f32 %v2071, %v2002
        %v2073 = vadd.f32 %v2072, %v2003
        %v2074 = vadd.f32 %v2073, %v2004
        %v2075 = vadd.f32 %v2074, %v2005
        %v2076 = vadd.f32 %v2075, %v2006
        %v2077 = vadd.f32 %v2076, %v2007
        %v2078 = vadd.f32 %v2077, %v2008
        %v2079 = vadd.f32 %v2078, %v2009
        %v2080 = vadd.f32 %v2079, %v2010
        %v2081 = vadd.f32 %v2080, %v2011
        %v2082 = vadd.f32 %v2081, %v2012
        %v2083 = vadd.f32 %v2082, %v2013
        %v2084 = vadd.f32 %v2083, %v2014
        %v2085 = vadd.f32 %v2084, %v2015
        %v2086 = vadd.f32 %v2085, %v2016
        %v2087 = vadd.f32 %v2086, %v2017
        %v2088 = vadd.f32 %v2087, %v2018
        %v2089 = vadd.f32 %v2088, %v2019
        %v2090 = vadd.f32 %v2089, %v2020
        %v2091 = vadd.f32 %v2090, %v2021
        %v2092 = vadd.f32 %v2091, %v2022
        %v2093 = vrot.slane %v2092, 4
        %v2094 = vadd.f32 %v2092, %v2093
        %v2095 = vrot.slane %v2094, 2
        %v2096 = vadd.f32 %v2094, %v2095
        %v2097 = vrot.slane %v2096, 1
        %v2098 = vadd.f32 %v2096, %v2097
        %v2099 = vrcp.pop 256.0
        %v2100 = vmul.f32 %v2061, %v2099
        %v2101 = vmul.f32 %v2098, %v2099
        %v2102 = vmul.f32 %v1959, %v1959
        %v2103 = vmul.f32 %v1960, %v1960
        %v2104 = vmul.f32 %v1961, %v1961
        %v2105 = vmul.f32 %v1962, %v1962
        %v2106 = vmul.f32 %v1963, %v1963
        %v2107 = vmul.f32 %v1964, %v1964
        %v2108 = vmul.f32 %v1965, %v1965
        %v2109 = vmul.f32 %v1966, %v1966
        %v2110 = vmul.f32 %v1967, %v1967
        %v2111 = vmul.f32 %v1968, %v1968
        %v2112 = vmul.f32 %v1969, %v1969
        %v2113 = vmul.f32 %v1970, %v1970
        %v2114 = vmul.f32 %v1971, %v1971
        %v2115 = vmul.f32 %v1972, %v1972
        %v2116 = vmul.f32 %v1973, %v1973
        %v2117 = vmul.f32 %v1974, %v1974
        %v2118 = vmul.f32 %v1975, %v1975
        %v2119 = vmul.f32 %v1976, %v1976
        %v2120 = vmul.f32 %v1977, %v1977
        %v2121 = vmul.f32 %v1978, %v1978
        %v2122 = vmul.f32 %v1979, %v1979
        %v2123 = vmul.f32 %v1980, %v1980
        %v2124 = vmul.f32 %v1981, %v1981
        %v2125 = vmul.f32 %v1982, %v1982
        %v2126 = vmul.f32 %v1983, %v1983
        %v2127 = vmul.f32 %v1984, %v1984
        %v2128 = vmul.f32 %v1985, %v1985
        %v2129 = vmul.f32 %v1986, %v1986
        %v2130 = vmul.f32 %v1987, %v1987
        %v2131 = vmul.f32 %v1988, %v1988
        %v2132 = vmul.f32 %v1989, %v1989
        %v2133 = vmul.f32 %v1990, %v1990
        %v2134 = vmul.f32 %v1991, %v1991
        %v2135 = vmul.f32 %v1992, %v1992
        %v2136 = vmul.f32 %v1993, %v1993
        %v2137 = vmul.f32 %v1994, %v1994
        %v2138 = vmul.f32 %v1995, %v1995
        %v2139 = vmul.f32 %v1996, %v1996
        %v2140 = vmul.f32 %v1997, %v1997
        %v2141 = vmul.f32 %v1998, %v1998
        %v2142 = vmul.f32 %v1999, %v1999
        %v2143 = vmul.f32 %v2000, %v2000
        %v2144 = vmul.f32 %v2001, %v2001
        %v2145 = vmul.f32 %v2002, %v2002
        %v2146 = vmul.f32 %v2003, %v2003
        %v2147 = vmul.f32 %v2004, %v2004
        %v2148 = vmul.f32 %v2005, %v2005
        %v2149 = vmul.f32 %v2006, %v2006
        %v2150 = vmul.f32 %v2007, %v2007
        %v2151 = vmul.f32 %v2008, %v2008
        %v2152 = vmul.f32 %v2009, %v2009
        %v2153 = vmul.f32 %v2010, %v2010
        %v2154 = vmul.f32 %v2011, %v2011
        %v2155 = vmul.f32 %v2012, %v2012
        %v2156 = vmul.f32 %v2013, %v2013
        %v2157 = vmul.f32 %v2014, %v2014
        %v2158 = vmul.f32 %v2015, %v2015
        %v2159 = vmul.f32 %v2016, %v2016
        %v2160 = vmul.f32 %v2017, %v2017
        %v2161 = vmul.f32 %v2018, %v2018
        %v2162 = vmul.f32 %v2019, %v2019
        %v2163 = vmul.f32 %v2020, %v2020
        %v2164 = vmul.f32 %v2021, %v2021
        %v2165 = vmul.f32 %v2022, %v2022
        %v2166 = vadd.f32 %v2102, %v2103
        %v2167 = vadd.f32 %v2166, %v2104
        %v2168 = vadd.f32 %v2167, %v2105
        %v2169 = vadd.f32 %v2168, %v2106
        %v2170 = vadd.f32 %v2169, %v2107
        %v2171 = vadd.f32 %v2170, %v2108
        %v2172 = vadd.f32 %v2171, %v2109
        %v2173 = vadd.f32 %v2172, %v2110
        %v2174 = vadd.f32 %v2173, %v2111
        %v2175 = vadd.f32 %v2174, %v2112
        %v2176 = vadd.f32 %v2175, %v2113
        %v2177 = vadd.f32 %v2176, %v2114
        %v2178 = vadd.f32 %v2177, %v2115
        %v2179 = vadd.f32 %v2178, %v2116
        %v2180 = vadd.f32 %v2179, %v2117
        %v2181 = vadd.f32 %v2180, %v2118
        %v2182 = vadd.f32 %v2181, %v2119
        %v2183 = vadd.f32 %v2182, %v2120
        %v2184 = vadd.f32 %v2183, %v2121
        %v2185 = vadd.f32 %v2184, %v2122
        %v2186 = vadd.f32 %v2185, %v2123
        %v2187 = vadd.f32 %v2186, %v2124
        %v2188 = vadd.f32 %v2187, %v2125
        %v2189 = vadd.f32 %v2188, %v2126
        %v2190 = vadd.f32 %v2189, %v2127
        %v2191 = vadd.f32 %v2190, %v2128
        %v2192 = vadd.f32 %v2191, %v2129
        %v2193 = vadd.f32 %v2192, %v2130
        %v2194 = vadd.f32 %v2193, %v2131
        %v2195 = vadd.f32 %v2194, %v2132
        %v2196 = vadd.f32 %v2195, %v2133
        %v2197 = vrot.slane %v2196, 4
        %v2198 = vadd.f32 %v2196, %v2197
        %v2199 = vrot.slane %v2198, 2
        %v2200 = vadd.f32 %v2198, %v2199
        %v2201 = vrot.slane %v2200, 1
        %v2202 = vadd.f32 %v2200, %v2201
        %v2203 = vadd.f32 %v2134, %v2135
        %v2204 = vadd.f32 %v2203, %v2136
        %v2205 = vadd.f32 %v2204, %v2137
        %v2206 = vadd.f32 %v2205, %v2138
        %v2207 = vadd.f32 %v2206, %v2139
        %v2208 = vadd.f32 %v2207, %v2140
        %v2209 = vadd.f32 %v2208, %v2141
        %v2210 = vadd.f32 %v2209, %v2142
        %v2211 = vadd.f32 %v2210, %v2143
        %v2212 = vadd.f32 %v2211, %v2144
        %v2213 = vadd.f32 %v2212, %v2145
        %v2214 = vadd.f32 %v2213, %v2146
        %v2215 = vadd.f32 %v2214, %v2147
        %v2216 = vadd.f32 %v2215, %v2148
        %v2217 = vadd.f32 %v2216, %v2149
        %v2218 = vadd.f32 %v2217, %v2150
        %v2219 = vadd.f32 %v2218, %v2151
        %v2220 = vadd.f32 %v2219, %v2152
        %v2221 = vadd.f32 %v2220, %v2153
        %v2222 = vadd.f32 %v2221, %v2154
        %v2223 = vadd.f32 %v2222, %v2155
        %v2224 = vadd.f32 %v2223, %v2156
        %v2225 = vadd.f32 %v2224, %v2157
        %v2226 = vadd.f32 %v2225, %v2158
        %v2227 = vadd.f32 %v2226, %v2159
        %v2228 = vadd.f32 %v2227, %v2160
        %v2229 = vadd.f32 %v2228, %v2161
        %v2230 = vadd.f32 %v2229, %v2162
        %v2231 = vadd.f32 %v2230, %v2163
        %v2232 = vadd.f32 %v2231, %v2164
        %v2233 = vadd.f32 %v2232, %v2165
        %v2234 = vrot.slane %v2233, 4
        %v2235 = vadd.f32 %v2233, %v2234
        %v2236 = vrot.slane %v2235, 2
        %v2237 = vadd.f32 %v2235, %v2236
        %v2238 = vrot.slane %v2237, 1
        %v2239 = vadd.f32 %v2237, %v2238
        %v2240 = vmul.f32 %v2202, %v2099
        %v2241 = vmul.f32 %v2239, %v2099
        %v2242 = vmul.f32 %v2100, %v2100
        %v2243 = vmul.f32 %v2101, %v2101
        %v2244 = vsub.f32 %v2240, %v2242
        %v2245 = vsub.f32 %v2241, %v2243
        %v2246 = vmax.f32 %v2244, 0.0
        %v2247 = vmax.f32 %v2245, 0.0
        %v2248 = vadd.f32 %v2246, 1e-05
        %v2249 = vadd.f32 %v2247, 1e-05
        %v2250 = vrsqrt.pop %v2248
        %v2251 = vrsqrt.pop %v2249
        %v2252 = vmul.f32 %v2023, %v2250
        %v2253 = vmul.f32 %v2023, %v2251
        %v2254 = vmul.f32 %v2100, %v2252
        %v2255 = vmul.f32 %v2101, %v2253
        %v2256 = vsub.f32 %v2024, %v2254
        %v2257 = vsub.f32 %v2024, %v2255
        %v2260 = vlaneseq
        %v2261 = vshrl.u32 %v2260, 7
        %v2262 = vsub.s32 0, %v2261
        %v2263 = vrot.slane %v2252, %v2262
        %v2264 = vlaneseq
        %v2265 = vshrl.u32 %v2264, 7
        %v2266 = vsub.s32 0, %v2265
        %v2267 = vrot.slane %v2253, %v2266
        %v2270 = vmul.f32 %v1959, %v2263
        %v2271 = vmul.f32 %v1960, %v2263
        %v2272 = vmul.f32 %v1961, %v2263
        %v2273 = vmul.f32 %v1962, %v2263
        %v2274 = vmul.f32 %v1963, %v2263
        %v2275 = vmul.f32 %v1964, %v2263
        %v2276 = vmul.f32 %v1965, %v2263
        %v2277 = vmul.f32 %v1966, %v2263
        %v2278 = vmul.f32 %v1967, %v2263
        %v2279 = vmul.f32 %v1968, %v2263
        %v2280 = vmul.f32 %v1969, %v2263
        %v2281 = vmul.f32 %v1970, %v2263
        %v2282 = vmul.f32 %v1971, %v2263
        %v2283 = vmul.f32 %v1972, %v2263
        %v2284 = vmul.f32 %v1973, %v2263
        %v2285 = vmul.f32 %v1974, %v2263
        %v2286 = vmul.f32 %v1975, %v2263
        %v2287 = vmul.f32 %v1976, %v2263
        %v2288 = vmul.f32 %v1977, %v2263
        %v2289 = vmul.f32 %v1978, %v2263
        %v2290 = vmul.f32 %v1979, %v2263
        %v2291 = vmul.f32 %v1980, %v2263
        %v2292 = vmul.f32 %v1981, %v2263
        %v2293 = vmul.f32 %v1982, %v2263
        %v2294 = vmul.f32 %v1983, %v2263
        %v2295 = vmul.f32 %v1984, %v2263
        %v2296 = vmul.f32 %v1985, %v2263
        %v2297 = vmul.f32 %v1986, %v2263
        %v2298 = vmul.f32 %v1987, %v2263
        %v2299 = vmul.f32 %v1988, %v2263
        %v2300 = vmul.f32 %v1989, %v2263
        %v2301 = vmul.f32 %v1990, %v2263
        %v2302 = vmul.f32 %v1991, %v2267
        %v2303 = vmul.f32 %v1992, %v2267
        %v2304 = vmul.f32 %v1993, %v2267
        %v2305 = vmul.f32 %v1994, %v2267
        %v2306 = vmul.f32 %v1995, %v2267
        %v2307 = vmul.f32 %v1996, %v2267
        %v2308 = vmul.f32 %v1997, %v2267
        %v2309 = vmul.f32 %v1998, %v2267
        %v2310 = vmul.f32 %v1999, %v2267
        %v2311 = vmul.f32 %v2000, %v2267
        %v2312 = vmul.f32 %v2001, %v2267
        %v2313 = vmul.f32 %v2002, %v2267
        %v2314 = vmul.f32 %v2003, %v2267
        %v2315 = vmul.f32 %v2004, %v2267
        %v2316 = vmul.f32 %v2005, %v2267
        %v2317 = vmul.f32 %v2006, %v2267
        %v2318 = vmul.f32 %v2007, %v2267
        %v2319 = vmul.f32 %v2008, %v2267
        %v2320 = vmul.f32 %v2009, %v2267
        %v2321 = vmul.f32 %v2010, %v2267
        %v2322 = vmul.f32 %v2011, %v2267
        %v2323 = vmul.f32 %v2012, %v2267
        %v2324 = vmul.f32 %v2013, %v2267
        %v2325 = vmul.f32 %v2014, %v2267
        %v2326 = vmul.f32 %v2015, %v2267
        %v2327 = vmul.f32 %v2016, %v2267
        %v2328 = vmul.f32 %v2017, %v2267
        %v2329 = vmul.f32 %v2018, %v2267
        %v2330 = vmul.f32 %v2019, %v2267
        %v2331 = vmul.f32 %v2020, %v2267
        %v2332 = vmul.f32 %v2021, %v2267
        %v2333 = vmul.f32 %v2022, %v2267
        %v2336 = vlaneseq
        %v2337 = vshrl.u32 %v2336, 7
        %v2338 = vsub.s32 0, %v2337
        %v2339 = vrot.slane %v2256, %v2338
        %v2340 = vlaneseq
        %v2341 = vshrl.u32 %v2340, 7
        %v2342 = vsub.s32 0, %v2341
        %v2343 = vrot.slane %v2257, %v2342
        %v2346 = vadd.f32 %v2270, %v2339
        %v2347 = vadd.f32 %v2271, %v2339
        %v2348 = vadd.f32 %v2272, %v2339
        %v2349 = vadd.f32 %v2273, %v2339
        %v2350 = vadd.f32 %v2274, %v2339
        %v2351 = vadd.f32 %v2275, %v2339
        %v2352 = vadd.f32 %v2276, %v2339
        %v2353 = vadd.f32 %v2277, %v2339
        %v2354 = vadd.f32 %v2278, %v2339
        %v2355 = vadd.f32 %v2279, %v2339
        %v2356 = vadd.f32 %v2280, %v2339
        %v2357 = vadd.f32 %v2281, %v2339
        %v2358 = vadd.f32 %v2282, %v2339
        %v2359 = vadd.f32 %v2283, %v2339
        %v2360 = vadd.f32 %v2284, %v2339
        %v2361 = vadd.f32 %v2285, %v2339
        %v2362 = vadd.f32 %v2286, %v2339
        %v2363 = vadd.f32 %v2287, %v2339
        %v2364 = vadd.f32 %v2288, %v2339
        %v2365 = vadd.f32 %v2289, %v2339
        %v2366 = vadd.f32 %v2290, %v2339
        %v2367 = vadd.f32 %v2291, %v2339
        %v2368 = vadd.f32 %v2292, %v2339
        %v2369 = vadd.f32 %v2293, %v2339
        %v2370 = vadd.f32 %v2294, %v2339
        %v2371 = vadd.f32 %v2295, %v2339
        %v2372 = vadd.f32 %v2296, %v2339
        %v2373 = vadd.f32 %v2297, %v2339
        %v2374 = vadd.f32 %v2298, %v2339
        %v2375 = vadd.f32 %v2299, %v2339
        %v2376 = vadd.f32 %v2300, %v2339
        %v2377 = vadd.f32 %v2301, %v2339
        %v2378 = vadd.f32 %v2302, %v2343
        %v2379 = vadd.f32 %v2303, %v2343
        %v2380 = vadd.f32 %v2304, %v2343
        %v2381 = vadd.f32 %v2305, %v2343
        %v2382 = vadd.f32 %v2306, %v2343
        %v2383 = vadd.f32 %v2307, %v2343
        %v2384 = vadd.f32 %v2308, %v2343
        %v2385 = vadd.f32 %v2309, %v2343
        %v2386 = vadd.f32 %v2310, %v2343
        %v2387 = vadd.f32 %v2311, %v2343
        %v2388 = vadd.f32 %v2312, %v2343
        %v2389 = vadd.f32 %v2313, %v2343
        %v2390 = vadd.f32 %v2314, %v2343
        %v2391 = vadd.f32 %v2315, %v2343
        %v2392 = vadd.f32 %v2316, %v2343
        %v2393 = vadd.f32 %v2317, %v2343
        %v2394 = vadd.f32 %v2318, %v2343
        %v2395 = vadd.f32 %v2319, %v2343
        %v2396 = vadd.f32 %v2320, %v2343
        %v2397 = vadd.f32 %v2321, %v2343
        %v2398 = vadd.f32 %v2322, %v2343
        %v2399 = vadd.f32 %v2323, %v2343
        %v2400 = vadd.f32 %v2324, %v2343
        %v2401 = vadd.f32 %v2325, %v2343
        %v2402 = vadd.f32 %v2326, %v2343
        %v2403 = vadd.f32 %v2327, %v2343
        %v2404 = vadd.f32 %v2328, %v2343
        %v2405 = vadd.f32 %v2329, %v2343
        %v2406 = vadd.f32 %v2330, %v2343
        %v2407 = vadd.f32 %v2331, %v2343
        %v2408 = vadd.f32 %v2332, %v2343
        %v2409 = vadd.f32 %v2333, %v2343
        %v2410 = vmax.f32 %v2346, 0.0
        %v2411 = vmax.f32 %v2347, 0.0
        %v2412 = vmax.f32 %v2348, 0.0
        %v2413 = vmax.f32 %v2349, 0.0
        %v2414 = vmax.f32 %v2350, 0.0
        %v2415 = vmax.f32 %v2351, 0.0
        %v2416 = vmax.f32 %v2352, 0.0
        %v2417 = vmax.f32 %v2353, 0.0
        %v2418 = vmax.f32 %v2354, 0.0
        %v2419 = vmax.f32 %v2355, 0.0
        %v2420 = vmax.f32 %v2356, 0.0
        %v2421 = vmax.f32 %v2357, 0.0
        %v2422 = vmax.f32 %v2358, 0.0
        %v2423 = vmax.f32 %v2359, 0.0
        %v2424 = vmax.f32 %v2360, 0.0
        %v2425 = vmax.f32 %v2361, 0.0
        %v2426 = vmax.f32 %v2362, 0.0
        %v2427 = vmax.f32 %v2363, 0.0
        %v2428 = vmax.f32 %v2364, 0.0
        %v2429 = vmax.f32 %v2365, 0.0
        %v2430 = vmax.f32 %v2366, 0.0
        %v2431 = vmax.f32 %v2367, 0.0
        %v2432 = vmax.f32 %v2368, 0.0
        %v2433 = vmax.f32 %v2369, 0.0
        %v2434 = vmax.f32 %v2370, 0.0
        %v2435 = vmax.f32 %v2371, 0.0
        %v2436 = vmax.f32 %v2372, 0.0
        %v2437 = vmax.f32 %v2373, 0.0
        %v2438 = vmax.f32 %v2374, 0.0
        %v2439 = vmax.f32 %v2375, 0.0
        %v2440 = vmax.f32 %v2376, 0.0
        %v2441 = vmax.f32 %v2377, 0.0
        %v2442 = vmax.f32 %v2378, 0.0
        %v2443 = vmax.f32 %v2379, 0.0
        %v2444 = vmax.f32 %v2380, 0.0
        %v2445 = vmax.f32 %v2381, 0.0
        %v2446 = vmax.f32 %v2382, 0.0
        %v2447 = vmax.f32 %v2383, 0.0
        %v2448 = vmax.f32 %v2384, 0.0
        %v2449 = vmax.f32 %v2385, 0.0
        %v2450 = vmax.f32 %v2386, 0.0
        %v2451 = vmax.f32 %v2387, 0.0
        %v2452 = vmax.f32 %v2388, 0.0
        %v2453 = vmax.f32 %v2389, 0.0
        %v2454 = vmax.f32 %v2390, 0.0
        %v2455 = vmax.f32 %v2391, 0.0
        %v2456 = vmax.f32 %v2392, 0.0
        %v2457 = vmax.f32 %v2393, 0.0
        %v2458 = vmax.f32 %v2394, 0.0
        %v2459 = vmax.f32 %v2395, 0.0
        %v2460 = vmax.f32 %v2396, 0.0
        %v2461 = vmax.f32 %v2397, 0.0
        %v2462 = vmax.f32 %v2398, 0.0
        %v2463 = vmax.f32 %v2399, 0.0
        %v2464 = vmax.f32 %v2400, 0.0
        %v2465 = vmax.f32 %v2401, 0.0
        %v2466 = vmax.f32 %v2402, 0.0
        %v2467 = vmax.f32 %v2403, 0.0
        %v2468 = vmax.f32 %v2404, 0.0
        %v2469 = vmax.f32 %v2405, 0.0
        %v2470 = vmax.f32 %v2406, 0.0
        %v2471 = vmax.f32 %v2407, 0.0
        %v2472 = vmax.f32 %v2408, 0.0
        %v2473 = vmax.f32 %v2409, 0.0
        %v2474 = vpack.c.bf16 %v2411, %v2410
        %v2475 = vpack.c.bf16 %v2413, %v2412
        %v2476 = vpack.c.bf16 %v2415, %v2414
        %v2477 = vpack.c.bf16 %v2417, %v2416
        %v2478 = vpack.c.bf16 %v2419, %v2418
        %v2479 = vpack.c.bf16 %v2421, %v2420
        %v2480 = vpack.c.bf16 %v2423, %v2422
        %v2481 = vpack.c.bf16 %v2425, %v2424
        %v2482 = vpack.c.bf16 %v2427, %v2426
        %v2483 = vpack.c.bf16 %v2429, %v2428
        %v2484 = vpack.c.bf16 %v2431, %v2430
        %v2485 = vpack.c.bf16 %v2433, %v2432
        %v2486 = vpack.c.bf16 %v2435, %v2434
        %v2487 = vpack.c.bf16 %v2437, %v2436
        %v2488 = vpack.c.bf16 %v2439, %v2438
        %v2489 = vpack.c.bf16 %v2441, %v2440
        %v2490 = vpack.c.bf16 %v2443, %v2442
        %v2491 = vpack.c.bf16 %v2445, %v2444
        %v2492 = vpack.c.bf16 %v2447, %v2446
        %v2493 = vpack.c.bf16 %v2449, %v2448
        %v2494 = vpack.c.bf16 %v2451, %v2450
        %v2495 = vpack.c.bf16 %v2453, %v2452
        %v2496 = vpack.c.bf16 %v2455, %v2454
        %v2497 = vpack.c.bf16 %v2457, %v2456
        %v2498 = vpack.c.bf16 %v2459, %v2458
        %v2499 = vpack.c.bf16 %v2461, %v2460
        %v2500 = vpack.c.bf16 %v2463, %v2462
        %v2501 = vpack.c.bf16 %v2465, %v2464
        %v2502 = vpack.c.bf16 %v2467, %v2466
        %v2503 = vpack.c.bf16 %v2469, %v2468
        %v2504 = vpack.c.bf16 %v2471, %v2470
        %v2505 = vpack.c.bf16 %v2473, %v2472
        %v2506 = vld [vmem:[%s7] sm:$0xf]
        %v2507 = vld [vmem:[%s7 + $0x4] sm:$0xf]
        %v2508 = vld [vmem:[%s7 + $0x8] sm:$0xf]
        %v2509 = vld [vmem:[%s7 + $0xc] sm:$0xf]
        %v2510 = vld [vmem:[%s7 + $0x10] sm:$0xf]
        %v2511 = vld [vmem:[%s7 + $0x14] sm:$0xf]
        %v2512 = vld [vmem:[%s7 + $0x18] sm:$0xf]
        %v2513 = vld [vmem:[%s7 + $0x1c] sm:$0xf]
        %v2514 = vld [vmem:[%s7 + $0x20] sm:$0xf]
        %v2515 = vld [vmem:[%s7 + $0x24] sm:$0xf]
        %v2516 = vld [vmem:[%s7 + $0x28] sm:$0xf]
        %v2517 = vld [vmem:[%s7 + $0x2c] sm:$0xf]
        %v2518 = vld [vmem:[%s7 + $0x30] sm:$0xf]
        %v2519 = vld [vmem:[%s7 + $0x34] sm:$0xf]
        %v2520 = vld [vmem:[%s7 + $0x38] sm:$0xf]
        %v2521 = vld [vmem:[%s7 + $0x3c] sm:$0xf]
        %v2538 = vunpack.c.l.b16 %v2506
        %v2539 = vunpack.c.l.b16 %v2507
        %v2540 = vunpack.c.l.b16 %v2508
        %v2541 = vunpack.c.l.b16 %v2509
        %v2542 = vunpack.c.l.b16 %v2510
        %v2543 = vunpack.c.l.b16 %v2511
        %v2544 = vunpack.c.l.b16 %v2512
        %v2545 = vunpack.c.l.b16 %v2513
        %v2546 = vunpack.c.l.b16 %v2514
        %v2547 = vunpack.c.l.b16 %v2515
        %v2548 = vunpack.c.l.b16 %v2516
        %v2549 = vunpack.c.l.b16 %v2517
        %v2550 = vunpack.c.l.b16 %v2518
        %v2551 = vunpack.c.l.b16 %v2519
        %v2552 = vunpack.c.l.b16 %v2520
        %v2553 = vunpack.c.l.b16 %v2521
        %v2554 = vpack.c.b16 %v2539, %v2538
        %v2555 = vpack.c.b16 %v2541, %v2540
        %v2556 = vpack.c.b16 %v2543, %v2542
        %v2557 = vpack.c.b16 %v2545, %v2544
        %v2558 = vpack.c.b16 %v2547, %v2546
        %v2559 = vpack.c.b16 %v2549, %v2548
        %v2560 = vpack.c.b16 %v2551, %v2550
        %v2561 = vpack.c.b16 %v2553, %v2552
        %2570 = vmatprep.subr.bf16.mxu0 0
        %2571 = vmatpush1.bf16.msra.mxu0 %v2554
        %2572 = vmatprep.subr.bf16.mxu0 0
        %2573 = vmatpush1.bf16.msra.mxu0 %v2555
        %2574 = vmatprep.subr.bf16.mxu0 0
        %2575 = vmatpush1.bf16.msra.mxu0 %v2556
        %2576 = vmatprep.subr.bf16.mxu0 0
        %2577 = vmatpush1.bf16.msra.mxu0 %v2557
        %2578 = vmatprep.subr.bf16.mxu0 0
        %2579 = vmatpush1.bf16.msra.mxu0 %v2558
        %2580 = vmatprep.subr.bf16.mxu0 0
        %2581 = vmatpush1.bf16.msra.mxu0 %v2559
        %2582 = vmatprep.subr.bf16.mxu0 0
        %2583 = vmatpush1.bf16.msra.mxu0 %v2560
        %2584 = vmatprep.subr.bf16.mxu0 0
        %2585 = vmatpush1.bf16.msra.mxu0 %v2561
        %2586 = vmatprep.subr.bf16.mxu0 0
        %2587 = vmatpush1.bf16.msra.mxu0 0
        %2588 = vmatprep.subr.bf16.mxu0 0
        %2589 = vmatpush1.bf16.msra.mxu0 0
        %2590 = vmatprep.subr.bf16.mxu0 0
        %2591 = vmatpush1.bf16.msra.mxu0 0
        %2592 = vmatprep.subr.bf16.mxu0 0
        %2593 = vmatpush1.bf16.msra.mxu0 0
        %2594 = vmatprep.subr.bf16.mxu0 0
        %2595 = vmatpush1.bf16.msra.mxu0 0
        %2596 = vmatprep.subr.bf16.mxu0 0
        %2597 = vmatpush1.bf16.msra.mxu0 0
        %2598 = vmatprep.subr.bf16.mxu0 0
        %2599 = vmatpush1.bf16.msra.mxu0 0
        %2600 = vmatprep.subr.bf16.mxu0 0
        %2601 = vmatpush1.bf16.msra.mxu0 0
        %2602 = vmatprep.mubr.bf16.mxu0 0
        %2603 = vmatmul.mubr.bf16.gmra.mrb[0].mxu0 %v2474
        %v2604 = vpop.f32.mrb[0].mxu0
        %v2605 = vadd.f32 0.0, %v2604
        %v2606 = vpop.f32.mrb[0].mxu0
        %v2607 = vpop.f32.mrb[0].mxu0
        %v2608 = vadd.f32 0.0, %v2607
        %v2609 = vpop.f32.mrb[0].mxu0
        %2610 = vmatprep.mubr.bf16.mxu0 0
        %2611 = vmatmul.mubr.bf16.gmra.mrb[0].mxu0 %v2475
        %v2612 = vpop.f32.mrb[0].mxu0
        %v2613 = vadd.f32 0.0, %v2612
        %v2614 = vpop.f32.mrb[0].mxu0
        %v2615 = vpop.f32.mrb[0].mxu0
        %v2616 = vadd.f32 0.0, %v2615
        %v2617 = vpop.f32.mrb[0].mxu0
        %2618 = vmatprep.mubr.bf16.mxu0 0
        %2619 = vmatmul.mubr.bf16.gmra.mrb[0].mxu0 %v2476
        %v2620 = vpop.f32.mrb[0].mxu0
        %v2621 = vadd.f32 0.0, %v2620
        %v2622 = vpop.f32.mrb[0].mxu0
        %v2623 = vpop.f32.mrb[0].mxu0
        %v2624 = vadd.f32 0.0, %v2623
        %v2625 = vpop.f32.mrb[0].mxu0
        %2626 = vmatprep.mubr.bf16.mxu0 0
        %2627 = vmatmul.mubr.bf16.gmra.mrb[0].mxu0 %v2477
        %v2628 = vpop.f32.mrb[0].mxu0
        %v2629 = vadd.f32 0.0, %v2628
        %v2630 = vpop.f32.mrb[0].mxu0
        %v2631 = vpop.f32.mrb[0].mxu0
        %v2632 = vadd.f32 0.0, %v2631
        %v2633 = vpop.f32.mrb[0].mxu0
        %2634 = vmatprep.mubr.bf16.mxu0 0
        %2635 = vmatmul.mubr.bf16.gmra.mrb[0].mxu0 %v2478
        %v2636 = vpop.f32.mrb[0].mxu0
        %v2637 = vadd.f32 0.0, %v2636
        %v2638 = vpop.f32.mrb[0].mxu0
        %v2639 = vpop.f32.mrb[0].mxu0
        %v2640 = vadd.f32 0.0, %v2639
        %v2641 = vpop.f32.mrb[0].mxu0
        %2642 = vmatprep.mubr.bf16.mxu0 0
        %2643 = vmatmul.mubr.bf16.gmra.mrb[0].mxu0 %v2479
        %v2644 = vpop.f32.mrb[0].mxu0
        %v2645 = vadd.f32 0.0, %v2644
        %v2646 = vpop.f32.mrb[0].mxu0
        %v2647 = vpop.f32.mrb[0].mxu0
        %v2648 = vadd.f32 0.0, %v2647
        %v2649 = vpop.f32.mrb[0].mxu0
        %2650 = vmatprep.mubr.bf16.mxu0 0
        %2651 = vmatmul.mubr.bf16.gmra.mrb[0].mxu0 %v2480
        %v2652 = vpop.f32.mrb[0].mxu0
        %v2653 = vadd.f32 0.0, %v2652
        %v2654 = vpop.f32.mrb[0].mxu0
        %v2655 = vpop.f32.mrb[0].mxu0
        %v2656 = vadd.f32 0.0, %v2655
        %v2657 = vpop.f32.mrb[0].mxu0
        %2658 = vmatprep.mubr.bf16.mxu0 0
        %2659 = vmatmul.mubr.bf16.gmra.mrb[0].mxu0 %v2481
        %v2660 = vpop.f32.mrb[0].mxu0
        %v2661 = vadd.f32 0.0, %v2660
        %v2662 = vpop.f32.mrb[0].mxu0
        %v2663 = vpop.f32.mrb[0].mxu0
        %v2664 = vadd.f32 0.0, %v2663
        %v2665 = vpop.f32.mrb[0].mxu0
        %2666 = vmatprep.mubr.bf16.mxu0 0
        %2667 = vmatmul.mubr.bf16.gmra.mrb[0].mxu0 %v2482
        %v2668 = vpop.f32.mrb[0].mxu0
        %v2669 = vadd.f32 0.0, %v2668
        %v2670 = vpop.f32.mrb[0].mxu0
        %v2671 = vpop.f32.mrb[0].mxu0
        %v2672 = vadd.f32 0.0, %v2671
        %v2673 = vpop.f32.mrb[0].mxu0
        %2674 = vmatprep.mubr.bf16.mxu0 0
        %2675 = vmatmul.mubr.bf16.gmra.mrb[0].mxu0 %v2483
        %v2676 = vpop.f32.mrb[0].mxu0
        %v2677 = vadd.f32 0.0, %v2676
        %v2678 = vpop.f32.mrb[0].mxu0
        %v2679 = vpop.f32.mrb[0].mxu0
        %v2680 = vadd.f32 0.0, %v2679
        %v2681 = vpop.f32.mrb[0].mxu0
        %2682 = vmatprep.mubr.bf16.mxu0 0
        %2683 = vmatmul.mubr.bf16.gmra.mrb[0].mxu0 %v2484
        %v2684 = vpop.f32.mrb[0].mxu0
        %v2685 = vadd.f32 0.0, %v2684
        %v2686 = vpop.f32.mrb[0].mxu0
        %v2687 = vpop.f32.mrb[0].mxu0
        %v2688 = vadd.f32 0.0, %v2687
        %v2689 = vpop.f32.mrb[0].mxu0
        %2690 = vmatprep.mubr.bf16.mxu0 0
        %2691 = vmatmul.mubr.bf16.gmra.mrb[0].mxu0 %v2485
        %v2692 = vpop.f32.mrb[0].mxu0
        %v2693 = vadd.f32 0.0, %v2692
        %v2694 = vpop.f32.mrb[0].mxu0
        %v2695 = vpop.f32.mrb[0].mxu0
        %v2696 = vadd.f32 0.0, %v2695
        %v2697 = vpop.f32.mrb[0].mxu0
        %2698 = vmatprep.mubr.bf16.mxu0 0
        %2699 = vmatmul.mubr.bf16.gmra.mrb[0].mxu0 %v2486
        %v2700 = vpop.f32.mrb[0].mxu0
        %v2701 = vadd.f32 0.0, %v2700
        %v2702 = vpop.f32.mrb[0].mxu0
        %v2703 = vpop.f32.mrb[0].mxu0
        %v2704 = vadd.f32 0.0, %v2703
        %v2705 = vpop.f32.mrb[0].mxu0
        %2706 = vmatprep.mubr.bf16.mxu0 0
        %2707 = vmatmul.mubr.bf16.gmra.mrb[0].mxu0 %v2487
        %v2708 = vpop.f32.mrb[0].mxu0
        %v2709 = vadd.f32 0.0, %v2708
        %v2710 = vpop.f32.mrb[0].mxu0
        %v2711 = vpop.f32.mrb[0].mxu0
        %v2712 = vadd.f32 0.0, %v2711
        %v2713 = vpop.f32.mrb[0].mxu0
        %2714 = vmatprep.mubr.bf16.mxu0 0
        %2715 = vmatmul.mubr.bf16.gmra.mrb[0].mxu0 %v2488
        %v2716 = vpop.f32.mrb[0].mxu0
        %v2717 = vadd.f32 0.0, %v2716
        %v2718 = vpop.f32.mrb[0].mxu0
        %v2719 = vpop.f32.mrb[0].mxu0
        %v2720 = vadd.f32 0.0, %v2719
        %v2721 = vpop.f32.mrb[0].mxu0
        %2722 = vmatprep.mubr.bf16.mxu0 0
        %2723 = vmatmul.mubr.bf16.gmra.mrb[0].mxu0 %v2489
        %v2724 = vpop.f32.mrb[0].mxu0
        %v2725 = vadd.f32 0.0, %v2724
        %v2726 = vpop.f32.mrb[0].mxu0
        %v2727 = vpop.f32.mrb[0].mxu0
        %v2728 = vadd.f32 0.0, %v2727
        %v2729 = vpop.f32.mrb[0].mxu0
        %2730 = vmatprep.mubr.bf16.mxu0 0
        %2731 = vmatmul.mubr.bf16.gmra.mrb[0].mxu0 %v2490
        %v2732 = vpop.f32.mrb[0].mxu0
        %v2733 = vadd.f32 0.0, %v2732
        %v2734 = vpop.f32.mrb[0].mxu0
        %v2735 = vpop.f32.mrb[0].mxu0
        %v2736 = vadd.f32 0.0, %v2735
        %v2737 = vpop.f32.mrb[0].mxu0
        %2738 = vmatprep.mubr.bf16.mxu0 0
        %2739 = vmatmul.mubr.bf16.gmra.mrb[0].mxu0 %v2491
        %v2740 = vpop.f32.mrb[0].mxu0
        %v2741 = vadd.f32 0.0, %v2740
        %v2742 = vpop.f32.mrb[0].mxu0
        %v2743 = vpop.f32.mrb[0].mxu0
        %v2744 = vadd.f32 0.0, %v2743
        %v2745 = vpop.f32.mrb[0].mxu0
        %2746 = vmatprep.mubr.bf16.mxu0 0
        %2747 = vmatmul.mubr.bf16.gmra.mrb[0].mxu0 %v2492
        %v2748 = vpop.f32.mrb[0].mxu0
        %v2749 = vadd.f32 0.0, %v2748
        %v2750 = vpop.f32.mrb[0].mxu0
        %v2751 = vpop.f32.mrb[0].mxu0
        %v2752 = vadd.f32 0.0, %v2751
        %v2753 = vpop.f32.mrb[0].mxu0
        %2754 = vmatprep.mubr.bf16.mxu0 0
        %2755 = vmatmul.mubr.bf16.gmra.mrb[0].mxu0 %v2493
        %v2756 = vpop.f32.mrb[0].mxu0
        %v2757 = vadd.f32 0.0, %v2756
        %v2758 = vpop.f32.mrb[0].mxu0
        %v2759 = vpop.f32.mrb[0].mxu0
        %v2760 = vadd.f32 0.0, %v2759
        %v2761 = vpop.f32.mrb[0].mxu0
        %2762 = vmatprep.mubr.bf16.mxu0 0
        %2763 = vmatmul.mubr.bf16.gmra.mrb[0].mxu0 %v2494
        %v2764 = vpop.f32.mrb[0].mxu0
        %v2765 = vadd.f32 0.0, %v2764
        %v2766 = vpop.f32.mrb[0].mxu0
        %v2767 = vpop.f32.mrb[0].mxu0
        %v2768 = vadd.f32 0.0, %v2767
        %v2769 = vpop.f32.mrb[0].mxu0
        %2770 = vmatprep.mubr.bf16.mxu0 0
        %2771 = vmatmul.mubr.bf16.gmra.mrb[0].mxu0 %v2495
        %v2772 = vpop.f32.mrb[0].mxu0
        %v2773 = vadd.f32 0.0, %v2772
        %v2774 = vpop.f32.mrb[0].mxu0
        %v2775 = vpop.f32.mrb[0].mxu0
        %v2776 = vadd.f32 0.0, %v2775
        %v2777 = vpop.f32.mrb[0].mxu0
        %2778 = vmatprep.mubr.bf16.mxu0 0
        %2779 = vmatmul.mubr.bf16.gmra.mrb[0].mxu0 %v2496
        %v2780 = vpop.f32.mrb[0].mxu0
        %v2781 = vadd.f32 0.0, %v2780
        %v2782 = vpop.f32.mrb[0].mxu0
        %v2783 = vpop.f32.mrb[0].mxu0
        %v2784 = vadd.f32 0.0, %v2783
        %v2785 = vpop.f32.mrb[0].mxu0
        %2786 = vmatprep.mubr.bf16.mxu0 0
        %2787 = vmatmul.mubr.bf16.gmra.mrb[0].mxu0 %v2497
        %v2788 = vpop.f32.mrb[0].mxu0
        %v2789 = vadd.f32 0.0, %v2788
        %v2790 = vpop.f32.mrb[0].mxu0
        %v2791 = vpop.f32.mrb[0].mxu0
        %v2792 = vadd.f32 0.0, %v2791
        %v2793 = vpop.f32.mrb[0].mxu0
        %2794 = vmatprep.mubr.bf16.mxu0 0
        %2795 = vmatmul.mubr.bf16.gmra.mrb[0].mxu0 %v2498
        %v2796 = vpop.f32.mrb[0].mxu0
        %v2797 = vadd.f32 0.0, %v2796
        %v2798 = vpop.f32.mrb[0].mxu0
        %v2799 = vpop.f32.mrb[0].mxu0
        %v2800 = vadd.f32 0.0, %v2799
        %v2801 = vpop.f32.mrb[0].mxu0
        %2802 = vmatprep.mubr.bf16.mxu0 0
        %2803 = vmatmul.mubr.bf16.gmra.mrb[0].mxu0 %v2499
        %v2804 = vpop.f32.mrb[0].mxu0
        %v2805 = vadd.f32 0.0, %v2804
        %v2806 = vpop.f32.mrb[0].mxu0
        %v2807 = vpop.f32.mrb[0].mxu0
        %v2808 = vadd.f32 0.0, %v2807
        %v2809 = vpop.f32.mrb[0].mxu0
        %2810 = vmatprep.mubr.bf16.mxu0 0
        %2811 = vmatmul.mubr.bf16.gmra.mrb[0].mxu0 %v2500
        %v2812 = vpop.f32.mrb[0].mxu0
        %v2813 = vadd.f32 0.0, %v2812
        %v2814 = vpop.f32.mrb[0].mxu0
        %v2815 = vpop.f32.mrb[0].mxu0
        %v2816 = vadd.f32 0.0, %v2815
        %v2817 = vpop.f32.mrb[0].mxu0
        %2818 = vmatprep.mubr.bf16.mxu0 0
        %2819 = vmatmul.mubr.bf16.gmra.mrb[0].mxu0 %v2501
        %v2820 = vpop.f32.mrb[0].mxu0
        %v2821 = vadd.f32 0.0, %v2820
        %v2822 = vpop.f32.mrb[0].mxu0
        %v2823 = vpop.f32.mrb[0].mxu0
        %v2824 = vadd.f32 0.0, %v2823
        %v2825 = vpop.f32.mrb[0].mxu0
        %2826 = vmatprep.mubr.bf16.mxu0 0
        %2827 = vmatmul.mubr.bf16.gmra.mrb[0].mxu0 %v2502
        %v2828 = vpop.f32.mrb[0].mxu0
        %v2829 = vadd.f32 0.0, %v2828
        %v2830 = vpop.f32.mrb[0].mxu0
        %v2831 = vpop.f32.mrb[0].mxu0
        %v2832 = vadd.f32 0.0, %v2831
        %v2833 = vpop.f32.mrb[0].mxu0
        %2834 = vmatprep.mubr.bf16.mxu0 0
        %2835 = vmatmul.mubr.bf16.gmra.mrb[0].mxu0 %v2503
        %v2836 = vpop.f32.mrb[0].mxu0
        %v2837 = vadd.f32 0.0, %v2836
        %v2838 = vpop.f32.mrb[0].mxu0
        %v2839 = vpop.f32.mrb[0].mxu0
        %v2840 = vadd.f32 0.0, %v2839
        %v2841 = vpop.f32.mrb[0].mxu0
        %2842 = vmatprep.mubr.bf16.mxu0 0
        %2843 = vmatmul.mubr.bf16.gmra.mrb[0].mxu0 %v2504
        %v2844 = vpop.f32.mrb[0].mxu0
        %v2845 = vadd.f32 0.0, %v2844
        %v2846 = vpop.f32.mrb[0].mxu0
        %v2847 = vpop.f32.mrb[0].mxu0
        %v2848 = vadd.f32 0.0, %v2847
        %v2849 = vpop.f32.mrb[0].mxu0
        %2850 = vmatprep.mubr.bf16.mxu0 0
        %2851 = vmatmul.mubr.bf16.gmra.mrb[0].mxu0 %v2505
        %v2852 = vpop.f32.mrb[0].mxu0
        %v2853 = vadd.f32 0.0, %v2852
        %v2854 = vpop.f32.mrb[0].mxu0
        %v2855 = vpop.f32.mrb[0].mxu0
        %v2856 = vadd.f32 0.0, %v2855
        %v2857 = vpop.f32.mrb[0].mxu0
        %2858 = vdwg.mxu0
        %v2859 = vld [vmem:[%s8] sm:$0x1]
        %v2860 = vld [vmem:[%s9] sm:$0x1]
        %v2861 = vadd.f32 %v2605, %v2608
        %v2862 = vadd.f32 %v2861, %v2613
        %v2863 = vadd.f32 %v2862, %v2616
        %v2864 = vadd.f32 %v2863, %v2621
        %v2865 = vadd.f32 %v2864, %v2624
        %v2866 = vadd.f32 %v2865, %v2629
        %v2867 = vadd.f32 %v2866, %v2632
        %v2868 = vadd.f32 %v2867, %v2637
        %v2869 = vadd.f32 %v2868, %v2640
        %v2870 = vadd.f32 %v2869, %v2645
        %v2871 = vadd.f32 %v2870, %v2648
        %v2872 = vadd.f32 %v2871, %v2653
        %v2873 = vadd.f32 %v2872, %v2656
        %v2874 = vadd.f32 %v2873, %v2661
        %v2875 = vadd.f32 %v2874, %v2664
        %v2876 = vadd.f32 %v2875, %v2669
        %v2877 = vadd.f32 %v2876, %v2672
        %v2878 = vadd.f32 %v2877, %v2677
        %v2879 = vadd.f32 %v2878, %v2680
        %v2880 = vadd.f32 %v2879, %v2685
        %v2881 = vadd.f32 %v2880, %v2688
        %v2882 = vadd.f32 %v2881, %v2693
        %v2883 = vadd.f32 %v2882, %v2696
        %v2884 = vadd.f32 %v2883, %v2701
        %v2885 = vadd.f32 %v2884, %v2704
        %v2886 = vadd.f32 %v2885, %v2709
        %v2887 = vadd.f32 %v2886, %v2712
        %v2888 = vadd.f32 %v2887, %v2717
        %v2889 = vadd.f32 %v2888, %v2720
        %v2890 = vadd.f32 %v2889, %v2725
        %v2891 = vadd.f32 %v2890, %v2728
        %v2892 = vrot.slane %v2891, 4
        %v2893 = vadd.f32 %v2891, %v2892
        %v2894 = vrot.slane %v2893, 2
        %v2895 = vadd.f32 %v2893, %v2894
        %v2896 = vrot.slane %v2895, 1
        %v2897 = vadd.f32 %v2895, %v2896
        %v2898 = vadd.f32 %v2733, %v2736
        %v2899 = vadd.f32 %v2898, %v2741
        %v2900 = vadd.f32 %v2899, %v2744
        %v2901 = vadd.f32 %v2900, %v2749
        %v2902 = vadd.f32 %v2901, %v2752
        %v2903 = vadd.f32 %v2902, %v2757
        %v2904 = vadd.f32 %v2903, %v2760
        %v2905 = vadd.f32 %v2904, %v2765
        %v2906 = vadd.f32 %v2905, %v2768
        %v2907 = vadd.f32 %v2906, %v2773
        %v2908 = vadd.f32 %v2907, %v2776
        %v2909 = vadd.f32 %v2908, %v2781
        %v2910 = vadd.f32 %v2909, %v2784
        %v2911 = vadd.f32 %v2910, %v2789
        %v2912 = vadd.f32 %v2911, %v2792
        %v2913 = vadd.f32 %v2912, %v2797
        %v2914 = vadd.f32 %v2913, %v2800
        %v2915 = vadd.f32 %v2914, %v2805
        %v2916 = vadd.f32 %v2915, %v2808
        %v2917 = vadd.f32 %v2916, %v2813
        %v2918 = vadd.f32 %v2917, %v2816
        %v2919 = vadd.f32 %v2918, %v2821
        %v2920 = vadd.f32 %v2919, %v2824
        %v2921 = vadd.f32 %v2920, %v2829
        %v2922 = vadd.f32 %v2921, %v2832
        %v2923 = vadd.f32 %v2922, %v2837
        %v2924 = vadd.f32 %v2923, %v2840
        %v2925 = vadd.f32 %v2924, %v2845
        %v2926 = vadd.f32 %v2925, %v2848
        %v2927 = vadd.f32 %v2926, %v2853
        %v2928 = vadd.f32 %v2927, %v2856
        %v2929 = vrot.slane %v2928, 4
        %v2930 = vadd.f32 %v2928, %v2929
        %v2931 = vrot.slane %v2930, 2
        %v2932 = vadd.f32 %v2930, %v2931
        %v2933 = vrot.slane %v2932, 1
        %v2934 = vadd.f32 %v2932, %v2933
        %v2935 = vmul.f32 %v2897, %v2099
        %v2936 = vmul.f32 %v2934, %v2099
        %v2937 = vmul.f32 %v2605, %v2605
        %v2938 = vmul.f32 %v2608, %v2608
        %v2939 = vmul.f32 %v2613, %v2613
        %v2940 = vmul.f32 %v2616, %v2616
        %v2941 = vmul.f32 %v2621, %v2621
        %v2942 = vmul.f32 %v2624, %v2624
        %v2943 = vmul.f32 %v2629, %v2629
        %v2944 = vmul.f32 %v2632, %v2632
        %v2945 = vmul.f32 %v2637, %v2637
        %v2946 = vmul.f32 %v2640, %v2640
        %v2947 = vmul.f32 %v2645, %v2645
        %v2948 = vmul.f32 %v2648, %v2648
        %v2949 = vmul.f32 %v2653, %v2653
        %v2950 = vmul.f32 %v2656, %v2656
        %v2951 = vmul.f32 %v2661, %v2661
        %v2952 = vmul.f32 %v2664, %v2664
        %v2953 = vmul.f32 %v2669, %v2669
        %v2954 = vmul.f32 %v2672, %v2672
        %v2955 = vmul.f32 %v2677, %v2677
        %v2956 = vmul.f32 %v2680, %v2680
        %v2957 = vmul.f32 %v2685, %v2685
        %v2958 = vmul.f32 %v2688, %v2688
        %v2959 = vmul.f32 %v2693, %v2693
        %v2960 = vmul.f32 %v2696, %v2696
        %v2961 = vmul.f32 %v2701, %v2701
        %v2962 = vmul.f32 %v2704, %v2704
        %v2963 = vmul.f32 %v2709, %v2709
        %v2964 = vmul.f32 %v2712, %v2712
        %v2965 = vmul.f32 %v2717, %v2717
        %v2966 = vmul.f32 %v2720, %v2720
        %v2967 = vmul.f32 %v2725, %v2725
        %v2968 = vmul.f32 %v2728, %v2728
        %v2969 = vmul.f32 %v2733, %v2733
        %v2970 = vmul.f32 %v2736, %v2736
        %v2971 = vmul.f32 %v2741, %v2741
        %v2972 = vmul.f32 %v2744, %v2744
        %v2973 = vmul.f32 %v2749, %v2749
        %v2974 = vmul.f32 %v2752, %v2752
        %v2975 = vmul.f32 %v2757, %v2757
        %v2976 = vmul.f32 %v2760, %v2760
        %v2977 = vmul.f32 %v2765, %v2765
        %v2978 = vmul.f32 %v2768, %v2768
        %v2979 = vmul.f32 %v2773, %v2773
        %v2980 = vmul.f32 %v2776, %v2776
        %v2981 = vmul.f32 %v2781, %v2781
        %v2982 = vmul.f32 %v2784, %v2784
        %v2983 = vmul.f32 %v2789, %v2789
        %v2984 = vmul.f32 %v2792, %v2792
        %v2985 = vmul.f32 %v2797, %v2797
        %v2986 = vmul.f32 %v2800, %v2800
        %v2987 = vmul.f32 %v2805, %v2805
        %v2988 = vmul.f32 %v2808, %v2808
        %v2989 = vmul.f32 %v2813, %v2813
        %v2990 = vmul.f32 %v2816, %v2816
        %v2991 = vmul.f32 %v2821, %v2821
        %v2992 = vmul.f32 %v2824, %v2824
        %v2993 = vmul.f32 %v2829, %v2829
        %v2994 = vmul.f32 %v2832, %v2832
        %v2995 = vmul.f32 %v2837, %v2837
        %v2996 = vmul.f32 %v2840, %v2840
        %v2997 = vmul.f32 %v2845, %v2845
        %v2998 = vmul.f32 %v2848, %v2848
        %v2999 = vmul.f32 %v2853, %v2853
        %v3000 = vmul.f32 %v2856, %v2856
        %v3001 = vadd.f32 %v2937, %v2938
        %v3002 = vadd.f32 %v3001, %v2939
        %v3003 = vadd.f32 %v3002, %v2940
        %v3004 = vadd.f32 %v3003, %v2941
        %v3005 = vadd.f32 %v3004, %v2942
        %v3006 = vadd.f32 %v3005, %v2943
        %v3007 = vadd.f32 %v3006, %v2944
        %v3008 = vadd.f32 %v3007, %v2945
        %v3009 = vadd.f32 %v3008, %v2946
        %v3010 = vadd.f32 %v3009, %v2947
        %v3011 = vadd.f32 %v3010, %v2948
        %v3012 = vadd.f32 %v3011, %v2949
        %v3013 = vadd.f32 %v3012, %v2950
        %v3014 = vadd.f32 %v3013, %v2951
        %v3015 = vadd.f32 %v3014, %v2952
        %v3016 = vadd.f32 %v3015, %v2953
        %v3017 = vadd.f32 %v3016, %v2954
        %v3018 = vadd.f32 %v3017, %v2955
        %v3019 = vadd.f32 %v3018, %v2956
        %v3020 = vadd.f32 %v3019, %v2957
        %v3021 = vadd.f32 %v3020, %v2958
        %v3022 = vadd.f32 %v3021, %v2959
        %v3023 = vadd.f32 %v3022, %v2960
        %v3024 = vadd.f32 %v3023, %v2961
        %v3025 = vadd.f32 %v3024, %v2962
        %v3026 = vadd.f32 %v3025, %v2963
        %v3027 = vadd.f32 %v3026, %v2964
        %v3028 = vadd.f32 %v3027, %v2965
        %v3029 = vadd.f32 %v3028, %v2966
        %v3030 = vadd.f32 %v3029, %v2967
        %v3031 = vadd.f32 %v3030, %v2968
        %v3032 = vrot.slane %v3031, 4
        %v3033 = vadd.f32 %v3031, %v3032
        %v3034 = vrot.slane %v3033, 2
        %v3035 = vadd.f32 %v3033, %v3034
        %v3036 = vrot.slane %v3035, 1
        %v3037 = vadd.f32 %v3035, %v3036
        %v3038 = vadd.f32 %v2969, %v2970
        %v3039 = vadd.f32 %v3038, %v2971
        %v3040 = vadd.f32 %v3039, %v2972
        %v3041 = vadd.f32 %v3040, %v2973
        %v3042 = vadd.f32 %v3041, %v2974
        %v3043 = vadd.f32 %v3042, %v2975
        %v3044 = vadd.f32 %v3043, %v2976
        %v3045 = vadd.f32 %v3044, %v2977
        %v3046 = vadd.f32 %v3045, %v2978
        %v3047 = vadd.f32 %v3046, %v2979
        %v3048 = vadd.f32 %v3047, %v2980
        %v3049 = vadd.f32 %v3048, %v2981
        %v3050 = vadd.f32 %v3049, %v2982
        %v3051 = vadd.f32 %v3050, %v2983
        %v3052 = vadd.f32 %v3051, %v2984
        %v3053 = vadd.f32 %v3052, %v2985
        %v3054 = vadd.f32 %v3053, %v2986
        %v3055 = vadd.f32 %v3054, %v2987
        %v3056 = vadd.f32 %v3055, %v2988
        %v3057 = vadd.f32 %v3056, %v2989
        %v3058 = vadd.f32 %v3057, %v2990
        %v3059 = vadd.f32 %v3058, %v2991
        %v3060 = vadd.f32 %v3059, %v2992
        %v3061 = vadd.f32 %v3060, %v2993
        %v3062 = vadd.f32 %v3061, %v2994
        %v3063 = vadd.f32 %v3062, %v2995
        %v3064 = vadd.f32 %v3063, %v2996
        %v3065 = vadd.f32 %v3064, %v2997
        %v3066 = vadd.f32 %v3065, %v2998
        %v3067 = vadd.f32 %v3066, %v2999
        %v3068 = vadd.f32 %v3067, %v3000
        %v3069 = vrot.slane %v3068, 4
        %v3070 = vadd.f32 %v3068, %v3069
        %v3071 = vrot.slane %v3070, 2
        %v3072 = vadd.f32 %v3070, %v3071
        %v3073 = vrot.slane %v3072, 1
        %v3074 = vadd.f32 %v3072, %v3073
        %v3075 = vmul.f32 %v3037, %v2099
        %v3076 = vmul.f32 %v3074, %v2099
        %v3077 = vmul.f32 %v2935, %v2935
        %v3078 = vmul.f32 %v2936, %v2936
        %v3079 = vsub.f32 %v3075, %v3077
        %v3080 = vsub.f32 %v3076, %v3078
        %v3081 = vmax.f32 %v3079, 0.0
        %v3082 = vmax.f32 %v3080, 0.0
        %v3083 = vadd.f32 %v3081, 1e-05
        %v3084 = vadd.f32 %v3082, 1e-05
        %v3085 = vrsqrt.pop %v3083
        %v3086 = vrsqrt.pop %v3084
        %v3087 = vmul.f32 %v2859, %v3085
        %v3088 = vmul.f32 %v2859, %v3086
        %v3089 = vmul.f32 %v2935, %v3087
        %v3090 = vmul.f32 %v2936, %v3088
        %v3091 = vsub.f32 %v2860, %v3089
        %v3092 = vsub.f32 %v2860, %v3090
        %v3095 = vlaneseq
        %v3096 = vshrl.u32 %v3095, 7
        %v3097 = vsub.s32 0, %v3096
        %v3098 = vrot.slane %v3087, %v3097
        %v3099 = vlaneseq
        %v3100 = vshrl.u32 %v3099, 7
        %v3101 = vsub.s32 0, %v3100
        %v3102 = vrot.slane %v3088, %v3101
        %v3105 = vmul.f32 %v2605, %v3098
        %v3106 = vmul.f32 %v2608, %v3098
        %v3107 = vmul.f32 %v2613, %v3098
        %v3108 = vmul.f32 %v2616, %v3098
        %v3109 = vmul.f32 %v2621, %v3098
        %v3110 = vmul.f32 %v2624, %v3098
        %v3111 = vmul.f32 %v2629, %v3098
        %v3112 = vmul.f32 %v2632, %v3098
        %v3113 = vmul.f32 %v2637, %v3098
        %v3114 = vmul.f32 %v2640, %v3098
        %v3115 = vmul.f32 %v2645, %v3098
        %v3116 = vmul.f32 %v2648, %v3098
        %v3117 = vmul.f32 %v2653, %v3098
        %v3118 = vmul.f32 %v2656, %v3098
        %v3119 = vmul.f32 %v2661, %v3098
        %v3120 = vmul.f32 %v2664, %v3098
        %v3121 = vmul.f32 %v2669, %v3098
        %v3122 = vmul.f32 %v2672, %v3098
        %v3123 = vmul.f32 %v2677, %v3098
        %v3124 = vmul.f32 %v2680, %v3098
        %v3125 = vmul.f32 %v2685, %v3098
        %v3126 = vmul.f32 %v2688, %v3098
        %v3127 = vmul.f32 %v2693, %v3098
        %v3128 = vmul.f32 %v2696, %v3098
        %v3129 = vmul.f32 %v2701, %v3098
        %v3130 = vmul.f32 %v2704, %v3098
        %v3131 = vmul.f32 %v2709, %v3098
        %v3132 = vmul.f32 %v2712, %v3098
        %v3133 = vmul.f32 %v2717, %v3098
        %v3134 = vmul.f32 %v2720, %v3098
        %v3135 = vmul.f32 %v2725, %v3098
        %v3136 = vmul.f32 %v2728, %v3098
        %v3137 = vmul.f32 %v2733, %v3102
        %v3138 = vmul.f32 %v2736, %v3102
        %v3139 = vmul.f32 %v2741, %v3102
        %v3140 = vmul.f32 %v2744, %v3102
        %v3141 = vmul.f32 %v2749, %v3102
        %v3142 = vmul.f32 %v2752, %v3102
        %v3143 = vmul.f32 %v2757, %v3102
        %v3144 = vmul.f32 %v2760, %v3102
        %v3145 = vmul.f32 %v2765, %v3102
        %v3146 = vmul.f32 %v2768, %v3102
        %v3147 = vmul.f32 %v2773, %v3102
        %v3148 = vmul.f32 %v2776, %v3102
        %v3149 = vmul.f32 %v2781, %v3102
        %v3150 = vmul.f32 %v2784, %v3102
        %v3151 = vmul.f32 %v2789, %v3102
        %v3152 = vmul.f32 %v2792, %v3102
        %v3153 = vmul.f32 %v2797, %v3102
        %v3154 = vmul.f32 %v2800, %v3102
        %v3155 = vmul.f32 %v2805, %v3102
        %v3156 = vmul.f32 %v2808, %v3102
        %v3157 = vmul.f32 %v2813, %v3102
        %v3158 = vmul.f32 %v2816, %v3102
        %v3159 = vmul.f32 %v2821, %v3102
        %v3160 = vmul.f32 %v2824, %v3102
        %v3161 = vmul.f32 %v2829, %v3102
        %v3162 = vmul.f32 %v2832, %v3102
        %v3163 = vmul.f32 %v2837, %v3102
        %v3164 = vmul.f32 %v2840, %v3102
        %v3165 = vmul.f32 %v2845, %v3102
        %v3166 = vmul.f32 %v2848, %v3102
        %v3167 = vmul.f32 %v2853, %v3102
        %v3168 = vmul.f32 %v2856, %v3102
        %v3171 = vlaneseq
        %v3172 = vshrl.u32 %v3171, 7
        %v3173 = vsub.s32 0, %v3172
        %v3174 = vrot.slane %v3091, %v3173
        %v3175 = vlaneseq
        %v3176 = vshrl.u32 %v3175, 7
        %v3177 = vsub.s32 0, %v3176
        %v3178 = vrot.slane %v3092, %v3177
        %v3181 = vadd.f32 %v3105, %v3174
        %v3182 = vadd.f32 %v3106, %v3174
        %v3183 = vadd.f32 %v3107, %v3174
        %v3184 = vadd.f32 %v3108, %v3174
        %v3185 = vadd.f32 %v3109, %v3174
        %v3186 = vadd.f32 %v3110, %v3174
        %v3187 = vadd.f32 %v3111, %v3174
        %v3188 = vadd.f32 %v3112, %v3174
        %v3189 = vadd.f32 %v3113, %v3174
        %v3190 = vadd.f32 %v3114, %v3174
        %v3191 = vadd.f32 %v3115, %v3174
        %v3192 = vadd.f32 %v3116, %v3174
        %v3193 = vadd.f32 %v3117, %v3174
        %v3194 = vadd.f32 %v3118, %v3174
        %v3195 = vadd.f32 %v3119, %v3174
        %v3196 = vadd.f32 %v3120, %v3174
        %v3197 = vadd.f32 %v3121, %v3174
        %v3198 = vadd.f32 %v3122, %v3174
        %v3199 = vadd.f32 %v3123, %v3174
        %v3200 = vadd.f32 %v3124, %v3174
        %v3201 = vadd.f32 %v3125, %v3174
        %v3202 = vadd.f32 %v3126, %v3174
        %v3203 = vadd.f32 %v3127, %v3174
        %v3204 = vadd.f32 %v3128, %v3174
        %v3205 = vadd.f32 %v3129, %v3174
        %v3206 = vadd.f32 %v3130, %v3174
        %v3207 = vadd.f32 %v3131, %v3174
        %v3208 = vadd.f32 %v3132, %v3174
        %v3209 = vadd.f32 %v3133, %v3174
        %v3210 = vadd.f32 %v3134, %v3174
        %v3211 = vadd.f32 %v3135, %v3174
        %v3212 = vadd.f32 %v3136, %v3174
        %v3213 = vadd.f32 %v3137, %v3178
        %v3214 = vadd.f32 %v3138, %v3178
        %v3215 = vadd.f32 %v3139, %v3178
        %v3216 = vadd.f32 %v3140, %v3178
        %v3217 = vadd.f32 %v3141, %v3178
        %v3218 = vadd.f32 %v3142, %v3178
        %v3219 = vadd.f32 %v3143, %v3178
        %v3220 = vadd.f32 %v3144, %v3178
        %v3221 = vadd.f32 %v3145, %v3178
        %v3222 = vadd.f32 %v3146, %v3178
        %v3223 = vadd.f32 %v3147, %v3178
        %v3224 = vadd.f32 %v3148, %v3178
        %v3225 = vadd.f32 %v3149, %v3178
        %v3226 = vadd.f32 %v3150, %v3178
        %v3227 = vadd.f32 %v3151, %v3178
        %v3228 = vadd.f32 %v3152, %v3178
        %v3229 = vadd.f32 %v3153, %v3178
        %v3230 = vadd.f32 %v3154, %v3178
        %v3231 = vadd.f32 %v3155, %v3178
        %v3232 = vadd.f32 %v3156, %v3178
        %v3233 = vadd.f32 %v3157, %v3178
        %v3234 = vadd.f32 %v3158, %v3178
        %v3235 = vadd.f32 %v3159, %v3178
        %v3236 = vadd.f32 %v3160, %v3178
        %v3237 = vadd.f32 %v3161, %v3178
        %v3238 = vadd.f32 %v3162, %v3178
        %v3239 = vadd.f32 %v3163, %v3178
        %v3240 = vadd.f32 %v3164, %v3178
        %v3241 = vadd.f32 %v3165, %v3178
        %v3242 = vadd.f32 %v3166, %v3178
        %v3243 = vadd.f32 %v3167, %v3178
        %v3244 = vadd.f32 %v3168, %v3178
        %v3245 = vmax.f32 %v3181, 0.0
        %v3246 = vmax.f32 %v3182, 0.0
        %v3247 = vmax.f32 %v3183, 0.0
        %v3248 = vmax.f32 %v3184, 0.0
        %v3249 = vmax.f32 %v3185, 0.0
        %v3250 = vmax.f32 %v3186, 0.0
        %v3251 = vmax.f32 %v3187, 0.0
        %v3252 = vmax.f32 %v3188, 0.0
        %v3253 = vmax.f32 %v3189, 0.0
        %v3254 = vmax.f32 %v3190, 0.0
        %v3255 = vmax.f32 %v3191, 0.0
        %v3256 = vmax.f32 %v3192, 0.0
        %v3257 = vmax.f32 %v3193, 0.0
        %v3258 = vmax.f32 %v3194, 0.0
        %v3259 = vmax.f32 %v3195, 0.0
        %v3260 = vmax.f32 %v3196, 0.0
        %v3261 = vmax.f32 %v3197, 0.0
        %v3262 = vmax.f32 %v3198, 0.0
        %v3263 = vmax.f32 %v3199, 0.0
        %v3264 = vmax.f32 %v3200, 0.0
        %v3265 = vmax.f32 %v3201, 0.0
        %v3266 = vmax.f32 %v3202, 0.0
        %v3267 = vmax.f32 %v3203, 0.0
        %v3268 = vmax.f32 %v3204, 0.0
        %v3269 = vmax.f32 %v3205, 0.0
        %v3270 = vmax.f32 %v3206, 0.0
        %v3271 = vmax.f32 %v3207, 0.0
        %v3272 = vmax.f32 %v3208, 0.0
        %v3273 = vmax.f32 %v3209, 0.0
        %v3274 = vmax.f32 %v3210, 0.0
        %v3275 = vmax.f32 %v3211, 0.0
        %v3276 = vmax.f32 %v3212, 0.0
        %v3277 = vmax.f32 %v3213, 0.0
        %v3278 = vmax.f32 %v3214, 0.0
        %v3279 = vmax.f32 %v3215, 0.0
        %v3280 = vmax.f32 %v3216, 0.0
        %v3281 = vmax.f32 %v3217, 0.0
        %v3282 = vmax.f32 %v3218, 0.0
        %v3283 = vmax.f32 %v3219, 0.0
        %v3284 = vmax.f32 %v3220, 0.0
        %v3285 = vmax.f32 %v3221, 0.0
        %v3286 = vmax.f32 %v3222, 0.0
        %v3287 = vmax.f32 %v3223, 0.0
        %v3288 = vmax.f32 %v3224, 0.0
        %v3289 = vmax.f32 %v3225, 0.0
        %v3290 = vmax.f32 %v3226, 0.0
        %v3291 = vmax.f32 %v3227, 0.0
        %v3292 = vmax.f32 %v3228, 0.0
        %v3293 = vmax.f32 %v3229, 0.0
        %v3294 = vmax.f32 %v3230, 0.0
        %v3295 = vmax.f32 %v3231, 0.0
        %v3296 = vmax.f32 %v3232, 0.0
        %v3297 = vmax.f32 %v3233, 0.0
        %v3298 = vmax.f32 %v3234, 0.0
        %v3299 = vmax.f32 %v3235, 0.0
        %v3300 = vmax.f32 %v3236, 0.0
        %v3301 = vmax.f32 %v3237, 0.0
        %v3302 = vmax.f32 %v3238, 0.0
        %v3303 = vmax.f32 %v3239, 0.0
        %v3304 = vmax.f32 %v3240, 0.0
        %v3305 = vmax.f32 %v3241, 0.0
        %v3306 = vmax.f32 %v3242, 0.0
        %v3307 = vmax.f32 %v3243, 0.0
        %v3308 = vmax.f32 %v3244, 0.0
        %v3309 = vpack.c.bf16 %v3246, %v3245
        %v3310 = vpack.c.bf16 %v3248, %v3247
        %v3311 = vpack.c.bf16 %v3250, %v3249
        %v3312 = vpack.c.bf16 %v3252, %v3251
        %v3313 = vpack.c.bf16 %v3254, %v3253
        %v3314 = vpack.c.bf16 %v3256, %v3255
        %v3315 = vpack.c.bf16 %v3258, %v3257
        %v3316 = vpack.c.bf16 %v3260, %v3259
        %v3317 = vpack.c.bf16 %v3262, %v3261
        %v3318 = vpack.c.bf16 %v3264, %v3263
        %v3319 = vpack.c.bf16 %v3266, %v3265
        %v3320 = vpack.c.bf16 %v3268, %v3267
        %v3321 = vpack.c.bf16 %v3270, %v3269
        %v3322 = vpack.c.bf16 %v3272, %v3271
        %v3323 = vpack.c.bf16 %v3274, %v3273
        %v3324 = vpack.c.bf16 %v3276, %v3275
        %v3325 = vpack.c.bf16 %v3278, %v3277
        %v3326 = vpack.c.bf16 %v3280, %v3279
        %v3327 = vpack.c.bf16 %v3282, %v3281
        %v3328 = vpack.c.bf16 %v3284, %v3283
        %v3329 = vpack.c.bf16 %v3286, %v3285
        %v3330 = vpack.c.bf16 %v3288, %v3287
        %v3331 = vpack.c.bf16 %v3290, %v3289
        %v3332 = vpack.c.bf16 %v3292, %v3291
        %v3333 = vpack.c.bf16 %v3294, %v3293
        %v3334 = vpack.c.bf16 %v3296, %v3295
        %v3335 = vpack.c.bf16 %v3298, %v3297
        %v3336 = vpack.c.bf16 %v3300, %v3299
        %v3337 = vpack.c.bf16 %v3302, %v3301
        %v3338 = vpack.c.bf16 %v3304, %v3303
        %v3339 = vpack.c.bf16 %v3306, %v3305
        %v3340 = vpack.c.bf16 %v3308, %v3307
        %v3341 = vld [vmem:[%s10] sm:$0xf]
        %v3342 = vld [vmem:[%s10 + $0x4] sm:$0xf]
        %v3343 = vld [vmem:[%s10 + $0x8] sm:$0xf]
        %v3344 = vld [vmem:[%s10 + $0xc] sm:$0xf]
        %v3345 = vld [vmem:[%s10 + $0x10] sm:$0xf]
        %v3346 = vld [vmem:[%s10 + $0x14] sm:$0xf]
        %v3347 = vld [vmem:[%s10 + $0x18] sm:$0xf]
        %v3348 = vld [vmem:[%s10 + $0x1c] sm:$0xf]
        %v3349 = vld [vmem:[%s10 + $0x20] sm:$0xf]
        %v3350 = vld [vmem:[%s10 + $0x24] sm:$0xf]
        %v3351 = vld [vmem:[%s10 + $0x28] sm:$0xf]
        %v3352 = vld [vmem:[%s10 + $0x2c] sm:$0xf]
        %v3353 = vld [vmem:[%s10 + $0x30] sm:$0xf]
        %v3354 = vld [vmem:[%s10 + $0x34] sm:$0xf]
        %v3355 = vld [vmem:[%s10 + $0x38] sm:$0xf]
        %v3356 = vld [vmem:[%s10 + $0x3c] sm:$0xf]
        %v3373 = vunpack.c.l.b16 %v3341
        %v3374 = vunpack.c.l.b16 %v3342
        %v3375 = vunpack.c.l.b16 %v3343
        %v3376 = vunpack.c.l.b16 %v3344
        %v3377 = vunpack.c.l.b16 %v3345
        %v3378 = vunpack.c.l.b16 %v3346
        %v3379 = vunpack.c.l.b16 %v3347
        %v3380 = vunpack.c.l.b16 %v3348
        %v3381 = vunpack.c.l.b16 %v3349
        %v3382 = vunpack.c.l.b16 %v3350
        %v3383 = vunpack.c.l.b16 %v3351
        %v3384 = vunpack.c.l.b16 %v3352
        %v3385 = vunpack.c.l.b16 %v3353
        %v3386 = vunpack.c.l.b16 %v3354
        %v3387 = vunpack.c.l.b16 %v3355
        %v3388 = vunpack.c.l.b16 %v3356
        %v3389 = vpack.c.b16 %v3374, %v3373
        %v3390 = vpack.c.b16 %v3376, %v3375
        %v3391 = vpack.c.b16 %v3378, %v3377
        %v3392 = vpack.c.b16 %v3380, %v3379
        %v3393 = vpack.c.b16 %v3382, %v3381
        %v3394 = vpack.c.b16 %v3384, %v3383
        %v3395 = vpack.c.b16 %v3386, %v3385
        %v3396 = vpack.c.b16 %v3388, %v3387
        %3405 = vmatprep.subr.bf16.mxu0 0
        %3406 = vmatpush1.bf16.msra.mxu0 %v3389
        %3407 = vmatprep.subr.bf16.mxu0 0
        %3408 = vmatpush1.bf16.msra.mxu0 %v3390
        %3409 = vmatprep.subr.bf16.mxu0 0
        %3410 = vmatpush1.bf16.msra.mxu0 %v3391
        %3411 = vmatprep.subr.bf16.mxu0 0
        %3412 = vmatpush1.bf16.msra.mxu0 %v3392
        %3413 = vmatprep.subr.bf16.mxu0 0
        %3414 = vmatpush1.bf16.msra.mxu0 %v3393
        %3415 = vmatprep.subr.bf16.mxu0 0
        %3416 = vmatpush1.bf16.msra.mxu0 %v3394
        %3417 = vmatprep.subr.bf16.mxu0 0
        %3418 = vmatpush1.bf16.msra.mxu0 %v3395
        %3419 = vmatprep.subr.bf16.mxu0 0
        %3420 = vmatpush1.bf16.msra.mxu0 %v3396
        %3421 = vmatprep.subr.bf16.mxu0 0
        %3422 = vmatpush1.bf16.msra.mxu0 0
        %3423 = vmatprep.subr.bf16.mxu0 0
        %3424 = vmatpush1.bf16.msra.mxu0 0
        %3425 = vmatprep.subr.bf16.mxu0 0
        %3426 = vmatpush1.bf16.msra.mxu0 0
        %3427 = vmatprep.subr.bf16.mxu0 0
        %3428 = vmatpush1.bf16.msra.mxu0 0
        %3429 = vmatprep.subr.bf16.mxu0 0
        %3430 = vmatpush1.bf16.msra.mxu0 0
        %3431 = vmatprep.subr.bf16.mxu0 0
        %3432 = vmatpush1.bf16.msra.mxu0 0
        %3433 = vmatprep.subr.bf16.mxu0 0
        %3434 = vmatpush1.bf16.msra.mxu0 0
        %3435 = vmatprep.subr.bf16.mxu0 0
        %3436 = vmatpush1.bf16.msra.mxu0 0
        %3437 = vmatprep.mubr.bf16.mxu0 0
        %3438 = vmatmul.mubr.bf16.gmra.mrb[0].mxu0 %v3309
        %v3439 = vpop.f32.mrb[0].mxu0
        %v3440 = vadd.f32 0.0, %v3439
        %v3441 = vpop.f32.mrb[0].mxu0
        %v3442 = vpop.f32.mrb[0].mxu0
        %v3443 = vadd.f32 0.0, %v3442
        %v3444 = vpop.f32.mrb[0].mxu0
        %3445 = vmatprep.mubr.bf16.mxu0 0
        %3446 = vmatmul.mubr.bf16.gmra.mrb[0].mxu0 %v3310
        %v3447 = vpop.f32.mrb[0].mxu0
        %v3448 = vadd.f32 0.0, %v3447
        %v3449 = vpop.f32.mrb[0].mxu0
        %v3450 = vpop.f32.mrb[0].mxu0
        %v3451 = vadd.f32 0.0, %v3450
        %v3452 = vpop.f32.mrb[0].mxu0
        %3453 = vmatprep.mubr.bf16.mxu0 0
        %3454 = vmatmul.mubr.bf16.gmra.mrb[0].mxu0 %v3311
        %v3455 = vpop.f32.mrb[0].mxu0
        %v3456 = vadd.f32 0.0, %v3455
        %v3457 = vpop.f32.mrb[0].mxu0
        %v3458 = vpop.f32.mrb[0].mxu0
        %v3459 = vadd.f32 0.0, %v3458
        %v3460 = vpop.f32.mrb[0].mxu0
        %3461 = vmatprep.mubr.bf16.mxu0 0
        %3462 = vmatmul.mubr.bf16.gmra.mrb[0].mxu0 %v3312
        %v3463 = vpop.f32.mrb[0].mxu0
        %v3464 = vadd.f32 0.0, %v3463
        %v3465 = vpop.f32.mrb[0].mxu0
        %v3466 = vpop.f32.mrb[0].mxu0
        %v3467 = vadd.f32 0.0, %v3466
        %v3468 = vpop.f32.mrb[0].mxu0
        %3469 = vmatprep.mubr.bf16.mxu0 0
        %3470 = vmatmul.mubr.bf16.gmra.mrb[0].mxu0 %v3313
        %v3471 = vpop.f32.mrb[0].mxu0
        %v3472 = vadd.f32 0.0, %v3471
        %v3473 = vpop.f32.mrb[0].mxu0
        %v3474 = vpop.f32.mrb[0].mxu0
        %v3475 = vadd.f32 0.0, %v3474
        %v3476 = vpop.f32.mrb[0].mxu0
        %3477 = vmatprep.mubr.bf16.mxu0 0
        %3478 = vmatmul.mubr.bf16.gmra.mrb[0].mxu0 %v3314
        %v3479 = vpop.f32.mrb[0].mxu0
        %v3480 = vadd.f32 0.0, %v3479
        %v3481 = vpop.f32.mrb[0].mxu0
        %v3482 = vpop.f32.mrb[0].mxu0
        %v3483 = vadd.f32 0.0, %v3482
        %v3484 = vpop.f32.mrb[0].mxu0
        %3485 = vmatprep.mubr.bf16.mxu0 0
        %3486 = vmatmul.mubr.bf16.gmra.mrb[0].mxu0 %v3315
        %v3487 = vpop.f32.mrb[0].mxu0
        %v3488 = vadd.f32 0.0, %v3487
        %v3489 = vpop.f32.mrb[0].mxu0
        %v3490 = vpop.f32.mrb[0].mxu0
        %v3491 = vadd.f32 0.0, %v3490
        %v3492 = vpop.f32.mrb[0].mxu0
        %3493 = vmatprep.mubr.bf16.mxu0 0
        %3494 = vmatmul.mubr.bf16.gmra.mrb[0].mxu0 %v3316
        %v3495 = vpop.f32.mrb[0].mxu0
        %v3496 = vadd.f32 0.0, %v3495
        %v3497 = vpop.f32.mrb[0].mxu0
        %v3498 = vpop.f32.mrb[0].mxu0
        %v3499 = vadd.f32 0.0, %v3498
        %v3500 = vpop.f32.mrb[0].mxu0
        %3501 = vmatprep.mubr.bf16.mxu0 0
        %3502 = vmatmul.mubr.bf16.gmra.mrb[0].mxu0 %v3317
        %v3503 = vpop.f32.mrb[0].mxu0
        %v3504 = vadd.f32 0.0, %v3503
        %v3505 = vpop.f32.mrb[0].mxu0
        %v3506 = vpop.f32.mrb[0].mxu0
        %v3507 = vadd.f32 0.0, %v3506
        %v3508 = vpop.f32.mrb[0].mxu0
        %3509 = vmatprep.mubr.bf16.mxu0 0
        %3510 = vmatmul.mubr.bf16.gmra.mrb[0].mxu0 %v3318
        %v3511 = vpop.f32.mrb[0].mxu0
        %v3512 = vadd.f32 0.0, %v3511
        %v3513 = vpop.f32.mrb[0].mxu0
        %v3514 = vpop.f32.mrb[0].mxu0
        %v3515 = vadd.f32 0.0, %v3514
        %v3516 = vpop.f32.mrb[0].mxu0
        %3517 = vmatprep.mubr.bf16.mxu0 0
        %3518 = vmatmul.mubr.bf16.gmra.mrb[0].mxu0 %v3319
        %v3519 = vpop.f32.mrb[0].mxu0
        %v3520 = vadd.f32 0.0, %v3519
        %v3521 = vpop.f32.mrb[0].mxu0
        %v3522 = vpop.f32.mrb[0].mxu0
        %v3523 = vadd.f32 0.0, %v3522
        %v3524 = vpop.f32.mrb[0].mxu0
        %3525 = vmatprep.mubr.bf16.mxu0 0
        %3526 = vmatmul.mubr.bf16.gmra.mrb[0].mxu0 %v3320
        %v3527 = vpop.f32.mrb[0].mxu0
        %v3528 = vadd.f32 0.0, %v3527
        %v3529 = vpop.f32.mrb[0].mxu0
        %v3530 = vpop.f32.mrb[0].mxu0
        %v3531 = vadd.f32 0.0, %v3530
        %v3532 = vpop.f32.mrb[0].mxu0
        %3533 = vmatprep.mubr.bf16.mxu0 0
        %3534 = vmatmul.mubr.bf16.gmra.mrb[0].mxu0 %v3321
        %v3535 = vpop.f32.mrb[0].mxu0
        %v3536 = vadd.f32 0.0, %v3535
        %v3537 = vpop.f32.mrb[0].mxu0
        %v3538 = vpop.f32.mrb[0].mxu0
        %v3539 = vadd.f32 0.0, %v3538
        %v3540 = vpop.f32.mrb[0].mxu0
        %3541 = vmatprep.mubr.bf16.mxu0 0
        %3542 = vmatmul.mubr.bf16.gmra.mrb[0].mxu0 %v3322
        %v3543 = vpop.f32.mrb[0].mxu0
        %v3544 = vadd.f32 0.0, %v3543
        %v3545 = vpop.f32.mrb[0].mxu0
        %v3546 = vpop.f32.mrb[0].mxu0
        %v3547 = vadd.f32 0.0, %v3546
        %v3548 = vpop.f32.mrb[0].mxu0
        %3549 = vmatprep.mubr.bf16.mxu0 0
        %3550 = vmatmul.mubr.bf16.gmra.mrb[0].mxu0 %v3323
        %v3551 = vpop.f32.mrb[0].mxu0
        %v3552 = vadd.f32 0.0, %v3551
        %v3553 = vpop.f32.mrb[0].mxu0
        %v3554 = vpop.f32.mrb[0].mxu0
        %v3555 = vadd.f32 0.0, %v3554
        %v3556 = vpop.f32.mrb[0].mxu0
        %3557 = vmatprep.mubr.bf16.mxu0 0
        %3558 = vmatmul.mubr.bf16.gmra.mrb[0].mxu0 %v3324
        %v3559 = vpop.f32.mrb[0].mxu0
        %v3560 = vadd.f32 0.0, %v3559
        %v3561 = vpop.f32.mrb[0].mxu0
        %v3562 = vpop.f32.mrb[0].mxu0
        %v3563 = vadd.f32 0.0, %v3562
        %v3564 = vpop.f32.mrb[0].mxu0
        %3565 = vmatprep.mubr.bf16.mxu0 0
        %3566 = vmatmul.mubr.bf16.gmra.mrb[0].mxu0 %v3325
        %v3567 = vpop.f32.mrb[0].mxu0
        %v3568 = vadd.f32 0.0, %v3567
        %v3569 = vpop.f32.mrb[0].mxu0
        %v3570 = vpop.f32.mrb[0].mxu0
        %v3571 = vadd.f32 0.0, %v3570
        %v3572 = vpop.f32.mrb[0].mxu0
        %3573 = vmatprep.mubr.bf16.mxu0 0
        %3574 = vmatmul.mubr.bf16.gmra.mrb[0].mxu0 %v3326
        %v3575 = vpop.f32.mrb[0].mxu0
        %v3576 = vadd.f32 0.0, %v3575
        %v3577 = vpop.f32.mrb[0].mxu0
        %v3578 = vpop.f32.mrb[0].mxu0
        %v3579 = vadd.f32 0.0, %v3578
        %v3580 = vpop.f32.mrb[0].mxu0
        %3581 = vmatprep.mubr.bf16.mxu0 0
        %3582 = vmatmul.mubr.bf16.gmra.mrb[0].mxu0 %v3327
        %v3583 = vpop.f32.mrb[0].mxu0
        %v3584 = vadd.f32 0.0, %v3583
        %v3585 = vpop.f32.mrb[0].mxu0
        %v3586 = vpop.f32.mrb[0].mxu0
        %v3587 = vadd.f32 0.0, %v3586
        %v3588 = vpop.f32.mrb[0].mxu0
        %3589 = vmatprep.mubr.bf16.mxu0 0
        %3590 = vmatmul.mubr.bf16.gmra.mrb[0].mxu0 %v3328
        %v3591 = vpop.f32.mrb[0].mxu0
        %v3592 = vadd.f32 0.0, %v3591
        %v3593 = vpop.f32.mrb[0].mxu0
        %v3594 = vpop.f32.mrb[0].mxu0
        %v3595 = vadd.f32 0.0, %v3594
        %v3596 = vpop.f32.mrb[0].mxu0
        %3597 = vmatprep.mubr.bf16.mxu0 0
        %3598 = vmatmul.mubr.bf16.gmra.mrb[0].mxu0 %v3329
        %v3599 = vpop.f32.mrb[0].mxu0
        %v3600 = vadd.f32 0.0, %v3599
        %v3601 = vpop.f32.mrb[0].mxu0
        %v3602 = vpop.f32.mrb[0].mxu0
        %v3603 = vadd.f32 0.0, %v3602
        %v3604 = vpop.f32.mrb[0].mxu0
        %3605 = vmatprep.mubr.bf16.mxu0 0
        %3606 = vmatmul.mubr.bf16.gmra.mrb[0].mxu0 %v3330
        %v3607 = vpop.f32.mrb[0].mxu0
        %v3608 = vadd.f32 0.0, %v3607
        %v3609 = vpop.f32.mrb[0].mxu0
        %v3610 = vpop.f32.mrb[0].mxu0
        %v3611 = vadd.f32 0.0, %v3610
        %v3612 = vpop.f32.mrb[0].mxu0
        %3613 = vmatprep.mubr.bf16.mxu0 0
        %3614 = vmatmul.mubr.bf16.gmra.mrb[0].mxu0 %v3331
        %v3615 = vpop.f32.mrb[0].mxu0
        %v3616 = vadd.f32 0.0, %v3615
        %v3617 = vpop.f32.mrb[0].mxu0
        %v3618 = vpop.f32.mrb[0].mxu0
        %v3619 = vadd.f32 0.0, %v3618
        %v3620 = vpop.f32.mrb[0].mxu0
        %3621 = vmatprep.mubr.bf16.mxu0 0
        %3622 = vmatmul.mubr.bf16.gmra.mrb[0].mxu0 %v3332
        %v3623 = vpop.f32.mrb[0].mxu0
        %v3624 = vadd.f32 0.0, %v3623
        %v3625 = vpop.f32.mrb[0].mxu0
        %v3626 = vpop.f32.mrb[0].mxu0
        %v3627 = vadd.f32 0.0, %v3626
        %v3628 = vpop.f32.mrb[0].mxu0
        %3629 = vmatprep.mubr.bf16.mxu0 0
        %3630 = vmatmul.mubr.bf16.gmra.mrb[0].mxu0 %v3333
        %v3631 = vpop.f32.mrb[0].mxu0
        %v3632 = vadd.f32 0.0, %v3631
        %v3633 = vpop.f32.mrb[0].mxu0
        %v3634 = vpop.f32.mrb[0].mxu0
        %v3635 = vadd.f32 0.0, %v3634
        %v3636 = vpop.f32.mrb[0].mxu0
        %3637 = vmatprep.mubr.bf16.mxu0 0
        %3638 = vmatmul.mubr.bf16.gmra.mrb[0].mxu0 %v3334
        %v3639 = vpop.f32.mrb[0].mxu0
        %v3640 = vadd.f32 0.0, %v3639
        %v3641 = vpop.f32.mrb[0].mxu0
        %v3642 = vpop.f32.mrb[0].mxu0
        %v3643 = vadd.f32 0.0, %v3642
        %v3644 = vpop.f32.mrb[0].mxu0
        %3645 = vmatprep.mubr.bf16.mxu0 0
        %3646 = vmatmul.mubr.bf16.gmra.mrb[0].mxu0 %v3335
        %v3647 = vpop.f32.mrb[0].mxu0
        %v3648 = vadd.f32 0.0, %v3647
        %v3649 = vpop.f32.mrb[0].mxu0
        %v3650 = vpop.f32.mrb[0].mxu0
        %v3651 = vadd.f32 0.0, %v3650
        %v3652 = vpop.f32.mrb[0].mxu0
        %3653 = vmatprep.mubr.bf16.mxu0 0
        %3654 = vmatmul.mubr.bf16.gmra.mrb[0].mxu0 %v3336
        %v3655 = vpop.f32.mrb[0].mxu0
        %v3656 = vadd.f32 0.0, %v3655
        %v3657 = vpop.f32.mrb[0].mxu0
        %v3658 = vpop.f32.mrb[0].mxu0
        %v3659 = vadd.f32 0.0, %v3658
        %v3660 = vpop.f32.mrb[0].mxu0
        %3661 = vmatprep.mubr.bf16.mxu0 0
        %3662 = vmatmul.mubr.bf16.gmra.mrb[0].mxu0 %v3337
        %v3663 = vpop.f32.mrb[0].mxu0
        %v3664 = vadd.f32 0.0, %v3663
        %v3665 = vpop.f32.mrb[0].mxu0
        %v3666 = vpop.f32.mrb[0].mxu0
        %v3667 = vadd.f32 0.0, %v3666
        %v3668 = vpop.f32.mrb[0].mxu0
        %3669 = vmatprep.mubr.bf16.mxu0 0
        %3670 = vmatmul.mubr.bf16.gmra.mrb[0].mxu0 %v3338
        %v3671 = vpop.f32.mrb[0].mxu0
        %v3672 = vadd.f32 0.0, %v3671
        %v3673 = vpop.f32.mrb[0].mxu0
        %v3674 = vpop.f32.mrb[0].mxu0
        %v3675 = vadd.f32 0.0, %v3674
        %v3676 = vpop.f32.mrb[0].mxu0
        %3677 = vmatprep.mubr.bf16.mxu0 0
        %3678 = vmatmul.mubr.bf16.gmra.mrb[0].mxu0 %v3339
        %v3679 = vpop.f32.mrb[0].mxu0
        %v3680 = vadd.f32 0.0, %v3679
        %v3681 = vpop.f32.mrb[0].mxu0
        %v3682 = vpop.f32.mrb[0].mxu0
        %v3683 = vadd.f32 0.0, %v3682
        %v3684 = vpop.f32.mrb[0].mxu0
        %3685 = vmatprep.mubr.bf16.mxu0 0
        %3686 = vmatmul.mubr.bf16.gmra.mrb[0].mxu0 %v3340
        %v3687 = vpop.f32.mrb[0].mxu0
        %v3688 = vadd.f32 0.0, %v3687
        %v3689 = vpop.f32.mrb[0].mxu0
        %v3690 = vpop.f32.mrb[0].mxu0
        %v3691 = vadd.f32 0.0, %v3690
        %v3692 = vpop.f32.mrb[0].mxu0
        %3693 = vdwg.mxu0
        %v3694 = vld [vmem:[%s11] sm:$0x1]
        %v3695 = vld [vmem:[%s12] sm:$0x1]
        %v3696 = vadd.f32 %v3440, %v3443
        %v3697 = vadd.f32 %v3696, %v3448
        %v3698 = vadd.f32 %v3697, %v3451
        %v3699 = vadd.f32 %v3698, %v3456
        %v3700 = vadd.f32 %v3699, %v3459
        %v3701 = vadd.f32 %v3700, %v3464
        %v3702 = vadd.f32 %v3701, %v3467
        %v3703 = vadd.f32 %v3702, %v3472
        %v3704 = vadd.f32 %v3703, %v3475
        %v3705 = vadd.f32 %v3704, %v3480
        %v3706 = vadd.f32 %v3705, %v3483
        %v3707 = vadd.f32 %v3706, %v3488
        %v3708 = vadd.f32 %v3707, %v3491
        %v3709 = vadd.f32 %v3708, %v3496
        %v3710 = vadd.f32 %v3709, %v3499
        %v3711 = vadd.f32 %v3710, %v3504
        %v3712 = vadd.f32 %v3711, %v3507
        %v3713 = vadd.f32 %v3712, %v3512
        %v3714 = vadd.f32 %v3713, %v3515
        %v3715 = vadd.f32 %v3714, %v3520
        %v3716 = vadd.f32 %v3715, %v3523
        %v3717 = vadd.f32 %v3716, %v3528
        %v3718 = vadd.f32 %v3717, %v3531
        %v3719 = vadd.f32 %v3718, %v3536
        %v3720 = vadd.f32 %v3719, %v3539
        %v3721 = vadd.f32 %v3720, %v3544
        %v3722 = vadd.f32 %v3721, %v3547
        %v3723 = vadd.f32 %v3722, %v3552
        %v3724 = vadd.f32 %v3723, %v3555
        %v3725 = vadd.f32 %v3724, %v3560
        %v3726 = vadd.f32 %v3725, %v3563
        %v3727 = vrot.slane %v3726, 4
        %v3728 = vadd.f32 %v3726, %v3727
        %v3729 = vrot.slane %v3728, 2
        %v3730 = vadd.f32 %v3728, %v3729
        %v3731 = vrot.slane %v3730, 1
        %v3732 = vadd.f32 %v3730, %v3731
        %v3733 = vadd.f32 %v3568, %v3571
        %v3734 = vadd.f32 %v3733, %v3576
        %v3735 = vadd.f32 %v3734, %v3579
        %v3736 = vadd.f32 %v3735, %v3584
        %v3737 = vadd.f32 %v3736, %v3587
        %v3738 = vadd.f32 %v3737, %v3592
        %v3739 = vadd.f32 %v3738, %v3595
        %v3740 = vadd.f32 %v3739, %v3600
        %v3741 = vadd.f32 %v3740, %v3603
        %v3742 = vadd.f32 %v3741, %v3608
        %v3743 = vadd.f32 %v3742, %v3611
        %v3744 = vadd.f32 %v3743, %v3616
        %v3745 = vadd.f32 %v3744, %v3619
        %v3746 = vadd.f32 %v3745, %v3624
        %v3747 = vadd.f32 %v3746, %v3627
        %v3748 = vadd.f32 %v3747, %v3632
        %v3749 = vadd.f32 %v3748, %v3635
        %v3750 = vadd.f32 %v3749, %v3640
        %v3751 = vadd.f32 %v3750, %v3643
        %v3752 = vadd.f32 %v3751, %v3648
        %v3753 = vadd.f32 %v3752, %v3651
        %v3754 = vadd.f32 %v3753, %v3656
        %v3755 = vadd.f32 %v3754, %v3659
        %v3756 = vadd.f32 %v3755, %v3664
        %v3757 = vadd.f32 %v3756, %v3667
        %v3758 = vadd.f32 %v3757, %v3672
        %v3759 = vadd.f32 %v3758, %v3675
        %v3760 = vadd.f32 %v3759, %v3680
        %v3761 = vadd.f32 %v3760, %v3683
        %v3762 = vadd.f32 %v3761, %v3688
        %v3763 = vadd.f32 %v3762, %v3691
        %v3764 = vrot.slane %v3763, 4
        %v3765 = vadd.f32 %v3763, %v3764
        %v3766 = vrot.slane %v3765, 2
        %v3767 = vadd.f32 %v3765, %v3766
        %v3768 = vrot.slane %v3767, 1
        %v3769 = vadd.f32 %v3767, %v3768
        %v3770 = vmul.f32 %v3732, %v2099
        %v3771 = vmul.f32 %v3769, %v2099
        %v3772 = vmul.f32 %v3440, %v3440
        %v3773 = vmul.f32 %v3443, %v3443
        %v3774 = vmul.f32 %v3448, %v3448
        %v3775 = vmul.f32 %v3451, %v3451
        %v3776 = vmul.f32 %v3456, %v3456
        %v3777 = vmul.f32 %v3459, %v3459
        %v3778 = vmul.f32 %v3464, %v3464
        %v3779 = vmul.f32 %v3467, %v3467
        %v3780 = vmul.f32 %v3472, %v3472
        %v3781 = vmul.f32 %v3475, %v3475
        %v3782 = vmul.f32 %v3480, %v3480
        %v3783 = vmul.f32 %v3483, %v3483
        %v3784 = vmul.f32 %v3488, %v3488
        %v3785 = vmul.f32 %v3491, %v3491
        %v3786 = vmul.f32 %v3496, %v3496
        %v3787 = vmul.f32 %v3499, %v3499
        %v3788 = vmul.f32 %v3504, %v3504
        %v3789 = vmul.f32 %v3507, %v3507
        %v3790 = vmul.f32 %v3512, %v3512
        %v3791 = vmul.f32 %v3515, %v3515
        %v3792 = vmul.f32 %v3520, %v3520
        %v3793 = vmul.f32 %v3523, %v3523
        %v3794 = vmul.f32 %v3528, %v3528
        %v3795 = vmul.f32 %v3531, %v3531
        %v3796 = vmul.f32 %v3536, %v3536
        %v3797 = vmul.f32 %v3539, %v3539
        %v3798 = vmul.f32 %v3544, %v3544
        %v3799 = vmul.f32 %v3547, %v3547
        %v3800 = vmul.f32 %v3552, %v3552
        %v3801 = vmul.f32 %v3555, %v3555
        %v3802 = vmul.f32 %v3560, %v3560
        %v3803 = vmul.f32 %v3563, %v3563
        %v3804 = vmul.f32 %v3568, %v3568
        %v3805 = vmul.f32 %v3571, %v3571
        %v3806 = vmul.f32 %v3576, %v3576
        %v3807 = vmul.f32 %v3579, %v3579
        %v3808 = vmul.f32 %v3584, %v3584
        %v3809 = vmul.f32 %v3587, %v3587
        %v3810 = vmul.f32 %v3592, %v3592
        %v3811 = vmul.f32 %v3595, %v3595
        %v3812 = vmul.f32 %v3600, %v3600
        %v3813 = vmul.f32 %v3603, %v3603
        %v3814 = vmul.f32 %v3608, %v3608
        %v3815 = vmul.f32 %v3611, %v3611
        %v3816 = vmul.f32 %v3616, %v3616
        %v3817 = vmul.f32 %v3619, %v3619
        %v3818 = vmul.f32 %v3624, %v3624
        %v3819 = vmul.f32 %v3627, %v3627
        %v3820 = vmul.f32 %v3632, %v3632
        %v3821 = vmul.f32 %v3635, %v3635
        %v3822 = vmul.f32 %v3640, %v3640
        %v3823 = vmul.f32 %v3643, %v3643
        %v3824 = vmul.f32 %v3648, %v3648
        %v3825 = vmul.f32 %v3651, %v3651
        %v3826 = vmul.f32 %v3656, %v3656
        %v3827 = vmul.f32 %v3659, %v3659
        %v3828 = vmul.f32 %v3664, %v3664
        %v3829 = vmul.f32 %v3667, %v3667
        %v3830 = vmul.f32 %v3672, %v3672
        %v3831 = vmul.f32 %v3675, %v3675
        %v3832 = vmul.f32 %v3680, %v3680
        %v3833 = vmul.f32 %v3683, %v3683
        %v3834 = vmul.f32 %v3688, %v3688
        %v3835 = vmul.f32 %v3691, %v3691
        %v3836 = vadd.f32 %v3772, %v3773
        %v3837 = vadd.f32 %v3836, %v3774
        %v3838 = vadd.f32 %v3837, %v3775
        %v3839 = vadd.f32 %v3838, %v3776
        %v3840 = vadd.f32 %v3839, %v3777
        %v3841 = vadd.f32 %v3840, %v3778
        %v3842 = vadd.f32 %v3841, %v3779
        %v3843 = vadd.f32 %v3842, %v3780
        %v3844 = vadd.f32 %v3843, %v3781
        %v3845 = vadd.f32 %v3844, %v3782
        %v3846 = vadd.f32 %v3845, %v3783
        %v3847 = vadd.f32 %v3846, %v3784
        %v3848 = vadd.f32 %v3847, %v3785
        %v3849 = vadd.f32 %v3848, %v3786
        %v3850 = vadd.f32 %v3849, %v3787
        %v3851 = vadd.f32 %v3850, %v3788
        %v3852 = vadd.f32 %v3851, %v3789
        %v3853 = vadd.f32 %v3852, %v3790
        %v3854 = vadd.f32 %v3853, %v3791
        %v3855 = vadd.f32 %v3854, %v3792
        %v3856 = vadd.f32 %v3855, %v3793
        %v3857 = vadd.f32 %v3856, %v3794
        %v3858 = vadd.f32 %v3857, %v3795
        %v3859 = vadd.f32 %v3858, %v3796
        %v3860 = vadd.f32 %v3859, %v3797
        %v3861 = vadd.f32 %v3860, %v3798
        %v3862 = vadd.f32 %v3861, %v3799
        %v3863 = vadd.f32 %v3862, %v3800
        %v3864 = vadd.f32 %v3863, %v3801
        %v3865 = vadd.f32 %v3864, %v3802
        %v3866 = vadd.f32 %v3865, %v3803
        %v3867 = vrot.slane %v3866, 4
        %v3868 = vadd.f32 %v3866, %v3867
        %v3869 = vrot.slane %v3868, 2
        %v3870 = vadd.f32 %v3868, %v3869
        %v3871 = vrot.slane %v3870, 1
        %v3872 = vadd.f32 %v3870, %v3871
        %v3873 = vadd.f32 %v3804, %v3805
        %v3874 = vadd.f32 %v3873, %v3806
        %v3875 = vadd.f32 %v3874, %v3807
        %v3876 = vadd.f32 %v3875, %v3808
        %v3877 = vadd.f32 %v3876, %v3809
        %v3878 = vadd.f32 %v3877, %v3810
        %v3879 = vadd.f32 %v3878, %v3811
        %v3880 = vadd.f32 %v3879, %v3812
        %v3881 = vadd.f32 %v3880, %v3813
        %v3882 = vadd.f32 %v3881, %v3814
        %v3883 = vadd.f32 %v3882, %v3815
        %v3884 = vadd.f32 %v3883, %v3816
        %v3885 = vadd.f32 %v3884, %v3817
        %v3886 = vadd.f32 %v3885, %v3818
        %v3887 = vadd.f32 %v3886, %v3819
        %v3888 = vadd.f32 %v3887, %v3820
        %v3889 = vadd.f32 %v3888, %v3821
        %v3890 = vadd.f32 %v3889, %v3822
        %v3891 = vadd.f32 %v3890, %v3823
        %v3892 = vadd.f32 %v3891, %v3824
        %v3893 = vadd.f32 %v3892, %v3825
        %v3894 = vadd.f32 %v3893, %v3826
        %v3895 = vadd.f32 %v3894, %v3827
        %v3896 = vadd.f32 %v3895, %v3828
        %v3897 = vadd.f32 %v3896, %v3829
        %v3898 = vadd.f32 %v3897, %v3830
        %v3899 = vadd.f32 %v3898, %v3831
        %v3900 = vadd.f32 %v3899, %v3832
        %v3901 = vadd.f32 %v3900, %v3833
        %v3902 = vadd.f32 %v3901, %v3834
        %v3903 = vadd.f32 %v3902, %v3835
        %v3904 = vrot.slane %v3903, 4
        %v3905 = vadd.f32 %v3903, %v3904
        %v3906 = vrot.slane %v3905, 2
        %v3907 = vadd.f32 %v3905, %v3906
        %v3908 = vrot.slane %v3907, 1
        %v3909 = vadd.f32 %v3907, %v3908
        %v3910 = vmul.f32 %v3872, %v2099
        %v3911 = vmul.f32 %v3909, %v2099
        %v3912 = vmul.f32 %v3770, %v3770
        %v3913 = vmul.f32 %v3771, %v3771
        %v3914 = vsub.f32 %v3910, %v3912
        %v3915 = vsub.f32 %v3911, %v3913
        %v3916 = vmax.f32 %v3914, 0.0
        %v3917 = vmax.f32 %v3915, 0.0
        %v3918 = vadd.f32 %v3916, 1e-05
        %v3919 = vadd.f32 %v3917, 1e-05
        %v3920 = vrsqrt.pop %v3918
        %v3921 = vrsqrt.pop %v3919
        %v3922 = vmul.f32 %v3694, %v3920
        %v3923 = vmul.f32 %v3694, %v3921
        %v3924 = vmul.f32 %v3770, %v3922
        %v3925 = vmul.f32 %v3771, %v3923
        %v3926 = vsub.f32 %v3695, %v3924
        %v3927 = vsub.f32 %v3695, %v3925
        %v3930 = vlaneseq
        %v3931 = vshrl.u32 %v3930, 7
        %v3932 = vsub.s32 0, %v3931
        %v3933 = vrot.slane %v3922, %v3932
        %v3934 = vlaneseq
        %v3935 = vshrl.u32 %v3934, 7
        %v3936 = vsub.s32 0, %v3935
        %v3937 = vrot.slane %v3923, %v3936
        %v3940 = vmul.f32 %v3440, %v3933
        %v3941 = vmul.f32 %v3443, %v3933
        %v3942 = vmul.f32 %v3448, %v3933
        %v3943 = vmul.f32 %v3451, %v3933
        %v3944 = vmul.f32 %v3456, %v3933
        %v3945 = vmul.f32 %v3459, %v3933
        %v3946 = vmul.f32 %v3464, %v3933
        %v3947 = vmul.f32 %v3467, %v3933
        %v3948 = vmul.f32 %v3472, %v3933
        %v3949 = vmul.f32 %v3475, %v3933
        %v3950 = vmul.f32 %v3480, %v3933
        %v3951 = vmul.f32 %v3483, %v3933
        %v3952 = vmul.f32 %v3488, %v3933
        %v3953 = vmul.f32 %v3491, %v3933
        %v3954 = vmul.f32 %v3496, %v3933
        %v3955 = vmul.f32 %v3499, %v3933
        %v3956 = vmul.f32 %v3504, %v3933
        %v3957 = vmul.f32 %v3507, %v3933
        %v3958 = vmul.f32 %v3512, %v3933
        %v3959 = vmul.f32 %v3515, %v3933
        %v3960 = vmul.f32 %v3520, %v3933
        %v3961 = vmul.f32 %v3523, %v3933
        %v3962 = vmul.f32 %v3528, %v3933
        %v3963 = vmul.f32 %v3531, %v3933
        %v3964 = vmul.f32 %v3536, %v3933
        %v3965 = vmul.f32 %v3539, %v3933
        %v3966 = vmul.f32 %v3544, %v3933
        %v3967 = vmul.f32 %v3547, %v3933
        %v3968 = vmul.f32 %v3552, %v3933
        %v3969 = vmul.f32 %v3555, %v3933
        %v3970 = vmul.f32 %v3560, %v3933
        %v3971 = vmul.f32 %v3563, %v3933
        %v3972 = vmul.f32 %v3568, %v3937
        %v3973 = vmul.f32 %v3571, %v3937
        %v3974 = vmul.f32 %v3576, %v3937
        %v3975 = vmul.f32 %v3579, %v3937
        %v3976 = vmul.f32 %v3584, %v3937
        %v3977 = vmul.f32 %v3587, %v3937
        %v3978 = vmul.f32 %v3592, %v3937
        %v3979 = vmul.f32 %v3595, %v3937
        %v3980 = vmul.f32 %v3600, %v3937
        %v3981 = vmul.f32 %v3603, %v3937
        %v3982 = vmul.f32 %v3608, %v3937
        %v3983 = vmul.f32 %v3611, %v3937
        %v3984 = vmul.f32 %v3616, %v3937
        %v3985 = vmul.f32 %v3619, %v3937
        %v3986 = vmul.f32 %v3624, %v3937
        %v3987 = vmul.f32 %v3627, %v3937
        %v3988 = vmul.f32 %v3632, %v3937
        %v3989 = vmul.f32 %v3635, %v3937
        %v3990 = vmul.f32 %v3640, %v3937
        %v3991 = vmul.f32 %v3643, %v3937
        %v3992 = vmul.f32 %v3648, %v3937
        %v3993 = vmul.f32 %v3651, %v3937
        %v3994 = vmul.f32 %v3656, %v3937
        %v3995 = vmul.f32 %v3659, %v3937
        %v3996 = vmul.f32 %v3664, %v3937
        %v3997 = vmul.f32 %v3667, %v3937
        %v3998 = vmul.f32 %v3672, %v3937
        %v3999 = vmul.f32 %v3675, %v3937
        %v4000 = vmul.f32 %v3680, %v3937
        %v4001 = vmul.f32 %v3683, %v3937
        %v4002 = vmul.f32 %v3688, %v3937
        %v4003 = vmul.f32 %v3691, %v3937
        %v4006 = vlaneseq
        %v4007 = vshrl.u32 %v4006, 7
        %v4008 = vsub.s32 0, %v4007
        %v4009 = vrot.slane %v3926, %v4008
        %v4010 = vlaneseq
        %v4011 = vshrl.u32 %v4010, 7
        %v4012 = vsub.s32 0, %v4011
        %v4013 = vrot.slane %v3927, %v4012
        %v4016 = vadd.f32 %v3940, %v4009
        %v4017 = vadd.f32 %v3941, %v4009
        %v4018 = vadd.f32 %v3942, %v4009
        %v4019 = vadd.f32 %v3943, %v4009
        %v4020 = vadd.f32 %v3944, %v4009
        %v4021 = vadd.f32 %v3945, %v4009
        %v4022 = vadd.f32 %v3946, %v4009
        %v4023 = vadd.f32 %v3947, %v4009
        %v4024 = vadd.f32 %v3948, %v4009
        %v4025 = vadd.f32 %v3949, %v4009
        %v4026 = vadd.f32 %v3950, %v4009
        %v4027 = vadd.f32 %v3951, %v4009
        %v4028 = vadd.f32 %v3952, %v4009
        %v4029 = vadd.f32 %v3953, %v4009
        %v4030 = vadd.f32 %v3954, %v4009
        %v4031 = vadd.f32 %v3955, %v4009
        %v4032 = vadd.f32 %v3956, %v4009
        %v4033 = vadd.f32 %v3957, %v4009
        %v4034 = vadd.f32 %v3958, %v4009
        %v4035 = vadd.f32 %v3959, %v4009
        %v4036 = vadd.f32 %v3960, %v4009
        %v4037 = vadd.f32 %v3961, %v4009
        %v4038 = vadd.f32 %v3962, %v4009
        %v4039 = vadd.f32 %v3963, %v4009
        %v4040 = vadd.f32 %v3964, %v4009
        %v4041 = vadd.f32 %v3965, %v4009
        %v4042 = vadd.f32 %v3966, %v4009
        %v4043 = vadd.f32 %v3967, %v4009
        %v4044 = vadd.f32 %v3968, %v4009
        %v4045 = vadd.f32 %v3969, %v4009
        %v4046 = vadd.f32 %v3970, %v4009
        %v4047 = vadd.f32 %v3971, %v4009
        %v4048 = vadd.f32 %v3972, %v4013
        %v4049 = vadd.f32 %v3973, %v4013
        %v4050 = vadd.f32 %v3974, %v4013
        %v4051 = vadd.f32 %v3975, %v4013
        %v4052 = vadd.f32 %v3976, %v4013
        %v4053 = vadd.f32 %v3977, %v4013
        %v4054 = vadd.f32 %v3978, %v4013
        %v4055 = vadd.f32 %v3979, %v4013
        %v4056 = vadd.f32 %v3980, %v4013
        %v4057 = vadd.f32 %v3981, %v4013
        %v4058 = vadd.f32 %v3982, %v4013
        %v4059 = vadd.f32 %v3983, %v4013
        %v4060 = vadd.f32 %v3984, %v4013
        %v4061 = vadd.f32 %v3985, %v4013
        %v4062 = vadd.f32 %v3986, %v4013
        %v4063 = vadd.f32 %v3987, %v4013
        %v4064 = vadd.f32 %v3988, %v4013
        %v4065 = vadd.f32 %v3989, %v4013
        %v4066 = vadd.f32 %v3990, %v4013
        %v4067 = vadd.f32 %v3991, %v4013
        %v4068 = vadd.f32 %v3992, %v4013
        %v4069 = vadd.f32 %v3993, %v4013
        %v4070 = vadd.f32 %v3994, %v4013
        %v4071 = vadd.f32 %v3995, %v4013
        %v4072 = vadd.f32 %v3996, %v4013
        %v4073 = vadd.f32 %v3997, %v4013
        %v4074 = vadd.f32 %v3998, %v4013
        %v4075 = vadd.f32 %v3999, %v4013
        %v4076 = vadd.f32 %v4000, %v4013
        %v4077 = vadd.f32 %v4001, %v4013
        %v4078 = vadd.f32 %v4002, %v4013
        %v4079 = vadd.f32 %v4003, %v4013
        %v4080 = vmax.f32 %v4016, 0.0
        %v4081 = vmax.f32 %v4017, 0.0
        %v4082 = vmax.f32 %v4018, 0.0
        %v4083 = vmax.f32 %v4019, 0.0
        %v4084 = vmax.f32 %v4020, 0.0
        %v4085 = vmax.f32 %v4021, 0.0
        %v4086 = vmax.f32 %v4022, 0.0
        %v4087 = vmax.f32 %v4023, 0.0
        %v4088 = vmax.f32 %v4024, 0.0
        %v4089 = vmax.f32 %v4025, 0.0
        %v4090 = vmax.f32 %v4026, 0.0
        %v4091 = vmax.f32 %v4027, 0.0
        %v4092 = vmax.f32 %v4028, 0.0
        %v4093 = vmax.f32 %v4029, 0.0
        %v4094 = vmax.f32 %v4030, 0.0
        %v4095 = vmax.f32 %v4031, 0.0
        %v4096 = vmax.f32 %v4032, 0.0
        %v4097 = vmax.f32 %v4033, 0.0
        %v4098 = vmax.f32 %v4034, 0.0
        %v4099 = vmax.f32 %v4035, 0.0
        %v4100 = vmax.f32 %v4036, 0.0
        %v4101 = vmax.f32 %v4037, 0.0
        %v4102 = vmax.f32 %v4038, 0.0
        %v4103 = vmax.f32 %v4039, 0.0
        %v4104 = vmax.f32 %v4040, 0.0
        %v4105 = vmax.f32 %v4041, 0.0
        %v4106 = vmax.f32 %v4042, 0.0
        %v4107 = vmax.f32 %v4043, 0.0
        %v4108 = vmax.f32 %v4044, 0.0
        %v4109 = vmax.f32 %v4045, 0.0
        %v4110 = vmax.f32 %v4046, 0.0
        %v4111 = vmax.f32 %v4047, 0.0
        %v4112 = vmax.f32 %v4048, 0.0
        %v4113 = vmax.f32 %v4049, 0.0
        %v4114 = vmax.f32 %v4050, 0.0
        %v4115 = vmax.f32 %v4051, 0.0
        %v4116 = vmax.f32 %v4052, 0.0
        %v4117 = vmax.f32 %v4053, 0.0
        %v4118 = vmax.f32 %v4054, 0.0
        %v4119 = vmax.f32 %v4055, 0.0
        %v4120 = vmax.f32 %v4056, 0.0
        %v4121 = vmax.f32 %v4057, 0.0
        %v4122 = vmax.f32 %v4058, 0.0
        %v4123 = vmax.f32 %v4059, 0.0
        %v4124 = vmax.f32 %v4060, 0.0
        %v4125 = vmax.f32 %v4061, 0.0
        %v4126 = vmax.f32 %v4062, 0.0
        %v4127 = vmax.f32 %v4063, 0.0
        %v4128 = vmax.f32 %v4064, 0.0
        %v4129 = vmax.f32 %v4065, 0.0
        %v4130 = vmax.f32 %v4066, 0.0
        %v4131 = vmax.f32 %v4067, 0.0
        %v4132 = vmax.f32 %v4068, 0.0
        %v4133 = vmax.f32 %v4069, 0.0
        %v4134 = vmax.f32 %v4070, 0.0
        %v4135 = vmax.f32 %v4071, 0.0
        %v4136 = vmax.f32 %v4072, 0.0
        %v4137 = vmax.f32 %v4073, 0.0
        %v4138 = vmax.f32 %v4074, 0.0
        %v4139 = vmax.f32 %v4075, 0.0
        %v4140 = vmax.f32 %v4076, 0.0
        %v4141 = vmax.f32 %v4077, 0.0
        %v4142 = vmax.f32 %v4078, 0.0
        %v4143 = vmax.f32 %v4079, 0.0
        %v4144 = vpack.c.bf16 %v4081, %v4080
        %v4145 = vpack.c.bf16 %v4083, %v4082
        %v4146 = vpack.c.bf16 %v4085, %v4084
        %v4147 = vpack.c.bf16 %v4087, %v4086
        %v4148 = vpack.c.bf16 %v4089, %v4088
        %v4149 = vpack.c.bf16 %v4091, %v4090
        %v4150 = vpack.c.bf16 %v4093, %v4092
        %v4151 = vpack.c.bf16 %v4095, %v4094
        %v4152 = vpack.c.bf16 %v4097, %v4096
        %v4153 = vpack.c.bf16 %v4099, %v4098
        %v4154 = vpack.c.bf16 %v4101, %v4100
        %v4155 = vpack.c.bf16 %v4103, %v4102
        %v4156 = vpack.c.bf16 %v4105, %v4104
        %v4157 = vpack.c.bf16 %v4107, %v4106
        %v4158 = vpack.c.bf16 %v4109, %v4108
        %v4159 = vpack.c.bf16 %v4111, %v4110
        %v4160 = vpack.c.bf16 %v4113, %v4112
        %v4161 = vpack.c.bf16 %v4115, %v4114
        %v4162 = vpack.c.bf16 %v4117, %v4116
        %v4163 = vpack.c.bf16 %v4119, %v4118
        %v4164 = vpack.c.bf16 %v4121, %v4120
        %v4165 = vpack.c.bf16 %v4123, %v4122
        %v4166 = vpack.c.bf16 %v4125, %v4124
        %v4167 = vpack.c.bf16 %v4127, %v4126
        %v4168 = vpack.c.bf16 %v4129, %v4128
        %v4169 = vpack.c.bf16 %v4131, %v4130
        %v4170 = vpack.c.bf16 %v4133, %v4132
        %v4171 = vpack.c.bf16 %v4135, %v4134
        %v4172 = vpack.c.bf16 %v4137, %v4136
        %v4173 = vpack.c.bf16 %v4139, %v4138
        %v4174 = vpack.c.bf16 %v4141, %v4140
        %v4175 = vpack.c.bf16 %v4143, %v4142
        %v4176 = vmax.bf16 %v4144, %v4146
        %v4177 = vmax.bf16 %v4176, %v4148
        %v4178 = vmax.bf16 %v4177, %v4150
        %v4179 = vmax.bf16 %v4178, %v4152
        %v4180 = vmax.bf16 %v4179, %v4154
        %v4181 = vmax.bf16 %v4180, %v4156
        %v4182 = vmax.bf16 %v4181, %v4158
        %v4183 = vmax.bf16 %v4145, %v4147
        %v4184 = vmax.bf16 %v4183, %v4149
        %v4185 = vmax.bf16 %v4184, %v4151
        %v4186 = vmax.bf16 %v4185, %v4153
        %v4187 = vmax.bf16 %v4186, %v4155
        %v4188 = vmax.bf16 %v4187, %v4157
        %v4189 = vmax.bf16 %v4188, %v4159
        %v4190 = vmax.bf16 %v4160, %v4162
        %v4191 = vmax.bf16 %v4190, %v4164
        %v4192 = vmax.bf16 %v4191, %v4166
        %v4193 = vmax.bf16 %v4192, %v4168
        %v4194 = vmax.bf16 %v4193, %v4170
        %v4195 = vmax.bf16 %v4194, %v4172
        %v4196 = vmax.bf16 %v4195, %v4174
        %v4197 = vmax.bf16 %v4161, %v4163
        %v4198 = vmax.bf16 %v4197, %v4165
        %v4199 = vmax.bf16 %v4198, %v4167
        %v4200 = vmax.bf16 %v4199, %v4169
        %v4201 = vmax.bf16 %v4200, %v4171
        %v4202 = vmax.bf16 %v4201, %v4173
        %v4203 = vmax.bf16 %v4202, %v4175
        %v4204 = vld [vmem:[%s13] sm:$0x7]
        %v4205 = vlaneseq
        %v4206 = vshrl.u32 %v4205, 7
        %v4207 = vsub.s32 0, %v4206
        %v4208 = vrot.slane %v4204, %v4207
        %v4209 = vmul.f32 %v615, %v4208
        %v4210 = vmul.f32 %v620, %v4208
        %v4211 = vmul.f32 %v625, %v4208
        %v4212 = vmul.f32 %v630, %v4208
        %v4213 = vmul.f32 %v978, %v4208
        %v4214 = vmul.f32 %v983, %v4208
        %v4215 = vmul.f32 %v988, %v4208
        %v4216 = vmul.f32 %v993, %v4208
        %v4217 = vlaneseq
        %v4218 = vshrl.u32 %v4217, 7
        %v4219 = vsub.s32 1, %v4218
        %v4220 = vrot.slane %v4204, %v4219
        %v4221 = vmul.f32 %v650, %v4220
        %v4222 = vmul.f32 %v654, %v4220
        %v4223 = vmul.f32 %v658, %v4220
        %v4224 = vmul.f32 %v662, %v4220
        %v4225 = vmul.f32 %v1013, %v4220
        %v4226 = vmul.f32 %v1017, %v4220
        %v4227 = vmul.f32 %v1021, %v4220
        %v4228 = vmul.f32 %v1025, %v4220
        %v4229 = vadd.f32 %v4209, %v4221
        %v4230 = vadd.f32 %v4210, %v4222
        %v4231 = vadd.f32 %v4211, %v4223
        %v4232 = vadd.f32 %v4212, %v4224
        %v4233 = vadd.f32 %v4213, %v4225
        %v4234 = vadd.f32 %v4214, %v4226
        %v4235 = vadd.f32 %v4215, %v4227
        %v4236 = vadd.f32 %v4216, %v4228
        %v4237 = vlaneseq
        %v4238 = vshrl.u32 %v4237, 7
        %v4239 = vsub.s32 2, %v4238
        %v4240 = vrot.slane %v4204, %v4239
        %v4241 = vmul.f32 %v682, %v4240
        %v4242 = vmul.f32 %v686, %v4240
        %v4243 = vmul.f32 %v690, %v4240
        %v4244 = vmul.f32 %v694, %v4240
        %v4245 = vmul.f32 %v1045, %v4240
        %v4246 = vmul.f32 %v1049, %v4240
        %v4247 = vmul.f32 %v1053, %v4240
        %v4248 = vmul.f32 %v1057, %v4240
        %v4249 = vadd.f32 %v4229, %v4241
        %v4250 = vadd.f32 %v4230, %v4242
        %v4251 = vadd.f32 %v4231, %v4243
        %v4252 = vadd.f32 %v4232, %v4244
        %v4253 = vadd.f32 %v4233, %v4245
        %v4254 = vadd.f32 %v4234, %v4246
        %v4255 = vadd.f32 %v4235, %v4247
        %v4256 = vadd.f32 %v4236, %v4248
        %v4257 = vld [vmem:[%s14] sm:$0xf]
        %v4258 = vld [vmem:[%s14 + $0x4] sm:$0xf]
        %v4259 = vld [vmem:[%s14 + $0x8] sm:$0xf]
        %v4260 = vld [vmem:[%s14 + $0xc] sm:$0xf]
        %v4261 = vld [vmem:[%s14 + $0x10] sm:$0xf]
        %v4262 = vld [vmem:[%s14 + $0x14] sm:$0xf]
        %v4263 = vld [vmem:[%s14 + $0x18] sm:$0xf]
        %v4264 = vld [vmem:[%s14 + $0x1c] sm:$0xf]
        %v4265 = vld [vmem:[%s14 + $0x20] sm:$0xf]
        %v4266 = vld [vmem:[%s14 + $0x24] sm:$0xf]
        %v4267 = vld [vmem:[%s14 + $0x28] sm:$0xf]
        %v4268 = vld [vmem:[%s14 + $0x2c] sm:$0xf]
        %v4269 = vld [vmem:[%s14 + $0x30] sm:$0xf]
        %v4270 = vld [vmem:[%s14 + $0x34] sm:$0xf]
        %v4271 = vld [vmem:[%s14 + $0x38] sm:$0xf]
        %v4272 = vld [vmem:[%s14 + $0x3c] sm:$0xf]
        %v4289 = vunpack.c.l.b16 %v4257
        %v4290 = vunpack.c.l.b16 %v4258
        %v4291 = vunpack.c.l.b16 %v4259
        %v4292 = vunpack.c.l.b16 %v4260
        %v4293 = vunpack.c.l.b16 %v4261
        %v4294 = vunpack.c.l.b16 %v4262
        %v4295 = vunpack.c.l.b16 %v4263
        %v4296 = vunpack.c.l.b16 %v4264
        %v4297 = vunpack.c.l.b16 %v4265
        %v4298 = vunpack.c.l.b16 %v4266
        %v4299 = vunpack.c.l.b16 %v4267
        %v4300 = vunpack.c.l.b16 %v4268
        %v4301 = vunpack.c.l.b16 %v4269
        %v4302 = vunpack.c.l.b16 %v4270
        %v4303 = vunpack.c.l.b16 %v4271
        %v4304 = vunpack.c.l.b16 %v4272
        %v4305 = vpack.c.b16 %v4290, %v4289
        %v4306 = vpack.c.b16 %v4292, %v4291
        %v4307 = vpack.c.b16 %v4294, %v4293
        %v4308 = vpack.c.b16 %v4296, %v4295
        %v4309 = vpack.c.b16 %v4298, %v4297
        %v4310 = vpack.c.b16 %v4300, %v4299
        %v4311 = vpack.c.b16 %v4302, %v4301
        %v4312 = vpack.c.b16 %v4304, %v4303
        %4321 = vmatprep.subr.bf16.mxu0 0
        %4322 = vmatpush1.bf16.msra.mxu0 %v4305
        %4323 = vmatprep.subr.bf16.mxu0 0
        %4324 = vmatpush1.bf16.msra.mxu0 %v4306
        %4325 = vmatprep.subr.bf16.mxu0 0
        %4326 = vmatpush1.bf16.msra.mxu0 %v4307
        %4327 = vmatprep.subr.bf16.mxu0 0
        %4328 = vmatpush1.bf16.msra.mxu0 %v4308
        %4329 = vmatprep.subr.bf16.mxu0 0
        %4330 = vmatpush1.bf16.msra.mxu0 %v4309
        %4331 = vmatprep.subr.bf16.mxu0 0
        %4332 = vmatpush1.bf16.msra.mxu0 %v4310
        %4333 = vmatprep.subr.bf16.mxu0 0
        %4334 = vmatpush1.bf16.msra.mxu0 %v4311
        %4335 = vmatprep.subr.bf16.mxu0 0
        %4336 = vmatpush1.bf16.msra.mxu0 %v4312
        %4337 = vmatprep.subr.bf16.mxu0 0
        %4338 = vmatpush1.bf16.msra.mxu0 0
        %4339 = vmatprep.subr.bf16.mxu0 0
        %4340 = vmatpush1.bf16.msra.mxu0 0
        %4341 = vmatprep.subr.bf16.mxu0 0
        %4342 = vmatpush1.bf16.msra.mxu0 0
        %4343 = vmatprep.subr.bf16.mxu0 0
        %4344 = vmatpush1.bf16.msra.mxu0 0
        %4345 = vmatprep.subr.bf16.mxu0 0
        %4346 = vmatpush1.bf16.msra.mxu0 0
        %4347 = vmatprep.subr.bf16.mxu0 0
        %4348 = vmatpush1.bf16.msra.mxu0 0
        %4349 = vmatprep.subr.bf16.mxu0 0
        %4350 = vmatpush1.bf16.msra.mxu0 0
        %4351 = vmatprep.subr.bf16.mxu0 0
        %4352 = vmatpush1.bf16.msra.mxu0 0
        %4353 = vmatprep.mubr.bf16.mxu0 0
        %4354 = vmatmul.mubr.bf16.gmra.mrb[0].mxu0 %v4182
        %v4355 = vpop.f32.mrb[0].mxu0
        %v4356 = vadd.f32 0.0, %v4355
        %v4357 = vpop.f32.mrb[0].mxu0
        %v4358 = vpop.f32.mrb[0].mxu0
        %v4359 = vadd.f32 0.0, %v4358
        %v4360 = vpop.f32.mrb[0].mxu0
        %4361 = vmatprep.mubr.bf16.mxu0 0
        %4362 = vmatmul.mubr.bf16.gmra.mrb[0].mxu0 %v4189
        %v4363 = vpop.f32.mrb[0].mxu0
        %v4364 = vadd.f32 0.0, %v4363
        %v4365 = vpop.f32.mrb[0].mxu0
        %v4366 = vpop.f32.mrb[0].mxu0
        %v4367 = vadd.f32 0.0, %v4366
        %v4368 = vpop.f32.mrb[0].mxu0
        %4369 = vmatprep.mubr.bf16.mxu0 0
        %4370 = vmatmul.mubr.bf16.gmra.mrb[0].mxu0 %v4196
        %v4371 = vpop.f32.mrb[0].mxu0
        %v4372 = vadd.f32 0.0, %v4371
        %v4373 = vpop.f32.mrb[0].mxu0
        %v4374 = vpop.f32.mrb[0].mxu0
        %v4375 = vadd.f32 0.0, %v4374
        %v4376 = vpop.f32.mrb[0].mxu0
        %4377 = vmatprep.mubr.bf16.mxu0 0
        %4378 = vmatmul.mubr.bf16.gmra.mrb[0].mxu0 %v4203
        %v4379 = vpop.f32.mrb[0].mxu0
        %v4380 = vadd.f32 0.0, %v4379
        %v4381 = vpop.f32.mrb[0].mxu0
        %v4382 = vpop.f32.mrb[0].mxu0
        %v4383 = vadd.f32 0.0, %v4382
        %v4384 = vpop.f32.mrb[0].mxu0
        %4385 = vdwg.mxu0
        %v4386 = vadd.f32 %v4356, %v4249
        %v4387 = vadd.f32 %v4359, %v4250
        %v4388 = vadd.f32 %v4364, %v4251
        %v4389 = vadd.f32 %v4367, %v4252
        %v4390 = vadd.f32 %v4372, %v4253
        %v4391 = vadd.f32 %v4375, %v4254
        %v4392 = vadd.f32 %v4380, %v4255
        %v4393 = vadd.f32 %v4383, %v4256
        %v4394 = vpack.c.bf16 %v4387, %v4386
        %v4395 = vpack.c.bf16 %v4389, %v4388
        %v4396 = vpack.c.bf16 %v4391, %v4390
        %v4397 = vpack.c.bf16 %v4393, %v4392
        %4398 = vmatprep.subr.bf16.mxu0 0
        %4399 = vmatpush1.bf16.msra.mxu0 %v4394
        %4400 = vmatprep.subr.bf16.mxu0 0
        %4401 = vmatpush1.bf16.msra.mxu0 %v4395
        %4402 = vmatprep.subr.bf16.mxu0 0
        %4403 = vmatpush1.bf16.msra.mxu0 0
        %4404 = vmatprep.subr.bf16.mxu0 0
        %4405 = vmatpush1.bf16.msra.mxu0 0
        %4406 = vmatprep.subr.bf16.mxu0 0
        %4407 = vmatpush1.bf16.msra.mxu0 0
        %4408 = vmatprep.subr.bf16.mxu0 0
        %4409 = vmatpush1.bf16.msra.mxu0 0
        %4410 = vmatprep.subr.bf16.mxu0 0
        %4411 = vmatpush1.bf16.msra.mxu0 0
        %4412 = vmatprep.subr.bf16.mxu0 0
        %4413 = vmatpush1.bf16.msra.mxu0 0
        %4414 = vmatprep.subr.bf16.mxu0 0
        %4415 = vmatpush1.bf16.msra.mxu0 0
        %4416 = vmatprep.subr.bf16.mxu0 0
        %4417 = vmatpush1.bf16.msra.mxu0 0
        %4418 = vmatprep.subr.bf16.mxu0 0
        %4419 = vmatpush1.bf16.msra.mxu0 0
        %4420 = vmatprep.subr.bf16.mxu0 0
        %4421 = vmatpush1.bf16.msra.mxu0 0
        %4422 = vmatprep.subr.bf16.mxu0 0
        %4423 = vmatpush1.bf16.msra.mxu0 0
        %4424 = vmatprep.subr.bf16.mxu0 0
        %4425 = vmatpush1.bf16.msra.mxu0 0
        %4426 = vmatprep.subr.bf16.mxu0 0
        %4427 = vmatpush1.bf16.msra.mxu0 0
        %4428 = vmatprep.subr.bf16.mxu0 0
        %4429 = vmatpush1.bf16.msra.mxu0 0
        %4430 = vmatprep.mubr.bf16.mxu0 0
        %4431 = vmatmul.mubr.bf16.gmra.mrb[0].mxu0 %v1542
        %v4432 = vpop.f32.mrb[0].mxu0
        %v4433 = vadd.f32 0.0, %v4432
        %v4434 = vpop.f32.mrb[0].mxu0
        %v4435 = vpop.f32.mrb[0].mxu0
        %v4436 = vadd.f32 0.0, %v4435
        %v4437 = vpop.f32.mrb[0].mxu0
        %4438 = vmatprep.mubr.bf16.mxu0 0
        %4439 = vmatmul.mubr.bf16.gmra.mrb[0].mxu0 %v1545
        %v4440 = vpop.f32.mrb[0].mxu0
        %v4441 = vadd.f32 0.0, %v4440
        %v4442 = vpop.f32.mrb[0].mxu0
        %v4443 = vpop.f32.mrb[0].mxu0
        %v4444 = vadd.f32 0.0, %v4443
        %v4445 = vpop.f32.mrb[0].mxu0
        %4446 = vmatprep.mubr.bf16.mxu0 0
        %4447 = vmatmul.mubr.bf16.gmra.mrb[0].mxu0 %v1548
        %v4448 = vpop.f32.mrb[0].mxu0
        %v4449 = vadd.f32 0.0, %v4448
        %v4450 = vpop.f32.mrb[0].mxu0
        %v4451 = vpop.f32.mrb[0].mxu0
        %v4452 = vadd.f32 0.0, %v4451
        %v4453 = vpop.f32.mrb[0].mxu0
        %4454 = vmatprep.mubr.bf16.mxu0 0
        %4455 = vmatmul.mubr.bf16.gmra.mrb[0].mxu0 %v1551
        %v4456 = vpop.f32.mrb[0].mxu0
        %v4457 = vadd.f32 0.0, %v4456
        %v4458 = vpop.f32.mrb[0].mxu0
        %v4459 = vpop.f32.mrb[0].mxu0
        %v4460 = vadd.f32 0.0, %v4459
        %v4461 = vpop.f32.mrb[0].mxu0
        %4462 = vmatprep.mubr.bf16.mxu0 0
        %4463 = vmatmul.mubr.bf16.gmra.mrb[0].mxu0 %v1554
        %v4464 = vpop.f32.mrb[0].mxu0
        %v4465 = vadd.f32 0.0, %v4464
        %v4466 = vpop.f32.mrb[0].mxu0
        %v4467 = vpop.f32.mrb[0].mxu0
        %v4468 = vadd.f32 0.0, %v4467
        %v4469 = vpop.f32.mrb[0].mxu0
        %4470 = vmatprep.mubr.bf16.mxu0 0
        %4471 = vmatmul.mubr.bf16.gmra.mrb[0].mxu0 %v1557
        %v4472 = vpop.f32.mrb[0].mxu0
        %v4473 = vadd.f32 0.0, %v4472
        %v4474 = vpop.f32.mrb[0].mxu0
        %v4475 = vpop.f32.mrb[0].mxu0
        %v4476 = vadd.f32 0.0, %v4475
        %v4477 = vpop.f32.mrb[0].mxu0
        %4478 = vmatprep.mubr.bf16.mxu0 0
        %4479 = vmatmul.mubr.bf16.gmra.mrb[0].mxu0 %v1560
        %v4480 = vpop.f32.mrb[0].mxu0
        %v4481 = vadd.f32 0.0, %v4480
        %v4482 = vpop.f32.mrb[0].mxu0
        %v4483 = vpop.f32.mrb[0].mxu0
        %v4484 = vadd.f32 0.0, %v4483
        %v4485 = vpop.f32.mrb[0].mxu0
        %4486 = vmatprep.mubr.bf16.mxu0 0
        %4487 = vmatmul.mubr.bf16.gmra.mrb[0].mxu0 %v1563
        %v4488 = vpop.f32.mrb[0].mxu0
        %v4489 = vadd.f32 0.0, %v4488
        %v4490 = vpop.f32.mrb[0].mxu0
        %v4491 = vpop.f32.mrb[0].mxu0
        %v4492 = vadd.f32 0.0, %v4491
        %v4493 = vpop.f32.mrb[0].mxu0
        %4494 = vmatprep.mubr.bf16.mxu0 0
        %4495 = vmatmul.mubr.bf16.gmra.mrb[0].mxu0 %v1566
        %v4496 = vpop.f32.mrb[0].mxu0
        %v4497 = vadd.f32 0.0, %v4496
        %v4498 = vpop.f32.mrb[0].mxu0
        %v4499 = vpop.f32.mrb[0].mxu0
        %v4500 = vadd.f32 0.0, %v4499
        %v4501 = vpop.f32.mrb[0].mxu0
        %4502 = vmatprep.mubr.bf16.mxu0 0
        %4503 = vmatmul.mubr.bf16.gmra.mrb[0].mxu0 %v1569
        %v4504 = vpop.f32.mrb[0].mxu0
        %v4505 = vadd.f32 0.0, %v4504
        %v4506 = vpop.f32.mrb[0].mxu0
        %v4507 = vpop.f32.mrb[0].mxu0
        %v4508 = vadd.f32 0.0, %v4507
        %v4509 = vpop.f32.mrb[0].mxu0
        %4510 = vmatprep.mubr.bf16.mxu0 0
        %4511 = vmatmul.mubr.bf16.gmra.mrb[0].mxu0 %v1572
        %v4512 = vpop.f32.mrb[0].mxu0
        %v4513 = vadd.f32 0.0, %v4512
        %v4514 = vpop.f32.mrb[0].mxu0
        %v4515 = vpop.f32.mrb[0].mxu0
        %v4516 = vadd.f32 0.0, %v4515
        %v4517 = vpop.f32.mrb[0].mxu0
        %4518 = vmatprep.mubr.bf16.mxu0 0
        %4519 = vmatmul.mubr.bf16.gmra.mrb[0].mxu0 %v1575
        %v4520 = vpop.f32.mrb[0].mxu0
        %v4521 = vadd.f32 0.0, %v4520
        %v4522 = vpop.f32.mrb[0].mxu0
        %v4523 = vpop.f32.mrb[0].mxu0
        %v4524 = vadd.f32 0.0, %v4523
        %v4525 = vpop.f32.mrb[0].mxu0
        %4526 = vmatprep.mubr.bf16.mxu0 0
        %4527 = vmatmul.mubr.bf16.gmra.mrb[0].mxu0 %v1578
        %v4528 = vpop.f32.mrb[0].mxu0
        %v4529 = vadd.f32 0.0, %v4528
        %v4530 = vpop.f32.mrb[0].mxu0
        %v4531 = vpop.f32.mrb[0].mxu0
        %v4532 = vadd.f32 0.0, %v4531
        %v4533 = vpop.f32.mrb[0].mxu0
        %4534 = vmatprep.mubr.bf16.mxu0 0
        %4535 = vmatmul.mubr.bf16.gmra.mrb[0].mxu0 %v1581
        %v4536 = vpop.f32.mrb[0].mxu0
        %v4537 = vadd.f32 0.0, %v4536
        %v4538 = vpop.f32.mrb[0].mxu0
        %v4539 = vpop.f32.mrb[0].mxu0
        %v4540 = vadd.f32 0.0, %v4539
        %v4541 = vpop.f32.mrb[0].mxu0
        %4542 = vmatprep.mubr.bf16.mxu0 0
        %4543 = vmatmul.mubr.bf16.gmra.mrb[0].mxu0 %v1584
        %v4544 = vpop.f32.mrb[0].mxu0
        %v4545 = vadd.f32 0.0, %v4544
        %v4546 = vpop.f32.mrb[0].mxu0
        %v4547 = vpop.f32.mrb[0].mxu0
        %v4548 = vadd.f32 0.0, %v4547
        %v4549 = vpop.f32.mrb[0].mxu0
        %4550 = vmatprep.mubr.bf16.mxu0 0
        %4551 = vmatmul.mubr.bf16.gmra.mrb[0].mxu0 %v1587
        %v4552 = vpop.f32.mrb[0].mxu0
        %v4553 = vadd.f32 0.0, %v4552
        %v4554 = vpop.f32.mrb[0].mxu0
        %v4555 = vpop.f32.mrb[0].mxu0
        %v4556 = vadd.f32 0.0, %v4555
        %v4557 = vpop.f32.mrb[0].mxu0
        %4558 = vdwg.mxu0
        %4559 = vmatprep.subr.bf16.mxu0 0
        %4560 = vmatpush1.bf16.msra.mxu0 %v4396
        %4561 = vmatprep.subr.bf16.mxu0 0
        %4562 = vmatpush1.bf16.msra.mxu0 %v4397
        %4563 = vmatprep.subr.bf16.mxu0 0
        %4564 = vmatpush1.bf16.msra.mxu0 0
        %4565 = vmatprep.subr.bf16.mxu0 0
        %4566 = vmatpush1.bf16.msra.mxu0 0
        %4567 = vmatprep.subr.bf16.mxu0 0
        %4568 = vmatpush1.bf16.msra.mxu0 0
        %4569 = vmatprep.subr.bf16.mxu0 0
        %4570 = vmatpush1.bf16.msra.mxu0 0
        %4571 = vmatprep.subr.bf16.mxu0 0
        %4572 = vmatpush1.bf16.msra.mxu0 0
        %4573 = vmatprep.subr.bf16.mxu0 0
        %4574 = vmatpush1.bf16.msra.mxu0 0
        %4575 = vmatprep.subr.bf16.mxu0 0
        %4576 = vmatpush1.bf16.msra.mxu0 0
        %4577 = vmatprep.subr.bf16.mxu0 0
        %4578 = vmatpush1.bf16.msra.mxu0 0
        %4579 = vmatprep.subr.bf16.mxu0 0
        %4580 = vmatpush1.bf16.msra.mxu0 0
        %4581 = vmatprep.subr.bf16.mxu0 0
        %4582 = vmatpush1.bf16.msra.mxu0 0
        %4583 = vmatprep.subr.bf16.mxu0 0
        %4584 = vmatpush1.bf16.msra.mxu0 0
        %4585 = vmatprep.subr.bf16.mxu0 0
        %4586 = vmatpush1.bf16.msra.mxu0 0
        %4587 = vmatprep.subr.bf16.mxu0 0
        %4588 = vmatpush1.bf16.msra.mxu0 0
        %4589 = vmatprep.subr.bf16.mxu0 0
        %4590 = vmatpush1.bf16.msra.mxu0 0
        %4591 = vmatprep.mubr.bf16.mxu0 0
        %4592 = vmatmul.mubr.bf16.gmra.mrb[0].mxu0 %v1751
        %v4593 = vpop.f32.mrb[0].mxu0
        %v4594 = vadd.f32 0.0, %v4593
        %v4595 = vpop.f32.mrb[0].mxu0
        %v4596 = vpop.f32.mrb[0].mxu0
        %v4597 = vadd.f32 0.0, %v4596
        %v4598 = vpop.f32.mrb[0].mxu0
        %4599 = vmatprep.mubr.bf16.mxu0 0
        %4600 = vmatmul.mubr.bf16.gmra.mrb[0].mxu0 %v1754
        %v4601 = vpop.f32.mrb[0].mxu0
        %v4602 = vadd.f32 0.0, %v4601
        %v4603 = vpop.f32.mrb[0].mxu0
        %v4604 = vpop.f32.mrb[0].mxu0
        %v4605 = vadd.f32 0.0, %v4604
        %v4606 = vpop.f32.mrb[0].mxu0
        %4607 = vmatprep.mubr.bf16.mxu0 0
        %4608 = vmatmul.mubr.bf16.gmra.mrb[0].mxu0 %v1757
        %v4609 = vpop.f32.mrb[0].mxu0
        %v4610 = vadd.f32 0.0, %v4609
        %v4611 = vpop.f32.mrb[0].mxu0
        %v4612 = vpop.f32.mrb[0].mxu0
        %v4613 = vadd.f32 0.0, %v4612
        %v4614 = vpop.f32.mrb[0].mxu0
        %4615 = vmatprep.mubr.bf16.mxu0 0
        %4616 = vmatmul.mubr.bf16.gmra.mrb[0].mxu0 %v1760
        %v4617 = vpop.f32.mrb[0].mxu0
        %v4618 = vadd.f32 0.0, %v4617
        %v4619 = vpop.f32.mrb[0].mxu0
        %v4620 = vpop.f32.mrb[0].mxu0
        %v4621 = vadd.f32 0.0, %v4620
        %v4622 = vpop.f32.mrb[0].mxu0
        %4623 = vmatprep.mubr.bf16.mxu0 0
        %4624 = vmatmul.mubr.bf16.gmra.mrb[0].mxu0 %v1763
        %v4625 = vpop.f32.mrb[0].mxu0
        %v4626 = vadd.f32 0.0, %v4625
        %v4627 = vpop.f32.mrb[0].mxu0
        %v4628 = vpop.f32.mrb[0].mxu0
        %v4629 = vadd.f32 0.0, %v4628
        %v4630 = vpop.f32.mrb[0].mxu0
        %4631 = vmatprep.mubr.bf16.mxu0 0
        %4632 = vmatmul.mubr.bf16.gmra.mrb[0].mxu0 %v1766
        %v4633 = vpop.f32.mrb[0].mxu0
        %v4634 = vadd.f32 0.0, %v4633
        %v4635 = vpop.f32.mrb[0].mxu0
        %v4636 = vpop.f32.mrb[0].mxu0
        %v4637 = vadd.f32 0.0, %v4636
        %v4638 = vpop.f32.mrb[0].mxu0
        %4639 = vmatprep.mubr.bf16.mxu0 0
        %4640 = vmatmul.mubr.bf16.gmra.mrb[0].mxu0 %v1769
        %v4641 = vpop.f32.mrb[0].mxu0
        %v4642 = vadd.f32 0.0, %v4641
        %v4643 = vpop.f32.mrb[0].mxu0
        %v4644 = vpop.f32.mrb[0].mxu0
        %v4645 = vadd.f32 0.0, %v4644
        %v4646 = vpop.f32.mrb[0].mxu0
        %4647 = vmatprep.mubr.bf16.mxu0 0
        %4648 = vmatmul.mubr.bf16.gmra.mrb[0].mxu0 %v1772
        %v4649 = vpop.f32.mrb[0].mxu0
        %v4650 = vadd.f32 0.0, %v4649
        %v4651 = vpop.f32.mrb[0].mxu0
        %v4652 = vpop.f32.mrb[0].mxu0
        %v4653 = vadd.f32 0.0, %v4652
        %v4654 = vpop.f32.mrb[0].mxu0
        %4655 = vmatprep.mubr.bf16.mxu0 0
        %4656 = vmatmul.mubr.bf16.gmra.mrb[0].mxu0 %v1775
        %v4657 = vpop.f32.mrb[0].mxu0
        %v4658 = vadd.f32 0.0, %v4657
        %v4659 = vpop.f32.mrb[0].mxu0
        %v4660 = vpop.f32.mrb[0].mxu0
        %v4661 = vadd.f32 0.0, %v4660
        %v4662 = vpop.f32.mrb[0].mxu0
        %4663 = vmatprep.mubr.bf16.mxu0 0
        %4664 = vmatmul.mubr.bf16.gmra.mrb[0].mxu0 %v1778
        %v4665 = vpop.f32.mrb[0].mxu0
        %v4666 = vadd.f32 0.0, %v4665
        %v4667 = vpop.f32.mrb[0].mxu0
        %v4668 = vpop.f32.mrb[0].mxu0
        %v4669 = vadd.f32 0.0, %v4668
        %v4670 = vpop.f32.mrb[0].mxu0
        %4671 = vmatprep.mubr.bf16.mxu0 0
        %4672 = vmatmul.mubr.bf16.gmra.mrb[0].mxu0 %v1781
        %v4673 = vpop.f32.mrb[0].mxu0
        %v4674 = vadd.f32 0.0, %v4673
        %v4675 = vpop.f32.mrb[0].mxu0
        %v4676 = vpop.f32.mrb[0].mxu0
        %v4677 = vadd.f32 0.0, %v4676
        %v4678 = vpop.f32.mrb[0].mxu0
        %4679 = vmatprep.mubr.bf16.mxu0 0
        %4680 = vmatmul.mubr.bf16.gmra.mrb[0].mxu0 %v1784
        %v4681 = vpop.f32.mrb[0].mxu0
        %v4682 = vadd.f32 0.0, %v4681
        %v4683 = vpop.f32.mrb[0].mxu0
        %v4684 = vpop.f32.mrb[0].mxu0
        %v4685 = vadd.f32 0.0, %v4684
        %v4686 = vpop.f32.mrb[0].mxu0
        %4687 = vmatprep.mubr.bf16.mxu0 0
        %4688 = vmatmul.mubr.bf16.gmra.mrb[0].mxu0 %v1787
        %v4689 = vpop.f32.mrb[0].mxu0
        %v4690 = vadd.f32 0.0, %v4689
        %v4691 = vpop.f32.mrb[0].mxu0
        %v4692 = vpop.f32.mrb[0].mxu0
        %v4693 = vadd.f32 0.0, %v4692
        %v4694 = vpop.f32.mrb[0].mxu0
        %4695 = vmatprep.mubr.bf16.mxu0 0
        %4696 = vmatmul.mubr.bf16.gmra.mrb[0].mxu0 %v1790
        %v4697 = vpop.f32.mrb[0].mxu0
        %v4698 = vadd.f32 0.0, %v4697
        %v4699 = vpop.f32.mrb[0].mxu0
        %v4700 = vpop.f32.mrb[0].mxu0
        %v4701 = vadd.f32 0.0, %v4700
        %v4702 = vpop.f32.mrb[0].mxu0
        %4703 = vmatprep.mubr.bf16.mxu0 0
        %4704 = vmatmul.mubr.bf16.gmra.mrb[0].mxu0 %v1793
        %v4705 = vpop.f32.mrb[0].mxu0
        %v4706 = vadd.f32 0.0, %v4705
        %v4707 = vpop.f32.mrb[0].mxu0
        %v4708 = vpop.f32.mrb[0].mxu0
        %v4709 = vadd.f32 0.0, %v4708
        %v4710 = vpop.f32.mrb[0].mxu0
        %4711 = vmatprep.mubr.bf16.mxu0 0
        %4712 = vmatmul.mubr.bf16.gmra.mrb[0].mxu0 %v1796
        %v4713 = vpop.f32.mrb[0].mxu0
        %v4714 = vadd.f32 0.0, %v4713
        %v4715 = vpop.f32.mrb[0].mxu0
        %v4716 = vpop.f32.mrb[0].mxu0
        %v4717 = vadd.f32 0.0, %v4716
        %v4718 = vpop.f32.mrb[0].mxu0
        %4719 = vdwg.mxu0
        %v4720 = vsub.f32 %v4433, %v4249
        %v4721 = vsub.f32 %v4436, %v4250
        %v4722 = vsub.f32 %v4441, %v4251
        %v4723 = vsub.f32 %v4444, %v4252
        %v4724 = vsub.f32 %v4449, %v4249
        %v4725 = vsub.f32 %v4452, %v4250
        %v4726 = vsub.f32 %v4457, %v4251
        %v4727 = vsub.f32 %v4460, %v4252
        %v4728 = vsub.f32 %v4465, %v4249
        %v4729 = vsub.f32 %v4468, %v4250
        %v4730 = vsub.f32 %v4473, %v4251
        %v4731 = vsub.f32 %v4476, %v4252
        %v4732 = vsub.f32 %v4481, %v4249
        %v4733 = vsub.f32 %v4484, %v4250
        %v4734 = vsub.f32 %v4489, %v4251
        %v4735 = vsub.f32 %v4492, %v4252
        %v4736 = vsub.f32 %v4497, %v4249
        %v4737 = vsub.f32 %v4500, %v4250
        %v4738 = vsub.f32 %v4505, %v4251
        %v4739 = vsub.f32 %v4508, %v4252
        %v4740 = vsub.f32 %v4513, %v4249
        %v4741 = vsub.f32 %v4516, %v4250
        %v4742 = vsub.f32 %v4521, %v4251
        %v4743 = vsub.f32 %v4524, %v4252
        %v4744 = vsub.f32 %v4529, %v4249
        %v4745 = vsub.f32 %v4532, %v4250
        %v4746 = vsub.f32 %v4537, %v4251
        %v4747 = vsub.f32 %v4540, %v4252
        %v4748 = vsub.f32 %v4545, %v4249
        %v4749 = vsub.f32 %v4548, %v4250
        %v4750 = vsub.f32 %v4553, %v4251
        %v4751 = vsub.f32 %v4556, %v4252
        %v4752 = vsub.f32 %v4594, %v4253
        %v4753 = vsub.f32 %v4597, %v4254
        %v4754 = vsub.f32 %v4602, %v4255
        %v4755 = vsub.f32 %v4605, %v4256
        %v4756 = vsub.f32 %v4610, %v4253
        %v4757 = vsub.f32 %v4613, %v4254
        %v4758 = vsub.f32 %v4618, %v4255
        %v4759 = vsub.f32 %v4621, %v4256
        %v4760 = vsub.f32 %v4626, %v4253
        %v4761 = vsub.f32 %v4629, %v4254
        %v4762 = vsub.f32 %v4634, %v4255
        %v4763 = vsub.f32 %v4637, %v4256
        %v4764 = vsub.f32 %v4642, %v4253
        %v4765 = vsub.f32 %v4645, %v4254
        %v4766 = vsub.f32 %v4650, %v4255
        %v4767 = vsub.f32 %v4653, %v4256
        %v4768 = vsub.f32 %v4658, %v4253
        %v4769 = vsub.f32 %v4661, %v4254
        %v4770 = vsub.f32 %v4666, %v4255
        %v4771 = vsub.f32 %v4669, %v4256
        %v4772 = vsub.f32 %v4674, %v4253
        %v4773 = vsub.f32 %v4677, %v4254
        %v4774 = vsub.f32 %v4682, %v4255
        %v4775 = vsub.f32 %v4685, %v4256
        %v4776 = vsub.f32 %v4690, %v4253
        %v4777 = vsub.f32 %v4693, %v4254
        %v4778 = vsub.f32 %v4698, %v4255
        %v4779 = vsub.f32 %v4701, %v4256
        %v4780 = vsub.f32 %v4706, %v4253
        %v4781 = vsub.f32 %v4709, %v4254
        %v4782 = vsub.f32 %v4714, %v4255
        %v4783 = vsub.f32 %v4717, %v4256
        %v4784 = vld [vmem:[%s15] sm:$0x1]
        %v4785 = vld [vmem:[%s16] sm:$0x1]
        %v4786 = vadd.f32 %v4720, %v4721
        %v4787 = vadd.f32 %v4786, %v4722
        %v4788 = vadd.f32 %v4787, %v4723
        %v4789 = vadd.f32 %v4788, %v4724
        %v4790 = vadd.f32 %v4789, %v4725
        %v4791 = vadd.f32 %v4790, %v4726
        %v4792 = vadd.f32 %v4791, %v4727
        %v4793 = vadd.f32 %v4792, %v4728
        %v4794 = vadd.f32 %v4793, %v4729
        %v4795 = vadd.f32 %v4794, %v4730
        %v4796 = vadd.f32 %v4795, %v4731
        %v4797 = vadd.f32 %v4796, %v4732
        %v4798 = vadd.f32 %v4797, %v4733
        %v4799 = vadd.f32 %v4798, %v4734
        %v4800 = vadd.f32 %v4799, %v4735
        %v4801 = vadd.f32 %v4800, %v4736
        %v4802 = vadd.f32 %v4801, %v4737
        %v4803 = vadd.f32 %v4802, %v4738
        %v4804 = vadd.f32 %v4803, %v4739
        %v4805 = vadd.f32 %v4804, %v4740
        %v4806 = vadd.f32 %v4805, %v4741
        %v4807 = vadd.f32 %v4806, %v4742
        %v4808 = vadd.f32 %v4807, %v4743
        %v4809 = vadd.f32 %v4808, %v4744
        %v4810 = vadd.f32 %v4809, %v4745
        %v4811 = vadd.f32 %v4810, %v4746
        %v4812 = vadd.f32 %v4811, %v4747
        %v4813 = vadd.f32 %v4812, %v4748
        %v4814 = vadd.f32 %v4813, %v4749
        %v4815 = vadd.f32 %v4814, %v4750
        %v4816 = vadd.f32 %v4815, %v4751
        %v4817 = vrot.slane %v4816, 4
        %v4818 = vadd.f32 %v4816, %v4817
        %v4819 = vrot.slane %v4818, 2
        %v4820 = vadd.f32 %v4818, %v4819
        %v4821 = vrot.slane %v4820, 1
        %v4822 = vadd.f32 %v4820, %v4821
        %v4823 = vadd.f32 %v4752, %v4753
        %v4824 = vadd.f32 %v4823, %v4754
        %v4825 = vadd.f32 %v4824, %v4755
        %v4826 = vadd.f32 %v4825, %v4756
        %v4827 = vadd.f32 %v4826, %v4757
        %v4828 = vadd.f32 %v4827, %v4758
        %v4829 = vadd.f32 %v4828, %v4759
        %v4830 = vadd.f32 %v4829, %v4760
        %v4831 = vadd.f32 %v4830, %v4761
        %v4832 = vadd.f32 %v4831, %v4762
        %v4833 = vadd.f32 %v4832, %v4763
        %v4834 = vadd.f32 %v4833, %v4764
        %v4835 = vadd.f32 %v4834, %v4765
        %v4836 = vadd.f32 %v4835, %v4766
        %v4837 = vadd.f32 %v4836, %v4767
        %v4838 = vadd.f32 %v4837, %v4768
        %v4839 = vadd.f32 %v4838, %v4769
        %v4840 = vadd.f32 %v4839, %v4770
        %v4841 = vadd.f32 %v4840, %v4771
        %v4842 = vadd.f32 %v4841, %v4772
        %v4843 = vadd.f32 %v4842, %v4773
        %v4844 = vadd.f32 %v4843, %v4774
        %v4845 = vadd.f32 %v4844, %v4775
        %v4846 = vadd.f32 %v4845, %v4776
        %v4847 = vadd.f32 %v4846, %v4777
        %v4848 = vadd.f32 %v4847, %v4778
        %v4849 = vadd.f32 %v4848, %v4779
        %v4850 = vadd.f32 %v4849, %v4780
        %v4851 = vadd.f32 %v4850, %v4781
        %v4852 = vadd.f32 %v4851, %v4782
        %v4853 = vadd.f32 %v4852, %v4783
        %v4854 = vrot.slane %v4853, 4
        %v4855 = vadd.f32 %v4853, %v4854
        %v4856 = vrot.slane %v4855, 2
        %v4857 = vadd.f32 %v4855, %v4856
        %v4858 = vrot.slane %v4857, 1
        %v4859 = vadd.f32 %v4857, %v4858
        %v4860 = vmul.f32 %v4822, %v2099
        %v4861 = vmul.f32 %v4859, %v2099
        %v4862 = vmul.f32 %v4720, %v4720
        %v4863 = vmul.f32 %v4721, %v4721
        %v4864 = vmul.f32 %v4722, %v4722
        %v4865 = vmul.f32 %v4723, %v4723
        %v4866 = vmul.f32 %v4724, %v4724
        %v4867 = vmul.f32 %v4725, %v4725
        %v4868 = vmul.f32 %v4726, %v4726
        %v4869 = vmul.f32 %v4727, %v4727
        %v4870 = vmul.f32 %v4728, %v4728
        %v4871 = vmul.f32 %v4729, %v4729
        %v4872 = vmul.f32 %v4730, %v4730
        %v4873 = vmul.f32 %v4731, %v4731
        %v4874 = vmul.f32 %v4732, %v4732
        %v4875 = vmul.f32 %v4733, %v4733
        %v4876 = vmul.f32 %v4734, %v4734
        %v4877 = vmul.f32 %v4735, %v4735
        %v4878 = vmul.f32 %v4736, %v4736
        %v4879 = vmul.f32 %v4737, %v4737
        %v4880 = vmul.f32 %v4738, %v4738
        %v4881 = vmul.f32 %v4739, %v4739
        %v4882 = vmul.f32 %v4740, %v4740
        %v4883 = vmul.f32 %v4741, %v4741
        %v4884 = vmul.f32 %v4742, %v4742
        %v4885 = vmul.f32 %v4743, %v4743
        %v4886 = vmul.f32 %v4744, %v4744
        %v4887 = vmul.f32 %v4745, %v4745
        %v4888 = vmul.f32 %v4746, %v4746
        %v4889 = vmul.f32 %v4747, %v4747
        %v4890 = vmul.f32 %v4748, %v4748
        %v4891 = vmul.f32 %v4749, %v4749
        %v4892 = vmul.f32 %v4750, %v4750
        %v4893 = vmul.f32 %v4751, %v4751
        %v4894 = vmul.f32 %v4752, %v4752
        %v4895 = vmul.f32 %v4753, %v4753
        %v4896 = vmul.f32 %v4754, %v4754
        %v4897 = vmul.f32 %v4755, %v4755
        %v4898 = vmul.f32 %v4756, %v4756
        %v4899 = vmul.f32 %v4757, %v4757
        %v4900 = vmul.f32 %v4758, %v4758
        %v4901 = vmul.f32 %v4759, %v4759
        %v4902 = vmul.f32 %v4760, %v4760
        %v4903 = vmul.f32 %v4761, %v4761
        %v4904 = vmul.f32 %v4762, %v4762
        %v4905 = vmul.f32 %v4763, %v4763
        %v4906 = vmul.f32 %v4764, %v4764
        %v4907 = vmul.f32 %v4765, %v4765
        %v4908 = vmul.f32 %v4766, %v4766
        %v4909 = vmul.f32 %v4767, %v4767
        %v4910 = vmul.f32 %v4768, %v4768
        %v4911 = vmul.f32 %v4769, %v4769
        %v4912 = vmul.f32 %v4770, %v4770
        %v4913 = vmul.f32 %v4771, %v4771
        %v4914 = vmul.f32 %v4772, %v4772
        %v4915 = vmul.f32 %v4773, %v4773
        %v4916 = vmul.f32 %v4774, %v4774
        %v4917 = vmul.f32 %v4775, %v4775
        %v4918 = vmul.f32 %v4776, %v4776
        %v4919 = vmul.f32 %v4777, %v4777
        %v4920 = vmul.f32 %v4778, %v4778
        %v4921 = vmul.f32 %v4779, %v4779
        %v4922 = vmul.f32 %v4780, %v4780
        %v4923 = vmul.f32 %v4781, %v4781
        %v4924 = vmul.f32 %v4782, %v4782
        %v4925 = vmul.f32 %v4783, %v4783
        %v4926 = vadd.f32 %v4862, %v4863
        %v4927 = vadd.f32 %v4926, %v4864
        %v4928 = vadd.f32 %v4927, %v4865
        %v4929 = vadd.f32 %v4928, %v4866
        %v4930 = vadd.f32 %v4929, %v4867
        %v4931 = vadd.f32 %v4930, %v4868
        %v4932 = vadd.f32 %v4931, %v4869
        %v4933 = vadd.f32 %v4932, %v4870
        %v4934 = vadd.f32 %v4933, %v4871
        %v4935 = vadd.f32 %v4934, %v4872
        %v4936 = vadd.f32 %v4935, %v4873
        %v4937 = vadd.f32 %v4936, %v4874
        %v4938 = vadd.f32 %v4937, %v4875
        %v4939 = vadd.f32 %v4938, %v4876
        %v4940 = vadd.f32 %v4939, %v4877
        %v4941 = vadd.f32 %v4940, %v4878
        %v4942 = vadd.f32 %v4941, %v4879
        %v4943 = vadd.f32 %v4942, %v4880
        %v4944 = vadd.f32 %v4943, %v4881
        %v4945 = vadd.f32 %v4944, %v4882
        %v4946 = vadd.f32 %v4945, %v4883
        %v4947 = vadd.f32 %v4946, %v4884
        %v4948 = vadd.f32 %v4947, %v4885
        %v4949 = vadd.f32 %v4948, %v4886
        %v4950 = vadd.f32 %v4949, %v4887
        %v4951 = vadd.f32 %v4950, %v4888
        %v4952 = vadd.f32 %v4951, %v4889
        %v4953 = vadd.f32 %v4952, %v4890
        %v4954 = vadd.f32 %v4953, %v4891
        %v4955 = vadd.f32 %v4954, %v4892
        %v4956 = vadd.f32 %v4955, %v4893
        %v4957 = vrot.slane %v4956, 4
        %v4958 = vadd.f32 %v4956, %v4957
        %v4959 = vrot.slane %v4958, 2
        %v4960 = vadd.f32 %v4958, %v4959
        %v4961 = vrot.slane %v4960, 1
        %v4962 = vadd.f32 %v4960, %v4961
        %v4963 = vadd.f32 %v4894, %v4895
        %v4964 = vadd.f32 %v4963, %v4896
        %v4965 = vadd.f32 %v4964, %v4897
        %v4966 = vadd.f32 %v4965, %v4898
        %v4967 = vadd.f32 %v4966, %v4899
        %v4968 = vadd.f32 %v4967, %v4900
        %v4969 = vadd.f32 %v4968, %v4901
        %v4970 = vadd.f32 %v4969, %v4902
        %v4971 = vadd.f32 %v4970, %v4903
        %v4972 = vadd.f32 %v4971, %v4904
        %v4973 = vadd.f32 %v4972, %v4905
        %v4974 = vadd.f32 %v4973, %v4906
        %v4975 = vadd.f32 %v4974, %v4907
        %v4976 = vadd.f32 %v4975, %v4908
        %v4977 = vadd.f32 %v4976, %v4909
        %v4978 = vadd.f32 %v4977, %v4910
        %v4979 = vadd.f32 %v4978, %v4911
        %v4980 = vadd.f32 %v4979, %v4912
        %v4981 = vadd.f32 %v4980, %v4913
        %v4982 = vadd.f32 %v4981, %v4914
        %v4983 = vadd.f32 %v4982, %v4915
        %v4984 = vadd.f32 %v4983, %v4916
        %v4985 = vadd.f32 %v4984, %v4917
        %v4986 = vadd.f32 %v4985, %v4918
        %v4987 = vadd.f32 %v4986, %v4919
        %v4988 = vadd.f32 %v4987, %v4920
        %v4989 = vadd.f32 %v4988, %v4921
        %v4990 = vadd.f32 %v4989, %v4922
        %v4991 = vadd.f32 %v4990, %v4923
        %v4992 = vadd.f32 %v4991, %v4924
        %v4993 = vadd.f32 %v4992, %v4925
        %v4994 = vrot.slane %v4993, 4
        %v4995 = vadd.f32 %v4993, %v4994
        %v4996 = vrot.slane %v4995, 2
        %v4997 = vadd.f32 %v4995, %v4996
        %v4998 = vrot.slane %v4997, 1
        %v4999 = vadd.f32 %v4997, %v4998
        %v5000 = vmul.f32 %v4962, %v2099
        %v5001 = vmul.f32 %v4999, %v2099
        %v5002 = vmul.f32 %v4860, %v4860
        %v5003 = vmul.f32 %v4861, %v4861
        %v5004 = vsub.f32 %v5000, %v5002
        %v5005 = vsub.f32 %v5001, %v5003
        %v5006 = vmax.f32 %v5004, 0.0
        %v5007 = vmax.f32 %v5005, 0.0
        %v5008 = vadd.f32 %v5006, 1e-05
        %v5009 = vadd.f32 %v5007, 1e-05
        %v5010 = vrsqrt.pop %v5008
        %v5011 = vrsqrt.pop %v5009
        %v5012 = vmul.f32 %v4784, %v5010
        %v5013 = vmul.f32 %v4784, %v5011
        %v5014 = vmul.f32 %v4860, %v5012
        %v5015 = vmul.f32 %v4861, %v5013
        %v5016 = vsub.f32 %v4785, %v5014
        %v5017 = vsub.f32 %v4785, %v5015
        %v5020 = vlaneseq
        %v5021 = vshrl.u32 %v5020, 7
        %v5022 = vsub.s32 0, %v5021
        %v5023 = vrot.slane %v5012, %v5022
        %v5024 = vlaneseq
        %v5025 = vshrl.u32 %v5024, 7
        %v5026 = vsub.s32 0, %v5025
        %v5027 = vrot.slane %v5013, %v5026
        %v5030 = vmul.f32 %v4720, %v5023
        %v5031 = vmul.f32 %v4721, %v5023
        %v5032 = vmul.f32 %v4722, %v5023
        %v5033 = vmul.f32 %v4723, %v5023
        %v5034 = vmul.f32 %v4724, %v5023
        %v5035 = vmul.f32 %v4725, %v5023
        %v5036 = vmul.f32 %v4726, %v5023
        %v5037 = vmul.f32 %v4727, %v5023
        %v5038 = vmul.f32 %v4728, %v5023
        %v5039 = vmul.f32 %v4729, %v5023
        %v5040 = vmul.f32 %v4730, %v5023
        %v5041 = vmul.f32 %v4731, %v5023
        %v5042 = vmul.f32 %v4732, %v5023
        %v5043 = vmul.f32 %v4733, %v5023
        %v5044 = vmul.f32 %v4734, %v5023
        %v5045 = vmul.f32 %v4735, %v5023
        %v5046 = vmul.f32 %v4736, %v5023
        %v5047 = vmul.f32 %v4737, %v5023
        %v5048 = vmul.f32 %v4738, %v5023
        %v5049 = vmul.f32 %v4739, %v5023
        %v5050 = vmul.f32 %v4740, %v5023
        %v5051 = vmul.f32 %v4741, %v5023
        %v5052 = vmul.f32 %v4742, %v5023
        %v5053 = vmul.f32 %v4743, %v5023
        %v5054 = vmul.f32 %v4744, %v5023
        %v5055 = vmul.f32 %v4745, %v5023
        %v5056 = vmul.f32 %v4746, %v5023
        %v5057 = vmul.f32 %v4747, %v5023
        %v5058 = vmul.f32 %v4748, %v5023
        %v5059 = vmul.f32 %v4749, %v5023
        %v5060 = vmul.f32 %v4750, %v5023
        %v5061 = vmul.f32 %v4751, %v5023
        %v5062 = vmul.f32 %v4752, %v5027
        %v5063 = vmul.f32 %v4753, %v5027
        %v5064 = vmul.f32 %v4754, %v5027
        %v5065 = vmul.f32 %v4755, %v5027
        %v5066 = vmul.f32 %v4756, %v5027
        %v5067 = vmul.f32 %v4757, %v5027
        %v5068 = vmul.f32 %v4758, %v5027
        %v5069 = vmul.f32 %v4759, %v5027
        %v5070 = vmul.f32 %v4760, %v5027
        %v5071 = vmul.f32 %v4761, %v5027
        %v5072 = vmul.f32 %v4762, %v5027
        %v5073 = vmul.f32 %v4763, %v5027
        %v5074 = vmul.f32 %v4764, %v5027
        %v5075 = vmul.f32 %v4765, %v5027
        %v5076 = vmul.f32 %v4766, %v5027
        %v5077 = vmul.f32 %v4767, %v5027
        %v5078 = vmul.f32 %v4768, %v5027
        %v5079 = vmul.f32 %v4769, %v5027
        %v5080 = vmul.f32 %v4770, %v5027
        %v5081 = vmul.f32 %v4771, %v5027
        %v5082 = vmul.f32 %v4772, %v5027
        %v5083 = vmul.f32 %v4773, %v5027
        %v5084 = vmul.f32 %v4774, %v5027
        %v5085 = vmul.f32 %v4775, %v5027
        %v5086 = vmul.f32 %v4776, %v5027
        %v5087 = vmul.f32 %v4777, %v5027
        %v5088 = vmul.f32 %v4778, %v5027
        %v5089 = vmul.f32 %v4779, %v5027
        %v5090 = vmul.f32 %v4780, %v5027
        %v5091 = vmul.f32 %v4781, %v5027
        %v5092 = vmul.f32 %v4782, %v5027
        %v5093 = vmul.f32 %v4783, %v5027
        %v5096 = vlaneseq
        %v5097 = vshrl.u32 %v5096, 7
        %v5098 = vsub.s32 0, %v5097
        %v5099 = vrot.slane %v5016, %v5098
        %v5100 = vlaneseq
        %v5101 = vshrl.u32 %v5100, 7
        %v5102 = vsub.s32 0, %v5101
        %v5103 = vrot.slane %v5017, %v5102
        %v5106 = vadd.f32 %v5030, %v5099
        %v5107 = vadd.f32 %v5031, %v5099
        %v5108 = vadd.f32 %v5032, %v5099
        %v5109 = vadd.f32 %v5033, %v5099
        %v5110 = vadd.f32 %v5034, %v5099
        %v5111 = vadd.f32 %v5035, %v5099
        %v5112 = vadd.f32 %v5036, %v5099
        %v5113 = vadd.f32 %v5037, %v5099
        %v5114 = vadd.f32 %v5038, %v5099
        %v5115 = vadd.f32 %v5039, %v5099
        %v5116 = vadd.f32 %v5040, %v5099
        %v5117 = vadd.f32 %v5041, %v5099
        %v5118 = vadd.f32 %v5042, %v5099
        %v5119 = vadd.f32 %v5043, %v5099
        %v5120 = vadd.f32 %v5044, %v5099
        %v5121 = vadd.f32 %v5045, %v5099
        %v5122 = vadd.f32 %v5046, %v5099
        %v5123 = vadd.f32 %v5047, %v5099
        %v5124 = vadd.f32 %v5048, %v5099
        %v5125 = vadd.f32 %v5049, %v5099
        %v5126 = vadd.f32 %v5050, %v5099
        %v5127 = vadd.f32 %v5051, %v5099
        %v5128 = vadd.f32 %v5052, %v5099
        %v5129 = vadd.f32 %v5053, %v5099
        %v5130 = vadd.f32 %v5054, %v5099
        %v5131 = vadd.f32 %v5055, %v5099
        %v5132 = vadd.f32 %v5056, %v5099
        %v5133 = vadd.f32 %v5057, %v5099
        %v5134 = vadd.f32 %v5058, %v5099
        %v5135 = vadd.f32 %v5059, %v5099
        %v5136 = vadd.f32 %v5060, %v5099
        %v5137 = vadd.f32 %v5061, %v5099
        %v5138 = vadd.f32 %v5062, %v5103
        %v5139 = vadd.f32 %v5063, %v5103
        %v5140 = vadd.f32 %v5064, %v5103
        %v5141 = vadd.f32 %v5065, %v5103
        %v5142 = vadd.f32 %v5066, %v5103
        %v5143 = vadd.f32 %v5067, %v5103
        %v5144 = vadd.f32 %v5068, %v5103
        %v5145 = vadd.f32 %v5069, %v5103
        %v5146 = vadd.f32 %v5070, %v5103
        %v5147 = vadd.f32 %v5071, %v5103
        %v5148 = vadd.f32 %v5072, %v5103
        %v5149 = vadd.f32 %v5073, %v5103
        %v5150 = vadd.f32 %v5074, %v5103
        %v5151 = vadd.f32 %v5075, %v5103
        %v5152 = vadd.f32 %v5076, %v5103
        %v5153 = vadd.f32 %v5077, %v5103
        %v5154 = vadd.f32 %v5078, %v5103
        %v5155 = vadd.f32 %v5079, %v5103
        %v5156 = vadd.f32 %v5080, %v5103
        %v5157 = vadd.f32 %v5081, %v5103
        %v5158 = vadd.f32 %v5082, %v5103
        %v5159 = vadd.f32 %v5083, %v5103
        %v5160 = vadd.f32 %v5084, %v5103
        %v5161 = vadd.f32 %v5085, %v5103
        %v5162 = vadd.f32 %v5086, %v5103
        %v5163 = vadd.f32 %v5087, %v5103
        %v5164 = vadd.f32 %v5088, %v5103
        %v5165 = vadd.f32 %v5089, %v5103
        %v5166 = vadd.f32 %v5090, %v5103
        %v5167 = vadd.f32 %v5091, %v5103
        %v5168 = vadd.f32 %v5092, %v5103
        %v5169 = vadd.f32 %v5093, %v5103
        %v5170 = vmax.f32 %v5106, %v5110
        %v5171 = vmax.f32 %v5170, %v5114
        %v5172 = vmax.f32 %v5171, %v5118
        %v5173 = vmax.f32 %v5172, %v5122
        %v5174 = vmax.f32 %v5173, %v5126
        %v5175 = vmax.f32 %v5174, %v5130
        %v5176 = vmax.f32 %v5175, %v5134
        %v5177 = vmax.f32 %v5107, %v5111
        %v5178 = vmax.f32 %v5177, %v5115
        %v5179 = vmax.f32 %v5178, %v5119
        %v5180 = vmax.f32 %v5179, %v5123
        %v5181 = vmax.f32 %v5180, %v5127
        %v5182 = vmax.f32 %v5181, %v5131
        %v5183 = vmax.f32 %v5182, %v5135
        %v5184 = vmax.f32 %v5108, %v5112
        %v5185 = vmax.f32 %v5184, %v5116
        %v5186 = vmax.f32 %v5185, %v5120
        %v5187 = vmax.f32 %v5186, %v5124
        %v5188 = vmax.f32 %v5187, %v5128
        %v5189 = vmax.f32 %v5188, %v5132
        %v5190 = vmax.f32 %v5189, %v5136
        %v5191 = vmax.f32 %v5109, %v5113
        %v5192 = vmax.f32 %v5191, %v5117
        %v5193 = vmax.f32 %v5192, %v5121
        %v5194 = vmax.f32 %v5193, %v5125
        %v5195 = vmax.f32 %v5194, %v5129
        %v5196 = vmax.f32 %v5195, %v5133
        %v5197 = vmax.f32 %v5196, %v5137
        %v5198 = vmax.f32 %v5138, %v5142
        %v5199 = vmax.f32 %v5198, %v5146
        %v5200 = vmax.f32 %v5199, %v5150
        %v5201 = vmax.f32 %v5200, %v5154
        %v5202 = vmax.f32 %v5201, %v5158
        %v5203 = vmax.f32 %v5202, %v5162
        %v5204 = vmax.f32 %v5203, %v5166
        %v5205 = vmax.f32 %v5139, %v5143
        %v5206 = vmax.f32 %v5205, %v5147
        %v5207 = vmax.f32 %v5206, %v5151
        %v5208 = vmax.f32 %v5207, %v5155
        %v5209 = vmax.f32 %v5208, %v5159
        %v5210 = vmax.f32 %v5209, %v5163
        %v5211 = vmax.f32 %v5210, %v5167
        %v5212 = vmax.f32 %v5140, %v5144
        %v5213 = vmax.f32 %v5212, %v5148
        %v5214 = vmax.f32 %v5213, %v5152
        %v5215 = vmax.f32 %v5214, %v5156
        %v5216 = vmax.f32 %v5215, %v5160
        %v5217 = vmax.f32 %v5216, %v5164
        %v5218 = vmax.f32 %v5217, %v5168
        %v5219 = vmax.f32 %v5141, %v5145
        %v5220 = vmax.f32 %v5219, %v5149
        %v5221 = vmax.f32 %v5220, %v5153
        %v5222 = vmax.f32 %v5221, %v5157
        %v5223 = vmax.f32 %v5222, %v5161
        %v5224 = vmax.f32 %v5223, %v5165
        %v5225 = vmax.f32 %v5224, %v5169
        %5226 = vst [vmem:[%s578] sm:$0xff] %v5176
        %5227 = vst [vmem:[%s578 + $0x8] sm:$0xff] %v5183
        %5228 = vst [vmem:[%s578 + $0x10] sm:$0xff] %v5190
        %5229 = vst [vmem:[%s578 + $0x18] sm:$0xff] %v5197
        %5230 = vst [vmem:[%s578 + $0x20] sm:$0xff] %v5204
        %5231 = vst [vmem:[%s578 + $0x28] sm:$0xff] %v5211
        %5232 = vst [vmem:[%s578 + $0x30] sm:$0xff] %v5218
        %5233 = vst [vmem:[%s578 + $0x38] sm:$0xff] %v5225
        %s5234 = sand.u32 %s411, 1
        %s5235 = scalar_lea.sflag [#allocation3], %s5234
        %s5236 = sand.u32 %s411, 1
        %s5237 = smul.addr %s5236, 64
        %s5238 = scalar_lea.vmem [#allocation2], %s5237
        // Predicated region
        $region89: #{h0_net_forward.1} parent=87 // pred_check
          %p5239 = pneg %p421
        $region90: #{h0_net_forward.1} parent=87 // pred_check_branch
          %5241 = sbr.rel (%p5239) target = $region92
        $region91: #{h0_net_forward.1} parent=87 // pred_region
          %s5242 = smul.u32 2, %s31
          %s5244 = ssub.s32 1024, 1024
          %5245 = vsyncadd %s5235, %s5244
          %s5246 = smul.addr %s5242, 4
          %s5247 = smul.addr %s5246, 128
          %s5248 = scalar_lea.hbm %s17, %s5247
          %s5249 = sshll.u32 %s5238, 4
          %s5250 = int_to_ptr.vmem [resolvable:$true] %s5249
          %5255 = dma.vmem_to_hbm [thread:$0]  %s5250, 1024, %s5248, %s5235, 128, 128, 8
        $region92: #{h0_net_forward.1} parent=87 // pred_fallthru
          _
      $region88: #{h0_net_forward.1} parent=5 // pred_fallthru
        _
      %p5256 = scmp.le.s32.totalorder 2, %s26
      // Predicated region
      $region93: #{h0_net_forward.1} parent=5 // pred_check
        %p5257 = pneg %p5256
      $region94: #{h0_net_forward.1} parent=5 // pred_check_branch
        %5259 = sbr.rel (%p5257) target = $region96
      $region95: #{h0_net_forward.1} parent=5 // pred_region
        %s5260 = ssub.s32 %s26, 2
        // Predicated region
        $region97: #{h0_net_forward.1} parent=95 // pred_check
          %p5261 = pneg %p427
        $region98: #{h0_net_forward.1} parent=95 // pred_check_branch
          %5263 = sbr.rel (%p5261) target = $region100
        $region99: #{h0_net_forward.1} parent=95 // pred_region
          %s5264 = sand.u32 %s412, 1
          %s5265 = scalar_lea.sflag [#allocation3], %s5264
          %s5266 = sand.u32 %s412, 1
          %s5267 = smul.addr %s5266, 64
          %s5268 = scalar_lea.vmem [#allocation2], %s5267
          %5269 = dma.done %s5265, 1024
        $region100: #{h0_net_forward.1} parent=95 // pred_fallthru
          _
      $region96: #{h0_net_forward.1} parent=5 // pred_fallthru
        _
    $region6: #{h0_net_forward.1} parent=1 // loop_footer
      %s30 = sadd.s32 1, %s26
    $region7: #{h0_net_forward.1} parent=1 // loop_footer_branch
      %25 = sbr.rel target = $region3
    $region8: #{h0_net_forward.1} parent=1 // loop_exit
      _
    %5270 = vsyncpa [#allocation3], 1
    %s5271 = scalar_lea.sflag [#allocation3], 1
    %5272 = vsyncpa %s5271, 1

</llo_original>
